<compile_context>
chip_gen: v7x
topology: tpu7x:2x2x1
jax: 0.10.0
libtpu: 0.0.40
codegen_flags: <defaults>
</compile_context>

<pallas_src>
import functools

import jax
import jax.numpy as jnp
from jax import lax
from jax.experimental import pallas as pl
from jax.experimental.pallas import tpu as pltpu

BN_EPS = 1e-5
LANE = 128
VMEM_LIMIT_BYTES = 48 * 1024 * 1024  # < v7x's 64 MiB physical VMEM, fine on v5e/v6e.


def _round_up(x, m):
    return ((x + m - 1) // m) * m


def _pick_tile_h(N, H, W, target_px=2048, min_steps=4):
    """Row-band height: ~2K output pixels per grid step, th | H, and enough grid steps."""
    th = max(1, min(H, target_px // max(W, 1)))
    while th > 1 and (H % th != 0 or N * (H // th) < min_steps):
        th -= 1
    while H % th != 0:
        th -= 1
    return th


# --------------------------- in-kernel helper functions ---------------------------
def _chunk_stats(acc3, r0, row_lo, row_hi, w_valid, n_valid):
    """Per-chunk per-channel (mean, M2) over the valid region only (masked, centered)."""
    rc, wp, cp = acc3.shape
    ridx = lax.broadcasted_iota(jnp.int32, (rc, wp, 1), 0) + r0
    cidx = lax.broadcasted_iota(jnp.int32, (rc, wp, 1), 1)
    wm = ((ridx >= row_lo) & (ridx <= row_hi) & (cidx < w_valid)).astype(jnp.float32)
    s = jnp.sum(jnp.sum(acc3 * wm, axis=0), axis=0, keepdims=True)           # (1, Cp)
    mean = s * (1.0 / n_valid)
    d = (acc3 - mean.reshape(1, 1, cp)) * wm
    m2 = jnp.sum(jnp.sum(d * d, axis=0), axis=0, keepdims=True)              # (1, Cp)
    return mean, m2


def _merge_stats(run, new):
    """Chan/Welford parallel combine of (n, mean, M2)."""
    if run is None:
        return new
    n_a, mean_a, m2_a = run
    n_b, mean_b, m2_b = new
    n = n_a + n_b
    delta = mean_b - mean_a
    mean = mean_a + delta * (n_b / n)
    m2 = m2_a + m2_b + (delta * delta) * (n_a * n_b / n)
    return n, mean, m2


# --------------------------------- Pallas kernels ---------------------------------
def _conv1_kernel(x_ref, w_ref, z_ref, st_ref, *, W, rows_chunk):
    # x_ref: (1, th+4, Wp, 3*Cin) bf16  dx-concatenated, spatially padded row band
    # w_ref: (3, 3*Cin, Cp)       bf16  per-dy weights (dx folded into K)
    # z_ref: (1, th+2, Wp, Cp)    bf16  raw conv output incl. 1 halo row above/below
    # st_ref:(1, 2, Cp)           f32   [mean ; M2] over the band's valid interior
    _, rows_out, Wp, Cp = z_ref.shape
    th = rows_out - 2
    kin = x_ref.shape[-1]

    run = None
    for r0 in range(0, rows_out, rows_chunk):            # sub-tile the accumulator
        r1 = min(rows_out, r0 + rows_chunk)
        rc = r1 - r0
        acc = None
        for dy in range(3):                               # 3 MXU matmuls, K = 3*Cin
            patch = x_ref[0, dy + r0:dy + r1, :, :].reshape(rc * Wp, kin)
            part = jnp.dot(patch, w_ref[dy], preferred_element_type=jnp.float32)
            acc = part if acc is None else acc + part
        acc3 = acc.reshape(rc, Wp, Cp)
        z_ref[0, r0:r1, :, :] = acc3.astype(z_ref.dtype)

        # Stats only over interior rows (band rows 1..th) and real columns (< W).
        n_rows = max(0, min(th, r1 - 1) - max(1, r0) + 1)
        if n_rows > 0:
            mean_c, m2_c = _chunk_stats(acc3, r0, 1, th, W, float(n_rows * W))
            run = _merge_stats(run, (float(n_rows * W), mean_c, m2_c))

    _, mean_t, m2_t = run
    st_ref[0, 0:1, :] = mean_t
    st_ref[0, 1:2, :] = m2_t


def _conv2_kernel(z1_ref, sc_ref, sh_ref, w_ref, z2_ref, st_ref, *, H, W, nT, rows_chunk):
    # z1_ref: (1, th+2, Wp, Cp) bf16  banded layer-1 conv output (with halo rows)
    # sc/sh : (1, Cp)           f32   folded BN1 scale / shift
    # w_ref : (3, 3*Cp, Cp)     bf16  per-dy weights (dx folded into K)
    # z2_ref: (1, th, Wp, Cp)   bf16  raw layer-2 conv output
    # st_ref: (1, 2, Cp)        f32   [mean ; M2]
    _, rows_in, Wp, Cp = z1_ref.shape
    rows_out = z2_ref.shape[1]
    th = rows_out

    g = pl.program_id(0)
    t = g % nT                                            # row-band index within the image
    base = t * th - 1                                     # global z1 row of band row 0

    # ---- fused BN1 + ReLU + spatial-padding mask on the input band (in VMEM) ----
    z = z1_ref[0].astype(jnp.float32)
    s = sc_ref[...].reshape(1, 1, Cp)
    b = sh_ref[...].reshape(1, 1, Cp)
    ridx = lax.broadcasted_iota(jnp.int32, (rows_in, Wp, 1), 0) + base
    cidx = lax.broadcasted_iota(jnp.int32, (rows_in, Wp, 1), 1)
    valid = (ridx >= 0) & (ridx <= H - 1) & (cidx < W)
    a = jnp.where(valid, jnp.maximum(z * s + b, 0.0), 0.0).astype(jnp.bfloat16)

    # ---- dx K-concat: input columns c-1, c, c+1 stacked along the channel axis ----
    zc = jnp.zeros((rows_in, 1, Cp), jnp.bfloat16)
    ap = jnp.concatenate([zc, a, zc], axis=1)             # (th+2, Wp+2, Cp)
    a_cat = jnp.concatenate(
        [ap[:, 0:Wp, :], ap[:, 1:Wp + 1, :], ap[:, 2:Wp + 2, :]], axis=-1)  # (th+2, Wp, 3*Cp)

    run = None
    for r0 in range(0, rows_out, rows_chunk):
        r1 = min(rows_out, r0 + rows_chunk)
        rc = r1 - r0
        acc = None
        for dy in range(3):                               # 3 MXU matmuls, K = 3*Cp
            patch = a_cat[dy + r0:dy + r1].reshape(rc * Wp, 3 * Cp)
            part = jnp.dot(patch, w_ref[dy], preferred_element_type=jnp.float32)
            acc = part if acc is None else acc + part
        acc3 = acc.reshape(rc, Wp, Cp)
        z2_ref[0, r0:r1, :, :] = acc3.astype(z2_ref.dtype)

        mean_c, m2_c = _chunk_stats(acc3, r0, 0, rows_out - 1, W, float(rc * W))
        run = _merge_stats(run, (float(rc * W), mean_c, m2_c))

    _, mean_t, m2_t = run
    st_ref[0, 0:1, :] = mean_t
    st_ref[0, 1:2, :] = m2_t


def _bn_relu_kernel(z_ref, sc_ref, sh_ref, y_ref):
    # Final folded BatchNorm + ReLU: y = max(z*scale + shift, 0)
    s = sc_ref[...].reshape(1, 1, 1, -1)
    b = sh_ref[...].reshape(1, 1, 1, -1)
    y_ref[...] = jnp.maximum(z_ref[...].astype(jnp.float32) * s + b, 0.0).astype(y_ref.dtype)


# ------------------------------- pallas_call wrappers ------------------------------
def _conv1_call(xb, w1, th, W, Cp, rows_chunk):
    G, rows_in, Wp, kin = xb.shape                        # rows_in = th+4
    rows_out = th + 2
    flops = 2 * G * rows_out * Wp * Cp * 3 * kin
    bytes_acc = (xb.size * 2 + w1.size * 2
                 + G * rows_out * Wp * Cp * 2 + G * 2 * Cp * 4)
    return pl.pallas_call(
        functools.partial(_conv1_kernel, W=W, rows_chunk=rows_chunk),
        out_shape=(jax.ShapeDtypeStruct((G, rows_out, Wp, Cp), jnp.bfloat16),
                   jax.ShapeDtypeStruct((G, 2, Cp), jnp.float32)),
        grid=(G,),
        in_specs=[
            pl.BlockSpec((1, rows_in, Wp, kin), lambda g: (g, 0, 0, 0)),
            # Constant index map -> weights stay resident (double-buffer waste is
            # negligible at these widths; see review note about pl.Buffered(1)).
            pl.BlockSpec((3, kin, Cp), lambda g: (0, 0, 0)),
        ],
        out_specs=(
            pl.BlockSpec((1, rows_out, Wp, Cp), lambda g: (g, 0, 0, 0)),
            pl.BlockSpec((1, 2, Cp), lambda g: (g, 0, 0)),
        ),
        compiler_params=pltpu.CompilerParams(
            dimension_semantics=("parallel",), vmem_limit_bytes=VMEM_LIMIT_BYTES),
        cost_estimate=pl.CostEstimate(flops=flops, transcendentals=0,
                                      bytes_accessed=bytes_acc),
    )(xb, w1)


def _conv2_call(z1, sc, sh, w2, H, W, nT, rows_chunk):
    G, rows_in, Wp, Cp = z1.shape                         # rows_in = th+2
    rows_out = rows_in - 2
    flops = 2 * G * rows_out * Wp * Cp * 9 * Cp
    bytes_acc = (z1.size * 2 + w2.size * 2 + 2 * Cp * 4
                 + G * rows_out * Wp * Cp * 2 + G * 2 * Cp * 4)
    return pl.pallas_call(
        functools.partial(_conv2_kernel, H=H, W=W, nT=nT, rows_chunk=rows_chunk),
        out_shape=(jax.ShapeDtypeStruct((G, rows_out, Wp, Cp), jnp.bfloat16),
                   jax.ShapeDtypeStruct((G, 2, Cp), jnp.float32)),
        grid=(G,),
        in_specs=[
            pl.BlockSpec((1, rows_in, Wp, Cp), lambda g: (g, 0, 0, 0)),
            pl.BlockSpec((1, Cp), lambda g: (0, 0)),
            pl.BlockSpec((1, Cp), lambda g: (0, 0)),
            pl.BlockSpec((3, 3 * Cp, Cp), lambda g: (0, 0, 0)),
        ],
        out_specs=(
            pl.BlockSpec((1, rows_out, Wp, Cp), lambda g: (g, 0, 0, 0)),
            pl.BlockSpec((1, 2, Cp), lambda g: (g, 0, 0)),
        ),
        compiler_params=pltpu.CompilerParams(
            dimension_semantics=("parallel",), vmem_limit_bytes=VMEM_LIMIT_BYTES),
        cost_estimate=pl.CostEstimate(flops=flops, transcendentals=0,
                                      bytes_accessed=bytes_acc),
    )(z1, sc, sh, w2)


def _bn_relu_call(z2, sc, sh):
    G, rows, Wp, Cp = z2.shape
    return pl.pallas_call(
        _bn_relu_kernel,
        out_shape=jax.ShapeDtypeStruct((G, rows, Wp, Cp), jnp.float32),
        grid=(G,),
        in_specs=[
            pl.BlockSpec((1, rows, Wp, Cp), lambda g: (g, 0, 0, 0)),
            pl.BlockSpec((1, Cp), lambda g: (0, 0)),
            pl.BlockSpec((1, Cp), lambda g: (0, 0)),
        ],
        out_specs=pl.BlockSpec((1, rows, Wp, Cp), lambda g: (g, 0, 0, 0)),
        compiler_params=pltpu.CompilerParams(
            dimension_semantics=("parallel",), vmem_limit_bytes=VMEM_LIMIT_BYTES),
    )(z2, sc, sh)


# ------------------------------------ JAX glue -------------------------------------
def _prep_input_bands(x_nhwc, th, Wp):
    """(N,H,W,Cin) -> (N*H/th, th+4, Wp, 3*Cin): spatial pad, dx-concat, per-band halo=2 rows.

    Only the (narrow, Cin-channel) network input is repacked in JAX; the wide
    intermediate activation never makes an extra HBM round-trip (fused into conv2).
    """
    N, H, W, Cin = x_nhwc.shape
    nT = H // th
    xp = jnp.pad(x_nhwc, ((0, 0), (2, 2), (1, Wp - W + 1), (0, 0)))
    xcat = jnp.concatenate([xp[:, :, dx:dx + Wp, :] for dx in range(3)], axis=-1)
    xb = jnp.stack([xcat[:, t * th:t * th + th + 4] for t in range(nT)], axis=1)
    return xb.reshape(N * nT, th + 4, Wp, 3 * Cin).astype(jnp.bfloat16)


def _bn_scale_shift(stats, gamma_p, beta_p, n_tile, n_total):
    """Combine per-tile (mean, M2) into global batch stats, fold into one per-channel FMA."""
    means = stats[:, 0, :]                                # (G, Cp)
    m2s = stats[:, 1, :]
    mean = jnp.mean(means, axis=0)                        # equal-count tiles
    m2 = jnp.sum(m2s, axis=0) + float(n_tile) * jnp.sum(jnp.square(means - mean[None, :]), axis=0)
    var = jnp.maximum(m2 / float(n_total), 0.0)           # biased variance (PyTorch training)
    scale = gamma_p * lax.rsqrt(var + BN_EPS)
    shift = beta_p - mean * scale
    return scale.reshape(1, -1).astype(jnp.float32), shift.reshape(1, -1).astype(jnp.float32)


def double_conv_forward(x_nchw, params, tile_h=None):
    """Pallas implementation of DoubleConv.forward.  Input/output are NCHW."""
    x = jnp.transpose(x_nchw, (0, 2, 3, 1)).astype(jnp.float32)      # NCHW -> NHWC
    N, H, W, Cin = x.shape
    cout = params["w1"].shape[-1]
    Cp = _round_up(cout, LANE)
    Wp = _round_up(W, 8)
    th = tile_h if tile_h is not None else _pick_tile_h(N, H, W)
    if H % th:
        raise ValueError(f"tile_h={th} must divide H={H}")
    nT = H // th
    rows_chunk = max(1, 256 // Wp)                        # <=~256 live M-rows per accumulator

    # Weights HWIO -> (dy, dx*Cin + i, Cp).  Conv biases b1/b2 are intentionally dropped:
    # a per-channel constant added before training-mode BN cancels exactly.
    w1 = jnp.pad(params["w1"], ((0, 0), (0, 0), (0, 0), (0, Cp - cout)))
    w1 = w1.reshape(3, 3 * Cin, Cp).astype(jnp.bfloat16)
    w2 = jnp.pad(params["w2"], ((0, 0), (0, 0), (0, Cp - cout), (0, Cp - cout)))
    w2 = w2.reshape(3, 3 * Cp, Cp).astype(jnp.bfloat16)
    g1 = jnp.pad(params["g1"], (0, Cp - cout))
    bt1 = jnp.pad(params["bt1"], (0, Cp - cout))
    g2 = jnp.pad(params["g2"], (0, Cp - cout))
    bt2 = jnp.pad(params["bt2"], (0, Cp - cout))

    xb = _prep_input_bands(x, th, Wp)                                  # (G, th+4, Wp, 3*Cin) bf16
    z1, st1 = _conv1_call(xb, w1, th, W, Cp, rows_chunk)               # bf16 banded (+halo rows)
    sc1, sh1 = _bn_scale_shift(st1, g1, bt1, th * W, N * H * W)
    z2, st2 = _conv2_call(z1, sc1, sh1, w2, H, W, nT, rows_chunk)      # BN1+ReLU fused inside
    sc2, sh2 = _bn_scale_shift(st2, g2, bt2, th * W, N * H * W)
    y = _bn_relu_call(z2, sc2, sh2)                                    # (G, th, Wp, Cp) f32

    y = y.reshape(N, H, Wp, Cp)[:, :, :W, :cout]
    return jnp.transpose(y, (0, 3, 1, 2))                              # NHWC -> NCHW


# -------------------------------- pure-JAX reference --------------------------------
def _bf16_round(a):
    # The kernels feed the MXU bf16 inputs (f32 accumulation); round the reference's
    # conv inputs identically so the comparison tolerance can stay tight.
    return a.astype(jnp.bfloat16).astype(jnp.float32)


def _ref_conv_bn_relu(x_nhwc, w_hwio, b, gamma, beta):
    y = lax.conv_general_dilated(
        _bf16_round(x_nhwc), _bf16_round(w_hwio), window_strides=(1, 1),
        padding=((1, 1), (1, 1)), dimension_numbers=("NHWC", "HWIO", "NHWC"),
        precision=lax.Precision.HIGHEST)
    y = y + b[None, None, None, :]
    mean = jnp.mean(y, axis=(0, 1, 2), keepdims=True)
    var = jnp.mean((y - mean) ** 2, axis=(0, 1, 2), keepdims=True)
    y = (y - mean) * lax.rsqrt(var + BN_EPS) * gamma + beta
    return jnp.maximum(y, 0.0)


def double_conv_reference(x_nchw, params):
    x = jnp.transpose(x_nchw, (0, 2, 3, 1)).astype(jnp.float32)
    y1 = _ref_conv_bn_relu(x, params["w1"], params["b1"], params["g1"], params["bt1"])
    y2 = _ref_conv_bn_relu(y1, params["w2"], params["b2"], params["g2"], params["bt2"])
    return jnp.transpose(y2, (0, 3, 1, 2))


# --------------------------------------- main ---------------------------------------
if __name__ == "__main__":
    key = jax.random.PRNGKey(0)
    N, Cin, Cout, H, W = 2, 4, 8, 16, 16

    ks = jax.random.split(key, 9)
    # Weights stored HWIO: (3, 3, in, out).  Deterministic synthetic init.
    params = {
        "w1": 0.2 * jax.random.normal(ks[0], (3, 3, Cin, Cout), jnp.float32),
        "b1": 0.1 * jax.random.normal(ks[1], (Cout,), jnp.float32),
        "g1": 1.0 + 0.1 * jax.random.normal(ks[2], (Cout,), jnp.float32),
        "bt1": 0.1 * jax.random.normal(ks[3], (Cout,), jnp.float32),
        "w2": 0.2 * jax.random.normal(ks[4], (3, 3, Cout, Cout), jnp.float32),
        "b2": 0.1 * jax.random.normal(ks[5], (Cout,), jnp.float32),
        "g2": 1.0 + 0.1 * jax.random.normal(ks[6], (Cout,), jnp.float32),
        "bt2": 0.1 * jax.random.normal(ks[7], (Cout,), jnp.float32),
    }
    x = jax.random.normal(ks[8], (N, Cin, H, W), jnp.float32)

    out = jax.block_until_ready(jax.jit(double_conv_forward)(x, params))
    ref = jax.block_until_ready(double_conv_reference(x, params))

    assert out.shape == (N, Cout, H, W), out.shape
    max_err = float(jnp.max(jnp.abs(out - ref)))
    # Tolerance accounts for bf16 storage of the intermediate activations (per perf review).
    assert jnp.allclose(out, ref, atol=3e-2, rtol=3e-2), f"max_err={max_err}"
    print("KERNEL_OK")
</pallas_src>

<mosaic_0001>
module attributes {stable_mosaic.version = 11 : i64} {
  func.func @_conv1_kernel(%arg0: i32, %arg1: memref<1x12x16x12xbf16, #tpu.memory_space<vmem>>, %arg2: memref<3x12x128xbf16, #tpu.memory_space<vmem>>, %arg3: memref<1x10x16x128xbf16, #tpu.memory_space<vmem>>, %arg4: memref<1x2x128xf32, #tpu.memory_space<vmem>>) attributes {dimension_semantics = [#tpu.dimension_semantics<parallel>], iteration_bounds = array<i64: 4>, scalar_prefetch = 0 : i64, scratch_operands = 0 : i64, tpu.core_type = #tpu.core_type<tc>, window_params = [{transform_indices = @transform_0, window_bounds = array<i64: 1, 12, 16, 12>}, {pipeline_mode = #tpu.pipeline_mode<synchronous>, transform_indices = @transform_1, window_bounds = array<i64: 3, 12, 128>}, {transform_indices = @transform_2, window_bounds = array<i64: 1, 10, 16, 128>}, {transform_indices = @transform_3, window_bounds = array<i64: 1, 2, 128>}]} {
    %c0 = arith.constant 0 : index
    %c0_0 = arith.constant 0 : index
    %c0_1 = arith.constant 0 : index
    %c0_2 = arith.constant 0 : index
    %0 = vector.load %arg1[%c0, %c0_0, %c0_1, %c0_2] : memref<1x12x16x12xbf16, #tpu.memory_space<vmem>>, vector<1x10x16x12xbf16>
    %1 = vector.shape_cast %0 : vector<1x10x16x12xbf16> to vector<10x16x12xbf16>
    %2 = vector.shape_cast %1 : vector<10x16x12xbf16> to vector<160x12xbf16>
    %c0_3 = arith.constant 0 : index
    %c0_4 = arith.constant 0 : index
    %c0_5 = arith.constant 0 : index
    %3 = vector.load %arg2[%c0_3, %c0_4, %c0_5] : memref<3x12x128xbf16, #tpu.memory_space<vmem>>, vector<1x12x128xbf16>
    %4 = vector.shape_cast %3 : vector<1x12x128xbf16> to vector<12x128xbf16>
    %cst = arith.constant dense<0.000000e+00> : vector<160x128xf32>
    %5 = tpu.matmul %2, %4, %cst {dimension_numbers = #tpu.dot_dimension_numbers<[1], [0], [0], [1], [0, 0, 1, 1], [], []>} : vector<160x12xbf16>, vector<12x128xbf16>, vector<160x128xf32> -> vector<160x128xf32>
    %c0_6 = arith.constant 0 : index
    %c1 = arith.constant 1 : index
    %c0_7 = arith.constant 0 : index
    %c0_8 = arith.constant 0 : index
    %6 = vector.load %arg1[%c0_6, %c1, %c0_7, %c0_8] : memref<1x12x16x12xbf16, #tpu.memory_space<vmem>>, vector<1x10x16x12xbf16>
    %7 = vector.shape_cast %6 : vector<1x10x16x12xbf16> to vector<10x16x12xbf16>
    %8 = vector.shape_cast %7 : vector<10x16x12xbf16> to vector<160x12xbf16>
    %c1_9 = arith.constant 1 : index
    %c0_10 = arith.constant 0 : index
    %c0_11 = arith.constant 0 : index
    %9 = vector.load %arg2[%c1_9, %c0_10, %c0_11] : memref<3x12x128xbf16, #tpu.memory_space<vmem>>, vector<1x12x128xbf16>
    %10 = vector.shape_cast %9 : vector<1x12x128xbf16> to vector<12x128xbf16>
    %cst_12 = arith.constant dense<0.000000e+00> : vector<160x128xf32>
    %11 = tpu.matmul %8, %10, %cst_12 {dimension_numbers = #tpu.dot_dimension_numbers<[1], [0], [0], [1], [0, 0, 1, 1], [], []>} : vector<160x12xbf16>, vector<12x128xbf16>, vector<160x128xf32> -> vector<160x128xf32>
    %12 = arith.addf %5, %11 : vector<160x128xf32>
    %c0_13 = arith.constant 0 : index
    %c2 = arith.constant 2 : index
    %c0_14 = arith.constant 0 : index
    %c0_15 = arith.constant 0 : index
    %13 = vector.load %arg1[%c0_13, %c2, %c0_14, %c0_15] : memref<1x12x16x12xbf16, #tpu.memory_space<vmem>>, vector<1x10x16x12xbf16>
    %14 = vector.shape_cast %13 : vector<1x10x16x12xbf16> to vector<10x16x12xbf16>
    %15 = vector.shape_cast %14 : vector<10x16x12xbf16> to vector<160x12xbf16>
    %c2_16 = arith.constant 2 : index
    %c0_17 = arith.constant 0 : index
    %c0_18 = arith.constant 0 : index
    %16 = vector.load %arg2[%c2_16, %c0_17, %c0_18] : memref<3x12x128xbf16, #tpu.memory_space<vmem>>, vector<1x12x128xbf16>
    %17 = vector.shape_cast %16 : vector<1x12x128xbf16> to vector<12x128xbf16>
    %cst_19 = arith.constant dense<0.000000e+00> : vector<160x128xf32>
    %18 = tpu.matmul %15, %17, %cst_19 {dimension_numbers = #tpu.dot_dimension_numbers<[1], [0], [0], [1], [0, 0, 1, 1], [], []>} : vector<160x12xbf16>, vector<12x128xbf16>, vector<160x128xf32> -> vector<160x128xf32>
    %19 = arith.addf %12, %18 : vector<160x128xf32>
    %20 = vector.shape_cast %19 : vector<160x128xf32> to vector<10x16x128xf32>
    %21 = arith.truncf %20 : vector<10x16x128xf32> to vector<10x16x128xbf16>
    %c0_20 = arith.constant 0 : index
    %c0_21 = arith.constant 0 : index
    %c0_22 = arith.constant 0 : index
    %c0_23 = arith.constant 0 : index
    %22 = vector.load %arg3[%c0_20, %c0_21, %c0_22, %c0_23] : memref<1x10x16x128xbf16, #tpu.memory_space<vmem>>, vector<1x10x16x128xbf16>
    %23 = vector.shape_cast %22 : vector<1x10x16x128xbf16> to vector<10x16x128xbf16>
    %24 = vector.shape_cast %21 : vector<10x16x128xbf16> to vector<1x10x16x128xbf16>
    tpu.vector_store %arg3[%c0_20, %c0_21, %c0_22, %c0_23], %24 {strides = array<i32>} : memref<1x10x16x128xbf16, #tpu.memory_space<vmem>>, vector<1x10x16x128xbf16>,
    %25 = tpu.iota {dimensions = array<i32: 0>} : vector<10x16x1xi32>
    %c0_i32 = arith.constant 0 : i32
    %26 = vector.broadcast %c0_i32 : i32 to vector<10x16x1xi32>
    %27 = arith.addi %25, %26 : vector<10x16x1xi32>
    %28 = tpu.iota {dimensions = array<i32: 1>} : vector<10x16x1xi32>
    %c1_i32 = arith.constant 1 : i32
    %29 = vector.broadcast %c1_i32 : i32 to vector<10x16x1xi32>
    %30 = arith.cmpi sge, %27, %29 : vector<10x16x1xi32>
    %c8_i32 = arith.constant 8 : i32
    %31 = vector.broadcast %c8_i32 : i32 to vector<10x16x1xi32>
    %32 = arith.cmpi sle, %27, %31 : vector<10x16x1xi32>
    %33 = arith.andi %30, %32 : vector<10x16x1xi1>
    %c16_i32 = arith.constant 16 : i32
    %34 = vector.broadcast %c16_i32 : i32 to vector<10x16x1xi32>
    %35 = arith.cmpi slt, %28, %34 : vector<10x16x1xi32>
    %36 = arith.andi %33, %35 : vector<10x16x1xi1>
    %37 = arith.extui %36 : vector<10x16x1xi1> to vector<10x16x1xi32>
    %38 = arith.sitofp %37 : vector<10x16x1xi32> to vector<10x16x1xf32>
    %39 = vector.broadcast %38 : vector<10x16x1xf32> to vector<10x16x128xf32>
    %40 = arith.mulf %20, %39 : vector<10x16x128xf32>
    %cst_24 = arith.constant dense<0.000000e+00> : vector<16x128xf32>
    %41 = vector.multi_reduction <add>, %40, %cst_24 [0] : vector<10x16x128xf32> to vector<16x128xf32>
    %cst_25 = arith.constant dense<0.000000e+00> : vector<128xf32>
    %42 = vector.multi_reduction <add>, %41, %cst_25 [0] : vector<16x128xf32> to vector<128xf32>
    %43 = vector.shape_cast %42 : vector<128xf32> to vector<1x128xf32>
    %cst_26 = arith.constant 7.812500e-03 : f32
    %44 = vector.broadcast %cst_26 : f32 to vector<1x128xf32>
    %45 = arith.mulf %43, %44 : vector<1x128xf32>
    %46 = vector.shape_cast %45 : vector<1x128xf32> to vector<1x1x128xf32>
    %47 = vector.broadcast %46 : vector<1x1x128xf32> to vector<10x16x128xf32>
    %48 = arith.subf %20, %47 : vector<10x16x128xf32>
    %49 = vector.broadcast %38 : vector<10x16x1xf32> to vector<10x16x128xf32>
    %50 = arith.mulf %48, %49 : vector<10x16x128xf32>
    %51 = arith.mulf %50, %50 : vector<10x16x128xf32>
    %cst_27 = arith.constant dense<0.000000e+00> : vector<16x128xf32>
    %52 = vector.multi_reduction <add>, %51, %cst_27 [0] : vector<10x16x128xf32> to vector<16x128xf32>
    %cst_28 = arith.constant dense<0.000000e+00> : vector<128xf32>
    %53 = vector.multi_reduction <add>, %52, %cst_28 [0] : vector<16x128xf32> to vector<128xf32>
    %54 = vector.shape_cast %53 : vector<128xf32> to vector<1x128xf32>
    %c0_29 = arith.constant 0 : index
    %c0_30 = arith.constant 0 : index
    %c0_31 = arith.constant 0 : index
    %55 = vector.load %arg4[%c0_29, %c0_30, %c0_31] : memref<1x2x128xf32, #tpu.memory_space<vmem>>, vector<1x1x128xf32>
    %56 = vector.shape_cast %55 : vector<1x1x128xf32> to vector<1x128xf32>
    %57 = vector.shape_cast %45 : vector<1x128xf32> to vector<1x1x128xf32>
    tpu.vector_store %arg4[%c0_29, %c0_30, %c0_31], %57 {strides = array<i32>} : memref<1x2x128xf32, #tpu.memory_space<vmem>>, vector<1x1x128xf32>,
    %c0_32 = arith.constant 0 : index
    %c1_33 = arith.constant 1 : index
    %c0_34 = arith.constant 0 : index
    %58 = vector.load %arg4[%c0_32, %c1_33, %c0_34] : memref<1x2x128xf32, #tpu.memory_space<vmem>>, vector<1x1x128xf32>
    %59 = vector.shape_cast %58 : vector<1x1x128xf32> to vector<1x128xf32>
    %60 = vector.shape_cast %54 : vector<1x128xf32> to vector<1x1x128xf32>
    tpu.vector_store %arg4[%c0_32, %c1_33, %c0_34], %60 {strides = array<i32>} : memref<1x2x128xf32, #tpu.memory_space<vmem>>, vector<1x1x128xf32>,
    return
  }
  func.func @transform_0(%arg0: i32) -> (i32, i32, i32, i32) {
    %c0_i32 = arith.constant 0 : i32
    %c0_i32_0 = arith.constant 0 : i32
    %c0_i32_1 = arith.constant 0 : i32
    %c0_i32_2 = arith.constant 0 : i32
    return %arg0, %c0_i32, %c0_i32_0, %c0_i32_1 : i32, i32, i32, i32
  }
  func.func @transform_1(%arg0: i32) -> (i32, i32, i32) {
    %c0_i32 = arith.constant 0 : i32
    %c0_i32_0 = arith.constant 0 : i32
    %c0_i32_1 = arith.constant 0 : i32
    %c0_i32_2 = arith.constant 0 : i32
    return %c0_i32, %c0_i32_0, %c0_i32_1 : i32, i32, i32
  }
  func.func @transform_2(%arg0: i32) -> (i32, i32, i32, i32) {
    %c0_i32 = arith.constant 0 : i32
    %c0_i32_0 = arith.constant 0 : i32
    %c0_i32_1 = arith.constant 0 : i32
    %c0_i32_2 = arith.constant 0 : i32
    return %arg0, %c0_i32, %c0_i32_0, %c0_i32_1 : i32, i32, i32, i32
  }
  func.func @transform_3(%arg0: i32) -> (i32, i32, i32) {
    %c0_i32 = arith.constant 0 : i32
    %c0_i32_0 = arith.constant 0 : i32
    %c0_i32_1 = arith.constant 0 : i32
    return %arg0, %c0_i32, %c0_i32_0 : i32, i32, i32
  }
}

module attributes {stable_mosaic.version = 11 : i64} {
  func.func @_conv2_kernel(%arg0: i32, %arg1: memref<1x10x16x128xbf16, #tpu.memory_space<vmem>>, %arg2: memref<1x128xf32, #tpu.memory_space<vmem>>, %arg3: memref<1x128xf32, #tpu.memory_space<vmem>>, %arg4: memref<3x384x128xbf16, #tpu.memory_space<vmem>>, %arg5: memref<1x8x16x128xbf16, #tpu.memory_space<vmem>>, %arg6: memref<1x2x128xf32, #tpu.memory_space<vmem>>) attributes {dimension_semantics = [#tpu.dimension_semantics<parallel>], iteration_bounds = array<i64: 4>, scalar_prefetch = 0 : i64, scratch_operands = 0 : i64, tpu.core_type = #tpu.core_type<tc>, window_params = [{transform_indices = @transform_0, window_bounds = array<i64: 1, 10, 16, 128>}, {pipeline_mode = #tpu.pipeline_mode<synchronous>, transform_indices = @transform_1, window_bounds = array<i64: 1, 128>}, {pipeline_mode = #tpu.pipeline_mode<synchronous>, transform_indices = @transform_2, window_bounds = array<i64: 1, 128>}, {pipeline_mode = #tpu.pipeline_mode<synchronous>, transform_indices = @transform_3, window_bounds = array<i64: 3, 384, 128>}, {transform_indices = @transform_4, window_bounds = array<i64: 1, 8, 16, 128>}, {transform_indices = @transform_5, window_bounds = array<i64: 1, 2, 128>}]} {
    %c2_i32 = arith.constant 2 : i32
    %c0_i32 = arith.constant 0 : i32
    %0 = arith.cmpi eq, %c2_i32, %c0_i32 : i32
    %c1_i32 = arith.constant 1 : i32
    %1 = arith.select %0, %c1_i32, %c2_i32 : i32
    %2 = arith.remsi %arg0, %1 : i32
    %c0_i32_0 = arith.constant 0 : i32
    %3 = arith.cmpi ne, %2, %c0_i32_0 : i32
    %c0_i32_1 = arith.constant 0 : i32
    %4 = arith.cmpi slt, %2, %c0_i32_1 : i32
    %c0_i32_2 = arith.constant 0 : i32
    %5 = arith.cmpi slt, %1, %c0_i32_2 : i32
    %6 = arith.xori %4, %5 : i1
    %7 = arith.andi %6, %3 : i1
    %8 = arith.addi %2, %1 : i32
    %9 = arith.select %7, %8, %2 : i32
    %c8_i32 = arith.constant 8 : i32
    %10 = arith.muli %9, %c8_i32 : i32
    %c1_i32_3 = arith.constant 1 : i32
    %11 = arith.subi %10, %c1_i32_3 : i32
    %c0 = arith.constant 0 : index
    %c0_4 = arith.constant 0 : index
    %c0_5 = arith.constant 0 : index
    %c0_6 = arith.constant 0 : index
    %12 = vector.load %arg1[%c0, %c0_4, %c0_5, %c0_6] : memref<1x10x16x128xbf16, #tpu.memory_space<vmem>>, vector<1x10x16x128xbf16>
    %13 = vector.shape_cast %12 : vector<1x10x16x128xbf16> to vector<10x16x128xbf16>
    %14 = arith.extf %13 : vector<10x16x128xbf16> to vector<10x16x128xf32>
    %c0_7 = arith.constant 0 : index
    %c0_8 = arith.constant 0 : index
    %15 = vector.load %arg2[%c0_7, %c0_8] : memref<1x128xf32, #tpu.memory_space<vmem>>, vector<1x128xf32>
    %16 = vector.shape_cast %15 : vector<1x128xf32> to vector<1x1x128xf32>
    %c0_9 = arith.constant 0 : index
    %c0_10 = arith.constant 0 : index
    %17 = vector.load %arg3[%c0_9, %c0_10] : memref<1x128xf32, #tpu.memory_space<vmem>>, vector<1x128xf32>
    %18 = vector.shape_cast %17 : vector<1x128xf32> to vector<1x1x128xf32>
    %19 = tpu.iota {dimensions = array<i32: 0>} : vector<10x16x1xi32>
    %20 = vector.broadcast %11 : i32 to vector<10x16x1xi32>
    %21 = arith.addi %19, %20 : vector<10x16x1xi32>
    %22 = tpu.iota {dimensions = array<i32: 1>} : vector<10x16x1xi32>
    %c0_i32_11 = arith.constant 0 : i32
    %23 = vector.broadcast %c0_i32_11 : i32 to vector<10x16x1xi32>
    %24 = arith.cmpi sge, %21, %23 : vector<10x16x1xi32>
    %c15_i32 = arith.constant 15 : i32
    %25 = vector.broadcast %c15_i32 : i32 to vector<10x16x1xi32>
    %26 = arith.cmpi sle, %21, %25 : vector<10x16x1xi32>
    %27 = arith.andi %24, %26 : vector<10x16x1xi1>
    %c16_i32 = arith.constant 16 : i32
    %28 = vector.broadcast %c16_i32 : i32 to vector<10x16x1xi32>
    %29 = arith.cmpi slt, %22, %28 : vector<10x16x1xi32>
    %30 = arith.andi %27, %29 : vector<10x16x1xi1>
    %31 = vector.broadcast %16 : vector<1x1x128xf32> to vector<10x16x128xf32>
    %32 = arith.mulf %14, %31 : vector<10x16x128xf32>
    %33 = vector.broadcast %18 : vector<1x1x128xf32> to vector<10x16x128xf32>
    %34 = arith.addf %32, %33 : vector<10x16x128xf32>
    %cst = arith.constant 0.000000e+00 : f32
    %35 = vector.broadcast %cst : f32 to vector<10x16x128xf32>
    %36 = arith.maximumf %34, %35 : vector<10x16x128xf32>
    %cst_12 = arith.constant 0.000000e+00 : f32
    %37 = vector.shape_cast %30 : vector<10x16x1xi1> to vector<10x16x1xi1>
    %38 = vector.broadcast %37 : vector<10x16x1xi1> to vector<10x16x128xi1>
    %39 = vector.broadcast %cst_12 : f32 to vector<10x16x128xf32>
    %40 = arith.select %38, %36, %39 : vector<10x16x128xi1>, vector<10x16x128xf32>
    %41 = arith.truncf %40 : vector<10x16x128xf32> to vector<10x16x128xbf16>
    %cst_13 = arith.constant 0.000000e+00 : bf16
    %42 = vector.broadcast %cst_13 : bf16 to vector<10x1x128xbf16>
    %43 = tpu.concatenate %42, %41, %42 in 1 : vector<10x1x128xbf16>, vector<10x16x128xbf16>, vector<10x1x128xbf16> -> vector<10x18x128xbf16>
    %44 = vector.extract_strided_slice %43 {offsets = [0, 0, 0], sizes = [10, 16, 128], strides = [1, 1, 1]} : vector<10x18x128xbf16> to vector<10x16x128xbf16>
    %45 = vector.extract_strided_slice %43 {offsets = [0, 1, 0], sizes = [10, 16, 128], strides = [1, 1, 1]} : vector<10x18x128xbf16> to vector<10x16x128xbf16>
    %46 = vector.extract_strided_slice %43 {offsets = [0, 2, 0], sizes = [10, 16, 128], strides = [1, 1, 1]} : vector<10x18x128xbf16> to vector<10x16x128xbf16>
    %47 = tpu.concatenate %44, %45, %46 in 2 : vector<10x16x128xbf16>, vector<10x16x128xbf16>, vector<10x16x128xbf16> -> vector<10x16x384xbf16>
    %48 = vector.extract_strided_slice %47 {offsets = [0, 0, 0], sizes = [8, 16, 384], strides = [1, 1, 1]} : vector<10x16x384xbf16> to vector<8x16x384xbf16>
    %49 = vector.shape_cast %48 : vector<8x16x384xbf16> to vector<128x384xbf16>
    %c0_14 = arith.constant 0 : index
    %c0_15 = arith.constant 0 : index
    %c0_16 = arith.constant 0 : index
    %50 = vector.load %arg4[%c0_14, %c0_15, %c0_16] : memref<3x384x128xbf16, #tpu.memory_space<vmem>>, vector<1x384x128xbf16>
    %51 = vector.shape_cast %50 : vector<1x384x128xbf16> to vector<384x128xbf16>
    %cst_17 = arith.constant dense<0.000000e+00> : vector<128x128xf32>
    %52 = tpu.matmul %49, %51, %cst_17 {dimension_numbers = #tpu.dot_dimension_numbers<[1], [0], [0], [1], [0, 0, 1, 1], [], []>} : vector<128x384xbf16>, vector<384x128xbf16>, vector<128x128xf32> -> vector<128x128xf32>
    %53 = vector.extract_strided_slice %47 {offsets = [1, 0, 0], sizes = [8, 16, 384], strides = [1, 1, 1]} : vector<10x16x384xbf16> to vector<8x16x384xbf16>
    %54 = vector.shape_cast %53 : vector<8x16x384xbf16> to vector<128x384xbf16>
    %c1 = arith.constant 1 : index
    %c0_18 = arith.constant 0 : index
    %c0_19 = arith.constant 0 : index
    %55 = vector.load %arg4[%c1, %c0_18, %c0_19] : memref<3x384x128xbf16, #tpu.memory_space<vmem>>, vector<1x384x128xbf16>
    %56 = vector.shape_cast %55 : vector<1x384x128xbf16> to vector<384x128xbf16>
    %cst_20 = arith.constant dense<0.000000e+00> : vector<128x128xf32>
    %57 = tpu.matmul %54, %56, %cst_20 {dimension_numbers = #tpu.dot_dimension_numbers<[1], [0], [0], [1], [0, 0, 1, 1], [], []>} : vector<128x384xbf16>, vector<384x128xbf16>, vector<128x128xf32> -> vector<128x128xf32>
    %58 = arith.addf %52, %57 : vector<128x128xf32>
    %59 = vector.extract_strided_slice %47 {offsets = [2, 0, 0], sizes = [8, 16, 384], strides = [1, 1, 1]} : vector<10x16x384xbf16> to vector<8x16x384xbf16>
    %60 = vector.shape_cast %59 : vector<8x16x384xbf16> to vector<128x384xbf16>
    %c2 = arith.constant 2 : index
    %c0_21 = arith.constant 0 : index
    %c0_22 = arith.constant 0 : index
    %61 = vector.load %arg4[%c2, %c0_21, %c0_22] : memref<3x384x128xbf16, #tpu.memory_space<vmem>>, vector<1x384x128xbf16>
    %62 = vector.shape_cast %61 : vector<1x384x128xbf16> to vector<384x128xbf16>
    %cst_23 = arith.constant dense<0.000000e+00> : vector<128x128xf32>
    %63 = tpu.matmul %60, %62, %cst_23 {dimension_numbers = #tpu.dot_dimension_numbers<[1], [0], [0], [1], [0, 0, 1, 1], [], []>} : vector<128x384xbf16>, vector<384x128xbf16>, vector<128x128xf32> -> vector<128x128xf32>
    %64 = arith.addf %58, %63 : vector<128x128xf32>
    %65 = vector.shape_cast %64 : vector<128x128xf32> to vector<8x16x128xf32>
    %66 = arith.truncf %65 : vector<8x16x128xf32> to vector<8x16x128xbf16>
    %c0_24 = arith.constant 0 : index
    %c0_25 = arith.constant 0 : index
    %c0_26 = arith.constant 0 : index
    %c0_27 = arith.constant 0 : index
    %67 = vector.load %arg5[%c0_24, %c0_25, %c0_26, %c0_27] : memref<1x8x16x128xbf16, #tpu.memory_space<vmem>>, vector<1x8x16x128xbf16>
    %68 = vector.shape_cast %67 : vector<1x8x16x128xbf16> to vector<8x16x128xbf16>
    %69 = vector.shape_cast %66 : vector<8x16x128xbf16> to vector<1x8x16x128xbf16>
    tpu.vector_store %arg5[%c0_24, %c0_25, %c0_26, %c0_27], %69 {strides = array<i32>} : memref<1x8x16x128xbf16, #tpu.memory_space<vmem>>, vector<1x8x16x128xbf16>,
    %70 = tpu.iota {dimensions = array<i32: 0>} : vector<8x16x1xi32>
    %c0_i32_28 = arith.constant 0 : i32
    %71 = vector.broadcast %c0_i32_28 : i32 to vector<8x16x1xi32>
    %72 = arith.addi %70, %71 : vector<8x16x1xi32>
    %73 = tpu.iota {dimensions = array<i32: 1>} : vector<8x16x1xi32>
    %c0_i32_29 = arith.constant 0 : i32
    %74 = vector.broadcast %c0_i32_29 : i32 to vector<8x16x1xi32>
    %75 = arith.cmpi sge, %72, %74 : vector<8x16x1xi32>
    %c7_i32 = arith.constant 7 : i32
    %76 = vector.broadcast %c7_i32 : i32 to vector<8x16x1xi32>
    %77 = arith.cmpi sle, %72, %76 : vector<8x16x1xi32>
    %78 = arith.andi %75, %77 : vector<8x16x1xi1>
    %c16_i32_30 = arith.constant 16 : i32
    %79 = vector.broadcast %c16_i32_30 : i32 to vector<8x16x1xi32>
    %80 = arith.cmpi slt, %73, %79 : vector<8x16x1xi32>
    %81 = arith.andi %78, %80 : vector<8x16x1xi1>
    %82 = arith.extui %81 : vector<8x16x1xi1> to vector<8x16x1xi32>
    %83 = arith.sitofp %82 : vector<8x16x1xi32> to vector<8x16x1xf32>
    %84 = vector.broadcast %83 : vector<8x16x1xf32> to vector<8x16x128xf32>
    %85 = arith.mulf %65, %84 : vector<8x16x128xf32>
    %cst_31 = arith.constant dense<0.000000e+00> : vector<16x128xf32>
    %86 = vector.multi_reduction <add>, %85, %cst_31 [0] : vector<8x16x128xf32> to vector<16x128xf32>
    %cst_32 = arith.constant dense<0.000000e+00> : vector<128xf32>
    %87 = vector.multi_reduction <add>, %86, %cst_32 [0] : vector<16x128xf32> to vector<128xf32>
    %88 = vector.shape_cast %87 : vector<128xf32> to vector<1x128xf32>
    %cst_33 = arith.constant 7.812500e-03 : f32
    %89 = vector.broadcast %cst_33 : f32 to vector<1x128xf32>
    %90 = arith.mulf %88, %89 : vector<1x128xf32>
    %91 = vector.shape_cast %90 : vector<1x128xf32> to vector<1x1x128xf32>
    %92 = vector.broadcast %91 : vector<1x1x128xf32> to vector<8x16x128xf32>
    %93 = arith.subf %65, %92 : vector<8x16x128xf32>
    %94 = vector.broadcast %83 : vector<8x16x1xf32> to vector<8x16x128xf32>
    %95 = arith.mulf %93, %94 : vector<8x16x128xf32>
    %96 = arith.mulf %95, %95 : vector<8x16x128xf32>
    %cst_34 = arith.constant dense<0.000000e+00> : vector<16x128xf32>
    %97 = vector.multi_reduction <add>, %96, %cst_34 [0] : vector<8x16x128xf32> to vector<16x128xf32>
    %cst_35 = arith.constant dense<0.000000e+00> : vector<128xf32>
    %98 = vector.multi_reduction <add>, %97, %cst_35 [0] : vector<16x128xf32> to vector<128xf32>
    %99 = vector.shape_cast %98 : vector<128xf32> to vector<1x128xf32>
    %c0_36 = arith.constant 0 : index
    %c0_37 = arith.constant 0 : index
    %c0_38 = arith.constant 0 : index
    %100 = vector.load %arg6[%c0_36, %c0_37, %c0_38] : memref<1x2x128xf32, #tpu.memory_space<vmem>>, vector<1x1x128xf32>
    %101 = vector.shape_cast %100 : vector<1x1x128xf32> to vector<1x128xf32>
    %102 = vector.shape_cast %90 : vector<1x128xf32> to vector<1x1x128xf32>
    tpu.vector_store %arg6[%c0_36, %c0_37, %c0_38], %102 {strides = array<i32>} : memref<1x2x128xf32, #tpu.memory_space<vmem>>, vector<1x1x128xf32>,
    %c0_39 = arith.constant 0 : index
    %c1_40 = arith.constant 1 : index
    %c0_41 = arith.constant 0 : index
    %103 = vector.load %arg6[%c0_39, %c1_40, %c0_41] : memref<1x2x128xf32, #tpu.memory_space<vmem>>, vector<1x1x128xf32>
    %104 = vector.shape_cast %103 : vector<1x1x128xf32> to vector<1x128xf32>
    %105 = vector.shape_cast %99 : vector<1x128xf32> to vector<1x1x128xf32>
    tpu.vector_store %arg6[%c0_39, %c1_40, %c0_41], %105 {strides = array<i32>} : memref<1x2x128xf32, #tpu.memory_space<vmem>>, vector<1x1x128xf32>,
    return
  }
  func.func @transform_0(%arg0: i32) -> (i32, i32, i32, i32) {
    %c0_i32 = arith.constant 0 : i32
    %c0_i32_0 = arith.constant 0 : i32
    %c0_i32_1 = arith.constant 0 : i32
    %c0_i32_2 = arith.constant 0 : i32
    return %arg0, %c0_i32, %c0_i32_0, %c0_i32_1 : i32, i32, i32, i32
  }
  func.func @transform_1(%arg0: i32) -> (i32, i32) {
    %c0_i32 = arith.constant 0 : i32
    %c0_i32_0 = arith.constant 0 : i32
    %c0_i32_1 = arith.constant 0 : i32
    return %c0_i32, %c0_i32_0 : i32, i32
  }
  func.func @transform_2(%arg0: i32) -> (i32, i32) {
    %c0_i32 = arith.constant 0 : i32
    %c0_i32_0 = arith.constant 0 : i32
    %c0_i32_1 = arith.constant 0 : i32
    return %c0_i32, %c0_i32_0 : i32, i32
  }
  func.func @transform_3(%arg0: i32) -> (i32, i32, i32) {
    %c0_i32 = arith.constant 0 : i32
    %c0_i32_0 = arith.constant 0 : i32
    %c0_i32_1 = arith.constant 0 : i32
    %c0_i32_2 = arith.constant 0 : i32
    return %c0_i32, %c0_i32_0, %c0_i32_1 : i32, i32, i32
  }
  func.func @transform_4(%arg0: i32) -> (i32, i32, i32, i32) {
    %c0_i32 = arith.constant 0 : i32
    %c0_i32_0 = arith.constant 0 : i32
    %c0_i32_1 = arith.constant 0 : i32
    %c0_i32_2 = arith.constant 0 : i32
    return %arg0, %c0_i32, %c0_i32_0, %c0_i32_1 : i32, i32, i32, i32
  }
  func.func @transform_5(%arg0: i32) -> (i32, i32, i32) {
    %c0_i32 = arith.constant 0 : i32
    %c0_i32_0 = arith.constant 0 : i32
    %c0_i32_1 = arith.constant 0 : i32
    return %arg0, %c0_i32, %c0_i32_0 : i32, i32, i32
  }
}

module attributes {stable_mosaic.version = 11 : i64} {
  func.func @_bn_relu_kernel(%arg0: i32, %arg1: memref<1x8x16x128xbf16, #tpu.memory_space<vmem>>, %arg2: memref<1x128xf32, #tpu.memory_space<vmem>>, %arg3: memref<1x128xf32, #tpu.memory_space<vmem>>, %arg4: memref<1x8x16x128xf32, #tpu.memory_space<vmem>>) attributes {dimension_semantics = [#tpu.dimension_semantics<parallel>], iteration_bounds = array<i64: 4>, scalar_prefetch = 0 : i64, scratch_operands = 0 : i64, tpu.core_type = #tpu.core_type<tc>, window_params = [{transform_indices = @transform_0, window_bounds = array<i64: 1, 8, 16, 128>}, {pipeline_mode = #tpu.pipeline_mode<synchronous>, transform_indices = @transform_1, window_bounds = array<i64: 1, 128>}, {pipeline_mode = #tpu.pipeline_mode<synchronous>, transform_indices = @transform_2, window_bounds = array<i64: 1, 128>}, {transform_indices = @transform_3, window_bounds = array<i64: 1, 8, 16, 128>}]} {
    %c0 = arith.constant 0 : index
    %c0_0 = arith.constant 0 : index
    %0 = vector.load %arg2[%c0, %c0_0] : memref<1x128xf32, #tpu.memory_space<vmem>>, vector<1x128xf32>
    %1 = vector.shape_cast %0 : vector<1x128xf32> to vector<1x1x1x128xf32>
    %c0_1 = arith.constant 0 : index
    %c0_2 = arith.constant 0 : index
    %2 = vector.load %arg3[%c0_1, %c0_2] : memref<1x128xf32, #tpu.memory_space<vmem>>, vector<1x128xf32>
    %3 = vector.shape_cast %2 : vector<1x128xf32> to vector<1x1x1x128xf32>
    %c0_3 = arith.constant 0 : index
    %c0_4 = arith.constant 0 : index
    %c0_5 = arith.constant 0 : index
    %c0_6 = arith.constant 0 : index
    %4 = vector.load %arg1[%c0_3, %c0_4, %c0_5, %c0_6] : memref<1x8x16x128xbf16, #tpu.memory_space<vmem>>, vector<1x8x16x128xbf16>
    %5 = arith.extf %4 : vector<1x8x16x128xbf16> to vector<1x8x16x128xf32>
    %6 = vector.broadcast %1 : vector<1x1x1x128xf32> to vector<1x8x16x128xf32>
    %7 = arith.mulf %5, %6 : vector<1x8x16x128xf32>
    %8 = vector.broadcast %3 : vector<1x1x1x128xf32> to vector<1x8x16x128xf32>
    %9 = arith.addf %7, %8 : vector<1x8x16x128xf32>
    %cst = arith.constant 0.000000e+00 : f32
    %10 = vector.broadcast %cst : f32 to vector<1x8x16x128xf32>
    %11 = arith.maximumf %9, %10 : vector<1x8x16x128xf32>
    %c0_7 = arith.constant 0 : index
    %c0_8 = arith.constant 0 : index
    %c0_9 = arith.constant 0 : index
    %c0_10 = arith.constant 0 : index
    %12 = vector.load %arg4[%c0_7, %c0_8, %c0_9, %c0_10] : memref<1x8x16x128xf32, #tpu.memory_space<vmem>>, vector<1x8x16x128xf32>
    tpu.vector_store %arg4[%c0_7, %c0_8, %c0_9, %c0_10], %11 {strides = array<i32>} : memref<1x8x16x128xf32, #tpu.memory_space<vmem>>, vector<1x8x16x128xf32>,
    return
  }
  func.func @transform_0(%arg0: i32) -> (i32, i32, i32, i32) {
    %c0_i32 = arith.constant 0 : i32
    %c0_i32_0 = arith.constant 0 : i32
    %c0_i32_1 = arith.constant 0 : i32
    %c0_i32_2 = arith.constant 0 : i32
    return %arg0, %c0_i32, %c0_i32_0, %c0_i32_1 : i32, i32, i32, i32
  }
  func.func @transform_1(%arg0: i32) -> (i32, i32) {
    %c0_i32 = arith.constant 0 : i32
    %c0_i32_0 = arith.constant 0 : i32
    %c0_i32_1 = arith.constant 0 : i32
    return %c0_i32, %c0_i32_0 : i32, i32
  }
  func.func @transform_2(%arg0: i32) -> (i32, i32) {
    %c0_i32 = arith.constant 0 : i32
    %c0_i32_0 = arith.constant 0 : i32
    %c0_i32_1 = arith.constant 0 : i32
    return %c0_i32, %c0_i32_0 : i32, i32
  }
  func.func @transform_3(%arg0: i32) -> (i32, i32, i32, i32) {
    %c0_i32 = arith.constant 0 : i32
    %c0_i32_0 = arith.constant 0 : i32
    %c0_i32_1 = arith.constant 0 : i32
    %c0_i32_2 = arith.constant 0 : i32
    return %arg0, %c0_i32, %c0_i32_0, %c0_i32_1 : i32, i32, i32, i32
  }
}

</mosaic_0001>

<llo_original>
// kernel: double_conv_forward.5
$region0: #{double_conv_forward.5}
  #allocation0 [shape = 'u32[]', space=smem, size = 0x4, offset = 0x4, fixed_abs, tag = 'smem constant byte address 0x4 - core index']
  #allocation1 [shape = 'u32[144,128]{1,0:T(1,128)}', space=vmem, size = 0x12000, scoped, tag = 'internal scratch']
  %s0 = inlined_call_operand.vmem [shape: bf16[4,8,16,128], index: 0, kind: input, shape index: {}]
  %s1 = inlined_call_operand.vmem [shape: f32[1,128], index: 1, kind: input, shape index: {}]
  %s2 = inlined_call_operand.vmem [shape: f32[1,128], index: 2, kind: input, shape index: {}]
  %s3 = inlined_call_operand.vmem [shape: f32[4,8,16,128], index: 3, kind: output, shape index: {}]
  %s4 = sld [smem:[#allocation0]]
  $region45: #{double_conv_forward.5} parent=0
    _
  %s6 = ssub.s32 1, %s4
  %s7 = scalar_select 0, %s6, %s4
  loop: start=0, step=1, limit=6
  $region2: #{double_conv_forward.5} parent=0 // loop_pre_header
    _
  $region3: #{double_conv_forward.5} parent=0 // loop_header
    %s9 = sphi 0, %s13
    %p10 = scmp.ge.s32.totalorder %s9, 6
    %s19 = sphi 0, %s21
    %s22 = sphi 0, %s19
    %s23 = sphi 0, %s22
    %s39 = sphi 0, %s23
    %s43 = sphi 0, %s43
    %s45 = sphi 0, %s43
    %s46 = sphi 0, %s45
    %s60 = sphi 0, %s46
    %s64 = sphi 0, %s64
    %s66 = sphi 0, %s64
    %s67 = sphi 0, %s66
    %s81 = sphi 0, %s67
    %s87 = sphi 0, %s89
    %s90 = sphi 0, %s87
    %s91 = sphi 0, %s90
    %s107 = sphi 0, %s91
  $region4: #{double_conv_forward.5} parent=0 // loop_header_branch
    %12 = sbr.rel (%p10) target = $region8
  $region5: #{double_conv_forward.5} parent=0 // loop_body
    %s14 = ssub.s32 %s9, 1
    %s15 = ssub.s32 %s9, 2
    %s16 = sadd.s32 %s9, 1
    %s17 = ssub.s32 %s9, %s16
    %p18 = scmp.eq.s32.totalorder %s17, 0
    %s20 = sadd.s32 %s19, 1
    %s21 = scalar_select %p18, %s19, %s20
    %p24 = pneg %p18
    %p25 = scmp.eq.s32.totalorder %s9, 3
    %p26 = por %p24, %p25
    %p27 = scmp.ne.s32.totalorder %s19, %s22
    %p28 = scmp.eq.s32.totalorder %s9, 0
    %p29 = por %p27, %p28
    %p30 = scmp.ne.s32.totalorder %s19, %s22
    %p31 = scmp.eq.s32.totalorder %s14, 3
    %p32 = por %p30, %p31
    %p33 = scmp.ne.s32.totalorder %s22, %s23
    %p34 = scmp.eq.s32.totalorder %s14, 0
    %p35 = por %p33, %p34
    %p36 = scmp.ne.s32.totalorder %s22, %s23
    %p37 = scmp.eq.s32.totalorder %s15, 3
    %p38 = por %p36, %p37
    %p40 = scmp.ne.s32.totalorder %s23, %s39
    %p41 = scmp.eq.s32.totalorder %s15, 0
    %p42 = por %p40, %p41
    %s44 = sadd.s32 %s43, 1
    %p47 = scmp.eq.s32.totalorder %s9, 3
    %p48 = scmp.ne.s32.totalorder %s43, %s45
    %p49 = scmp.eq.s32.totalorder %s9, 0
    %p50 = por %p48, %p49
    %p51 = scmp.ne.s32.totalorder %s43, %s45
    %p52 = scmp.eq.s32.totalorder %s14, 3
    %p53 = por %p51, %p52
    %p54 = scmp.ne.s32.totalorder %s45, %s46
    %p55 = scmp.eq.s32.totalorder %s14, 0
    %p56 = por %p54, %p55
    %p57 = scmp.ne.s32.totalorder %s45, %s46
    %p58 = scmp.eq.s32.totalorder %s15, 3
    %p59 = por %p57, %p58
    %p61 = scmp.ne.s32.totalorder %s46, %s60
    %p62 = scmp.eq.s32.totalorder %s15, 0
    %p63 = por %p61, %p62
    %s65 = sadd.s32 %s64, 1
    %p68 = scmp.eq.s32.totalorder %s9, 3
    %p69 = scmp.ne.s32.totalorder %s64, %s66
    %p70 = scmp.eq.s32.totalorder %s9, 0
    %p71 = por %p69, %p70
    %p72 = scmp.ne.s32.totalorder %s64, %s66
    %p73 = scmp.eq.s32.totalorder %s14, 3
    %p74 = por %p72, %p73
    %p75 = scmp.ne.s32.totalorder %s66, %s67
    %p76 = scmp.eq.s32.totalorder %s14, 0
    %p77 = por %p75, %p76
    %p78 = scmp.ne.s32.totalorder %s66, %s67
    %p79 = scmp.eq.s32.totalorder %s15, 3
    %p80 = por %p78, %p79
    %p82 = scmp.ne.s32.totalorder %s67, %s81
    %p83 = scmp.eq.s32.totalorder %s15, 0
    %p84 = por %p82, %p83
    %s85 = ssub.s32 %s9, %s16
    %p86 = scmp.eq.s32.totalorder %s85, 0
    %s88 = sadd.s32 %s87, 1
    %s89 = scalar_select %p86, %s87, %s88
    %p92 = pneg %p86
    %p93 = scmp.eq.s32.totalorder %s9, 3
    %p94 = por %p92, %p93
    %p95 = scmp.ne.s32.totalorder %s87, %s90
    %p96 = scmp.eq.s32.totalorder %s9, 0
    %p97 = por %p95, %p96
    %p98 = scmp.ne.s32.totalorder %s87, %s90
    %p99 = scmp.eq.s32.totalorder %s14, 3
    %p100 = por %p98, %p99
    %p101 = scmp.ne.s32.totalorder %s90, %s91
    %p102 = scmp.eq.s32.totalorder %s14, 0
    %p103 = por %p101, %p102
    %p104 = scmp.ne.s32.totalorder %s90, %s91
    %p105 = scmp.eq.s32.totalorder %s15, 3
    %p106 = por %p104, %p105
    %p108 = scmp.ne.s32.totalorder %s91, %s107
    %p109 = scmp.eq.s32.totalorder %s15, 0
    %p110 = por %p108, %p109
    %p111 = scmp.le.s32.totalorder 1, %s9
    %p112 = scmp.lt.s32.totalorder %s9, 5
    %p113 = pnand %p111, %p112
    %p114 = pneg %p113
    // Predicated region
    $region9: #{double_conv_forward.5} parent=5 // pred_check
      _
    $region10: #{double_conv_forward.5} parent=5 // pred_check_branch
      %116 = sbr.rel (%p113) target = $region12
    $region11: #{double_conv_forward.5} parent=5 // pred_region
      %s117 = ssub.s32 %s9, 1
      // Predicated region
      $region13: #{double_conv_forward.5} parent=11 // pred_check
        %p118 = pneg %p56
      $region14: #{double_conv_forward.5} parent=11 // pred_check_branch
        %120 = sbr.rel (%p118) target = $region16
      $region15: #{double_conv_forward.5} parent=11 // pred_region
        _
      $region16: #{double_conv_forward.5} parent=11 // pred_fallthru
        _
      // Predicated region
      $region17: #{double_conv_forward.5} parent=11 // pred_check
        %p121 = pneg %p77
      $region18: #{double_conv_forward.5} parent=11 // pred_check_branch
        %123 = sbr.rel (%p121) target = $region20
      $region19: #{double_conv_forward.5} parent=11 // pred_region
        _
      $region20: #{double_conv_forward.5} parent=11 // pred_fallthru
        _
    $region12: #{double_conv_forward.5} parent=5 // pred_fallthru
      _
    %p124 = scmp.lt.s32.totalorder %s9, 4
    // Predicated region
    $region21: #{double_conv_forward.5} parent=5 // pred_check
      %p125 = pneg %p124
    $region22: #{double_conv_forward.5} parent=5 // pred_check_branch
      %127 = sbr.rel (%p125) target = $region24
    $region23: #{double_conv_forward.5} parent=5 // pred_region
      // Predicated region
      $region25: #{double_conv_forward.5} parent=23 // pred_check
        %p128 = pneg %p29
      $region26: #{double_conv_forward.5} parent=23 // pred_check_branch
        %130 = sbr.rel (%p128) target = $region28
      $region27: #{double_conv_forward.5} parent=23 // pred_region
        %p131 = scmp.lt.s32.totalorder %s9, 3
        %s132 = scalar_select %p131, %s9, 3
        %s133 = smul.addr %s132, 16
        %s134 = smul.addr %s133, 4
        %s135 = scalar_lea.vmem %s0, %s134
      $region28: #{double_conv_forward.5} parent=23 // pred_fallthru
        _
    $region24: #{double_conv_forward.5} parent=5 // pred_fallthru
      _
    %p136 = scmp.le.s32.totalorder 1, %s9
    %p137 = scmp.lt.s32.totalorder %s9, 5
    %p138 = pnand %p136, %p137
    %p139 = pneg %p138
    // Predicated region
    $region29: #{double_conv_forward.5} parent=5 // pred_check
      _
    $region30: #{double_conv_forward.5} parent=5 // pred_check_branch
      %141 = sbr.rel (%p138) target = $region32
    $region31: #{double_conv_forward.5} parent=5 // pred_region
      %s142 = ssub.s32 %s9, 1
      %p143 = scmp.lt.s32.totalorder %s14, 3
      %s144 = scalar_select %p143, %s14, 3
      %s145 = smul.addr %s144, 16
      %s146 = smul.addr %s145, 4
      %s147 = scalar_lea.vmem %s0, %s146
      %p148 = pneg %p35
      %p149 = pneg %p32
      %p150 = pneg %p56
      %p151 = pneg %p53
      %p152 = pneg %p77
      %p153 = pneg %p74
      %p154 = pneg %p103
      %p155 = pneg %p100
      %p156 = scmp.lt.s32.totalorder %s14, 3
      %s157 = scalar_select %p156, %s14, 3
      %s158 = smul.addr %s157, 16
      %s159 = smul.addr %s158, 8
      %s160 = scalar_lea.vmem %s3, %s159
      %p161 = scmp.lt.s32.totalorder %s14, 3
      %s162 = scalar_select %p161, %s14, 3
      %s163 = smul.addr %s162, 16
      %s164 = smul.addr %s163, 4
      %s165 = scalar_lea.vmem %s0, %s164
      %p166 = scmp.lt.s32.totalorder %s14, 3
      %s167 = scalar_select %p166, %s14, 3
      %s168 = smul.addr %s167, 16
      %s169 = smul.addr %s168, 8
      %s170 = scalar_lea.vmem %s3, %s169
      %v171 = vld [vmem:[%s1] sm:$0x1]
      %v172 = vld [vmem:[%s2] sm:$0x1]
      %v173 = vld [vmem:[%s165] sm:$0xf]
      %v174 = vld [vmem:[%s165 + $0x4] sm:$0xf]
      %v175 = vld [vmem:[%s165 + $0x8] sm:$0xf]
      %v176 = vld [vmem:[%s165 + $0xc] sm:$0xf]
      %v177 = vld [vmem:[%s165 + $0x10] sm:$0xf]
      %v178 = vld [vmem:[%s165 + $0x14] sm:$0xf]
      %v179 = vld [vmem:[%s165 + $0x18] sm:$0xf]
      %v180 = vld [vmem:[%s165 + $0x1c] sm:$0xf]
      %v181 = vld [vmem:[%s165 + $0x20] sm:$0xf]
      %v182 = vld [vmem:[%s165 + $0x24] sm:$0xf]
      %v183 = vld [vmem:[%s165 + $0x28] sm:$0xf]
      %v184 = vld [vmem:[%s165 + $0x2c] sm:$0xf]
      %v185 = vld [vmem:[%s165 + $0x30] sm:$0xf]
      %v186 = vld [vmem:[%s165 + $0x34] sm:$0xf]
      %v187 = vld [vmem:[%s165 + $0x38] sm:$0xf]
      %v188 = vld [vmem:[%s165 + $0x3c] sm:$0xf]
      %v189 = vunpack.c.l.bf16 %v173
      %v190 = vunpack.c.l.bf16 %v174
      %v191 = vunpack.c.l.bf16 %v175
      %v192 = vunpack.c.l.bf16 %v176
      %v193 = vunpack.c.l.bf16 %v177
      %v194 = vunpack.c.l.bf16 %v178
      %v195 = vunpack.c.l.bf16 %v179
      %v196 = vunpack.c.l.bf16 %v180
      %v197 = vunpack.c.l.bf16 %v181
      %v198 = vunpack.c.l.bf16 %v182
      %v199 = vunpack.c.l.bf16 %v183
      %v200 = vunpack.c.l.bf16 %v184
      %v201 = vunpack.c.l.bf16 %v185
      %v202 = vunpack.c.l.bf16 %v186
      %v203 = vunpack.c.l.bf16 %v187
      %v204 = vunpack.c.l.bf16 %v188
      %v206 = vlaneseq
      %v207 = vshrl.u32 %v206, 7
      %v208 = vsub.s32 0, %v207
      %v209 = vrot.slane %v171, %v208
      %v211 = vmul.f32 %v189, %v209
      %v212 = vmul.f32 %v190, %v209
      %v213 = vmul.f32 %v191, %v209
      %v214 = vmul.f32 %v192, %v209
      %v215 = vmul.f32 %v193, %v209
      %v216 = vmul.f32 %v194, %v209
      %v217 = vmul.f32 %v195, %v209
      %v218 = vmul.f32 %v196, %v209
      %v219 = vmul.f32 %v197, %v209
      %v220 = vmul.f32 %v198, %v209
      %v221 = vmul.f32 %v199, %v209
      %v222 = vmul.f32 %v200, %v209
      %v223 = vmul.f32 %v201, %v209
      %v224 = vmul.f32 %v202, %v209
      %v225 = vmul.f32 %v203, %v209
      %v226 = vmul.f32 %v204, %v209
      %v228 = vlaneseq
      %v229 = vshrl.u32 %v228, 7
      %v230 = vsub.s32 0, %v229
      %v231 = vrot.slane %v172, %v230
      %v233 = vadd.f32 %v211, %v231
      %v234 = vadd.f32 %v212, %v231
      %v235 = vadd.f32 %v213, %v231
      %v236 = vadd.f32 %v214, %v231
      %v237 = vadd.f32 %v215, %v231
      %v238 = vadd.f32 %v216, %v231
      %v239 = vadd.f32 %v217, %v231
      %v240 = vadd.f32 %v218, %v231
      %v241 = vadd.f32 %v219, %v231
      %v242 = vadd.f32 %v220, %v231
      %v243 = vadd.f32 %v221, %v231
      %v244 = vadd.f32 %v222, %v231
      %v245 = vadd.f32 %v223, %v231
      %v246 = vadd.f32 %v224, %v231
      %v247 = vadd.f32 %v225, %v231
      %v248 = vadd.f32 %v226, %v231
      %v249 = vmax.f32 %v233, 0.0
      %v250 = vmax.f32 %v234, 0.0
      %v251 = vmax.f32 %v235, 0.0
      %v252 = vmax.f32 %v236, 0.0
      %v253 = vmax.f32 %v237, 0.0
      %v254 = vmax.f32 %v238, 0.0
      %v255 = vmax.f32 %v239, 0.0
      %v256 = vmax.f32 %v240, 0.0
      %v257 = vmax.f32 %v241, 0.0
      %v258 = vmax.f32 %v242, 0.0
      %v259 = vmax.f32 %v243, 0.0
      %v260 = vmax.f32 %v244, 0.0
      %v261 = vmax.f32 %v245, 0.0
      %v262 = vmax.f32 %v246, 0.0
      %v263 = vmax.f32 %v247, 0.0
      %v264 = vmax.f32 %v248, 0.0
      %265 = vst [vmem:[%s170] sm:$0xff] %v249
      %266 = vst [vmem:[%s170 + $0x8] sm:$0xff] %v250
      %267 = vst [vmem:[%s170 + $0x10] sm:$0xff] %v251
      %268 = vst [vmem:[%s170 + $0x18] sm:$0xff] %v252
      %269 = vst [vmem:[%s170 + $0x20] sm:$0xff] %v253
      %270 = vst [vmem:[%s170 + $0x28] sm:$0xff] %v254
      %271 = vst [vmem:[%s170 + $0x30] sm:$0xff] %v255
      %272 = vst [vmem:[%s170 + $0x38] sm:$0xff] %v256
      %273 = vst [vmem:[%s170 + $0x40] sm:$0xff] %v257
      %274 = vst [vmem:[%s170 + $0x48] sm:$0xff] %v258
      %275 = vst [vmem:[%s170 + $0x50] sm:$0xff] %v259
      %276 = vst [vmem:[%s170 + $0x58] sm:$0xff] %v260
      %277 = vst [vmem:[%s170 + $0x60] sm:$0xff] %v261
      %278 = vst [vmem:[%s170 + $0x68] sm:$0xff] %v262
      %279 = vst [vmem:[%s170 + $0x70] sm:$0xff] %v263
      %280 = vst [vmem:[%s170 + $0x78] sm:$0xff] %v264
      %p281 = scmp.lt.s32.totalorder %s14, 3
      %s282 = scalar_select %p281, %s14, 3
      %s283 = smul.addr %s282, 16
      %s284 = smul.addr %s283, 8
      %s285 = scalar_lea.vmem %s3, %s284
      // Predicated region
      $region33: #{double_conv_forward.5} parent=31 // pred_check
        %p286 = pneg %p100
      $region34: #{double_conv_forward.5} parent=31 // pred_check_branch
        %288 = sbr.rel (%p286) target = $region36
      $region35: #{double_conv_forward.5} parent=31 // pred_region
        _
      $region36: #{double_conv_forward.5} parent=31 // pred_fallthru
        _
    $region32: #{double_conv_forward.5} parent=5 // pred_fallthru
      _
    %p289 = scmp.le.s32.totalorder 2, %s9
    // Predicated region
    $region37: #{double_conv_forward.5} parent=5 // pred_check
      %p290 = pneg %p289
    $region38: #{double_conv_forward.5} parent=5 // pred_check_branch
      %292 = sbr.rel (%p290) target = $region40
    $region39: #{double_conv_forward.5} parent=5 // pred_region
      %s293 = ssub.s32 %s9, 2
      // Predicated region
      $region41: #{double_conv_forward.5} parent=39 // pred_check
        %p294 = pneg %p106
      $region42: #{double_conv_forward.5} parent=39 // pred_check_branch
        %296 = sbr.rel (%p294) target = $region44
      $region43: #{double_conv_forward.5} parent=39 // pred_region
        %p297 = scmp.lt.s32.totalorder %s15, 3
        %s298 = scalar_select %p297, %s15, 3
        %s299 = smul.addr %s298, 16
        %s300 = smul.addr %s299, 8
        %s301 = scalar_lea.vmem %s3, %s300
      $region44: #{double_conv_forward.5} parent=39 // pred_fallthru
        _
    $region40: #{double_conv_forward.5} parent=5 // pred_fallthru
      _
  $region6: #{double_conv_forward.5} parent=0 // loop_footer
    %s13 = sadd.s32 1, %s9
  $region7: #{double_conv_forward.5} parent=0 // loop_footer_branch
    %8 = sbr.rel target = $region3
  $region8: #{double_conv_forward.5} parent=0 // loop_exit
    _

// kernel: double_conv_forward.3
$region0: #{double_conv_forward.3}
  #allocation0 [shape = 'u32[]', space=smem, size = 0x4, offset = 0x4, fixed_abs, tag = 'smem constant byte address 0x4 - core index']
  #allocation1 [shape = 'u32[144,128]{1,0:T(1,128)}', space=vmem, size = 0x12000, scoped, tag = 'internal scratch']
  %s0 = inlined_call_operand.vmem [shape: bf16[4,12,16,12], index: 0, kind: input, shape index: {}]
  %s1 = inlined_call_operand.vmem [shape: bf16[3,12,128], index: 1, kind: input, shape index: {}]
  %s2 = inlined_call_operand.vmem [shape: bf16[4,10,16,128], index: 2, kind: output, shape index: {0}]
  %s3 = inlined_call_operand.vmem [shape: f32[4,2,128], index: 3, kind: output, shape index: {1}]
  %4 = xla_tuple %s2, %s3
  %s5 = sld [smem:[#allocation0]]
  $region49: #{double_conv_forward.3} parent=0
    _
  %s7 = ssub.s32 1, %s5
  %s8 = scalar_select 0, %s7, %s5
  loop: start=0, step=1, limit=6
  $region2: #{double_conv_forward.3} parent=0 // loop_pre_header
    _
  $region3: #{double_conv_forward.3} parent=0 // loop_header
    %s10 = sphi 0, %s14
    %p11 = scmp.ge.s32.totalorder %s10, 6
    %s20 = sphi 0, %s22
    %s23 = sphi 0, %s20
    %s24 = sphi 0, %s23
    %s40 = sphi 0, %s24
    %s44 = sphi 0, %s44
    %s46 = sphi 0, %s44
    %s47 = sphi 0, %s46
    %s61 = sphi 0, %s47
    %s67 = sphi 0, %s69
    %s70 = sphi 0, %s67
    %s71 = sphi 0, %s70
    %s87 = sphi 0, %s71
    %s93 = sphi 0, %s95
    %s96 = sphi 0, %s93
    %s97 = sphi 0, %s96
    %s113 = sphi 0, %s97
  $region4: #{double_conv_forward.3} parent=0 // loop_header_branch
    %13 = sbr.rel (%p11) target = $region8
  $region5: #{double_conv_forward.3} parent=0 // loop_body
    %s15 = ssub.s32 %s10, 1
    %s16 = ssub.s32 %s10, 2
    %s17 = sadd.s32 %s10, 1
    %s18 = ssub.s32 %s10, %s17
    %p19 = scmp.eq.s32.totalorder %s18, 0
    %s21 = sadd.s32 %s20, 1
    %s22 = scalar_select %p19, %s20, %s21
    %p25 = pneg %p19
    %p26 = scmp.eq.s32.totalorder %s10, 3
    %p27 = por %p25, %p26
    %p28 = scmp.ne.s32.totalorder %s20, %s23
    %p29 = scmp.eq.s32.totalorder %s10, 0
    %p30 = por %p28, %p29
    %p31 = scmp.ne.s32.totalorder %s20, %s23
    %p32 = scmp.eq.s32.totalorder %s15, 3
    %p33 = por %p31, %p32
    %p34 = scmp.ne.s32.totalorder %s23, %s24
    %p35 = scmp.eq.s32.totalorder %s15, 0
    %p36 = por %p34, %p35
    %p37 = scmp.ne.s32.totalorder %s23, %s24
    %p38 = scmp.eq.s32.totalorder %s16, 3
    %p39 = por %p37, %p38
    %p41 = scmp.ne.s32.totalorder %s24, %s40
    %p42 = scmp.eq.s32.totalorder %s16, 0
    %p43 = por %p41, %p42
    %s45 = sadd.s32 %s44, 1
    %p48 = scmp.eq.s32.totalorder %s10, 3
    %p49 = scmp.ne.s32.totalorder %s44, %s46
    %p50 = scmp.eq.s32.totalorder %s10, 0
    %p51 = por %p49, %p50
    %p52 = scmp.ne.s32.totalorder %s44, %s46
    %p53 = scmp.eq.s32.totalorder %s15, 3
    %p54 = por %p52, %p53
    %p55 = scmp.ne.s32.totalorder %s46, %s47
    %p56 = scmp.eq.s32.totalorder %s15, 0
    %p57 = por %p55, %p56
    %p58 = scmp.ne.s32.totalorder %s46, %s47
    %p59 = scmp.eq.s32.totalorder %s16, 3
    %p60 = por %p58, %p59
    %p62 = scmp.ne.s32.totalorder %s47, %s61
    %p63 = scmp.eq.s32.totalorder %s16, 0
    %p64 = por %p62, %p63
    %s65 = ssub.s32 %s10, %s17
    %p66 = scmp.eq.s32.totalorder %s65, 0
    %s68 = sadd.s32 %s67, 1
    %s69 = scalar_select %p66, %s67, %s68
    %p72 = pneg %p66
    %p73 = scmp.eq.s32.totalorder %s10, 3
    %p74 = por %p72, %p73
    %p75 = scmp.ne.s32.totalorder %s67, %s70
    %p76 = scmp.eq.s32.totalorder %s10, 0
    %p77 = por %p75, %p76
    %p78 = scmp.ne.s32.totalorder %s67, %s70
    %p79 = scmp.eq.s32.totalorder %s15, 3
    %p80 = por %p78, %p79
    %p81 = scmp.ne.s32.totalorder %s70, %s71
    %p82 = scmp.eq.s32.totalorder %s15, 0
    %p83 = por %p81, %p82
    %p84 = scmp.ne.s32.totalorder %s70, %s71
    %p85 = scmp.eq.s32.totalorder %s16, 3
    %p86 = por %p84, %p85
    %p88 = scmp.ne.s32.totalorder %s71, %s87
    %p89 = scmp.eq.s32.totalorder %s16, 0
    %p90 = por %p88, %p89
    %s91 = ssub.s32 %s10, %s17
    %p92 = scmp.eq.s32.totalorder %s91, 0
    %s94 = sadd.s32 %s93, 1
    %s95 = scalar_select %p92, %s93, %s94
    %p98 = pneg %p92
    %p99 = scmp.eq.s32.totalorder %s10, 3
    %p100 = por %p98, %p99
    %p101 = scmp.ne.s32.totalorder %s93, %s96
    %p102 = scmp.eq.s32.totalorder %s10, 0
    %p103 = por %p101, %p102
    %p104 = scmp.ne.s32.totalorder %s93, %s96
    %p105 = scmp.eq.s32.totalorder %s15, 3
    %p106 = por %p104, %p105
    %p107 = scmp.ne.s32.totalorder %s96, %s97
    %p108 = scmp.eq.s32.totalorder %s15, 0
    %p109 = por %p107, %p108
    %p110 = scmp.ne.s32.totalorder %s96, %s97
    %p111 = scmp.eq.s32.totalorder %s16, 3
    %p112 = por %p110, %p111
    %p114 = scmp.ne.s32.totalorder %s97, %s113
    %p115 = scmp.eq.s32.totalorder %s16, 0
    %p116 = por %p114, %p115
    %p117 = scmp.le.s32.totalorder 1, %s10
    %p118 = scmp.lt.s32.totalorder %s10, 5
    %p119 = pnand %p117, %p118
    %p120 = pneg %p119
    // Predicated region
    $region9: #{double_conv_forward.3} parent=5 // pred_check
      _
    $region10: #{double_conv_forward.3} parent=5 // pred_check_branch
      %122 = sbr.rel (%p119) target = $region12
    $region11: #{double_conv_forward.3} parent=5 // pred_region
      %s123 = ssub.s32 %s10, 1
      // Predicated region
      $region13: #{double_conv_forward.3} parent=11 // pred_check
        %p124 = pneg %p57
      $region14: #{double_conv_forward.3} parent=11 // pred_check_branch
        %126 = sbr.rel (%p124) target = $region16
      $region15: #{double_conv_forward.3} parent=11 // pred_region
        _
      $region16: #{double_conv_forward.3} parent=11 // pred_fallthru
        _
    $region12: #{double_conv_forward.3} parent=5 // pred_fallthru
      _
    %p127 = scmp.lt.s32.totalorder %s10, 4
    // Predicated region
    $region17: #{double_conv_forward.3} parent=5 // pred_check
      %p128 = pneg %p127
    $region18: #{double_conv_forward.3} parent=5 // pred_check_branch
      %130 = sbr.rel (%p128) target = $region20
    $region19: #{double_conv_forward.3} parent=5 // pred_region
      // Predicated region
      $region21: #{double_conv_forward.3} parent=19 // pred_check
        %p131 = pneg %p30
      $region22: #{double_conv_forward.3} parent=19 // pred_check_branch
        %133 = sbr.rel (%p131) target = $region24
      $region23: #{double_conv_forward.3} parent=19 // pred_region
        %p134 = scmp.lt.s32.totalorder %s10, 3
        %s135 = scalar_select %p134, %s10, 3
        %s136 = smul.addr %s135, 24
        %s137 = smul.addr %s136, 4
        %s138 = scalar_lea.vmem %s0, %s137
      $region24: #{double_conv_forward.3} parent=19 // pred_fallthru
        _
    $region20: #{double_conv_forward.3} parent=5 // pred_fallthru
      _
    %p139 = scmp.le.s32.totalorder 1, %s10
    %p140 = scmp.lt.s32.totalorder %s10, 5
    %p141 = pnand %p139, %p140
    %p142 = pneg %p141
    // Predicated region
    $region25: #{double_conv_forward.3} parent=5 // pred_check
      _
    $region26: #{double_conv_forward.3} parent=5 // pred_check_branch
      %144 = sbr.rel (%p141) target = $region28
    $region27: #{double_conv_forward.3} parent=5 // pred_region
      %s145 = ssub.s32 %s10, 1
      %p146 = scmp.lt.s32.totalorder %s15, 3
      %s147 = scalar_select %p146, %s15, 3
      %s148 = smul.addr %s147, 24
      %s149 = smul.addr %s148, 4
      %s150 = scalar_lea.vmem %s0, %s149
      %p151 = pneg %p36
      %p152 = pneg %p33
      %p153 = pneg %p57
      %p154 = pneg %p54
      %p155 = pneg %p83
      %p156 = pneg %p80
      %p157 = scmp.lt.s32.totalorder %s15, 3
      %s158 = scalar_select %p157, %s15, 3
      %s159 = smul.addr %s158, 20
      %s160 = smul.addr %s159, 4
      %s161 = scalar_lea.vmem %s2, %s160
      %p162 = pneg %p109
      %p163 = pneg %p106
      %p164 = scmp.lt.s32.totalorder %s15, 3
      %s165 = scalar_select %p164, %s15, 3
      %s166 = smul.addr %s165, 2
      %s167 = scalar_lea.vmem %s3, %s166
      %p168 = scmp.lt.s32.totalorder %s15, 3
      %s169 = scalar_select %p168, %s15, 3
      %s170 = smul.addr %s169, 24
      %s171 = smul.addr %s170, 4
      %s172 = scalar_lea.vmem %s0, %s171
      %p173 = scmp.lt.s32.totalorder %s15, 3
      %s174 = scalar_select %p173, %s15, 3
      %s175 = smul.addr %s174, 20
      %s176 = smul.addr %s175, 4
      %s177 = scalar_lea.vmem %s2, %s176
      %p178 = scmp.lt.s32.totalorder %s15, 3
      %s179 = scalar_select %p178, %s15, 3
      %s180 = smul.addr %s179, 2
      %s181 = scalar_lea.vmem %s3, %s180
      %v183 = vld [vmem:[%s172] sm:$0xf]
      %v184 = vld [vmem:[%s172 + $0x4] sm:$0xf]
      %v185 = vld [vmem:[%s172 + $0x8] sm:$0xf]
      %v186 = vld [vmem:[%s172 + $0xc] sm:$0xf]
      %v187 = vld [vmem:[%s172 + $0x10] sm:$0xf]
      %v188 = vld [vmem:[%s172 + $0x14] sm:$0xf]
      %v189 = vld [vmem:[%s172 + $0x18] sm:$0xf]
      %v190 = vld [vmem:[%s172 + $0x1c] sm:$0xf]
      %v191 = vld [vmem:[%s172 + $0x20] sm:$0xf]
      %v192 = vld [vmem:[%s172 + $0x24] sm:$0xf]
      %v193 = vld [vmem:[%s172 + $0x28] sm:$0xf]
      %v194 = vld [vmem:[%s172 + $0x2c] sm:$0xf]
      %v195 = vld [vmem:[%s172 + $0x30] sm:$0xf]
      %v196 = vld [vmem:[%s172 + $0x34] sm:$0xf]
      %v197 = vld [vmem:[%s172 + $0x38] sm:$0xf]
      %v198 = vld [vmem:[%s172 + $0x3c] sm:$0xf]
      %v199 = vld [vmem:[%s172 + $0x40] sm:$0xf]
      %v200 = vld [vmem:[%s172 + $0x44] sm:$0xf]
      %v201 = vld [vmem:[%s172 + $0x48] sm:$0xf]
      %v202 = vld [vmem:[%s172 + $0x4c] sm:$0xf]
      %v203 = vld [vmem:[%s1] sm:$0xf]
      %v204 = vld [vmem:[%s1 + $0x4] sm:$0x3]
      %s205 = scalar_lea.vmem %s172, 8
      %v206 = vld [vmem:[%s205] sm:$0xf]
      %v207 = vld [vmem:[%s205 + $0x4] sm:$0xf]
      %v208 = vld [vmem:[%s205 + $0x8] sm:$0xf]
      %v209 = vld [vmem:[%s205 + $0xc] sm:$0xf]
      %v210 = vld [vmem:[%s205 + $0x10] sm:$0xf]
      %v211 = vld [vmem:[%s205 + $0x14] sm:$0xf]
      %v212 = vld [vmem:[%s205 + $0x18] sm:$0xf]
      %v213 = vld [vmem:[%s205 + $0x1c] sm:$0xf]
      %v214 = vld [vmem:[%s205 + $0x20] sm:$0xf]
      %v215 = vld [vmem:[%s205 + $0x24] sm:$0xf]
      %v216 = vld [vmem:[%s205 + $0x28] sm:$0xf]
      %v217 = vld [vmem:[%s205 + $0x2c] sm:$0xf]
      %v218 = vld [vmem:[%s205 + $0x30] sm:$0xf]
      %v219 = vld [vmem:[%s205 + $0x34] sm:$0xf]
      %v220 = vld [vmem:[%s205 + $0x38] sm:$0xf]
      %v221 = vld [vmem:[%s205 + $0x3c] sm:$0xf]
      %v222 = vld [vmem:[%s205 + $0x40] sm:$0xf]
      %v223 = vld [vmem:[%s205 + $0x44] sm:$0xf]
      %v224 = vld [vmem:[%s205 + $0x48] sm:$0xf]
      %v225 = vld [vmem:[%s205 + $0x4c] sm:$0xf]
      %s226 = scalar_lea.vmem %s1, 8
      %v227 = vld [vmem:[%s226] sm:$0xf]
      %v228 = vld [vmem:[%s226 + $0x4] sm:$0x3]
      %v249 = vunpack.c.l.b16 %v206
      %v250 = vunpack.c.l.b16 %v207
      %v251 = vunpack.c.l.b16 %v208
      %v252 = vunpack.c.l.b16 %v209
      %v253 = vunpack.c.l.b16 %v210
      %v254 = vunpack.c.l.b16 %v211
      %v255 = vunpack.c.l.b16 %v212
      %v256 = vunpack.c.l.b16 %v213
      %v257 = vunpack.c.l.b16 %v214
      %v258 = vunpack.c.l.b16 %v215
      %v259 = vunpack.c.l.b16 %v216
      %v260 = vunpack.c.l.b16 %v217
      %v261 = vunpack.c.l.b16 %v218
      %v262 = vunpack.c.l.b16 %v219
      %v263 = vunpack.c.l.b16 %v220
      %v264 = vunpack.c.l.b16 %v221
      %v265 = vunpack.c.l.b16 %v222
      %v266 = vunpack.c.l.b16 %v223
      %v267 = vunpack.c.l.b16 %v224
      %v268 = vunpack.c.l.b16 %v225
      %v269 = vpack.c.b16 %v250, %v249
      %v270 = vpack.c.b16 %v252, %v251
      %v271 = vpack.c.b16 %v254, %v253
      %v272 = vpack.c.b16 %v256, %v255
      %v273 = vpack.c.b16 %v258, %v257
      %v274 = vpack.c.b16 %v260, %v259
      %v275 = vpack.c.b16 %v262, %v261
      %v276 = vpack.c.b16 %v264, %v263
      %v277 = vpack.c.b16 %v266, %v265
      %v278 = vpack.c.b16 %v268, %v267
      %v281 = vunpack.c.l.b16 %v227
      %v282 = vunpack.c.l.b16 %v228
      %v283 = vpack.c.b16 %v282, %v281
      %vm284 = vcmask 97280
      %v286 = vsel %vm284, %v269, 0
      %v289 = vsel %vm284, %v270, 0
      %v292 = vsel %vm284, %v271, 0
      %v295 = vsel %vm284, %v272, 0
      %v298 = vsel %vm284, %v273, 0
      %v301 = vsel %vm284, %v274, 0
      %v304 = vsel %vm284, %v275, 0
      %v307 = vsel %vm284, %v276, 0
      %v310 = vsel %vm284, %v277, 0
      %v313 = vsel %vm284, %v278, 0
      %vm315 = vcmask 1045504
      %v317 = vsel %vm315, %v283, 0
      %319 = vmatprep.subr.bf16.mxu0 0
      %320 = vmatpush1.bf16.msra.mxu0 %v317
      %321 = vmatprep.subr.bf16.mxu0 0
      %322 = vmatpush1.bf16.msra.mxu0 0
      %323 = vmatprep.subr.bf16.mxu0 0
      %324 = vmatpush1.bf16.msra.mxu0 0
      %325 = vmatprep.subr.bf16.mxu0 0
      %326 = vmatpush1.bf16.msra.mxu0 0
      %327 = vmatprep.subr.bf16.mxu0 0
      %328 = vmatpush1.bf16.msra.mxu0 0
      %329 = vmatprep.subr.bf16.mxu0 0
      %330 = vmatpush1.bf16.msra.mxu0 0
      %331 = vmatprep.subr.bf16.mxu0 0
      %332 = vmatpush1.bf16.msra.mxu0 0
      %333 = vmatprep.subr.bf16.mxu0 0
      %334 = vmatpush1.bf16.msra.mxu0 0
      %335 = vmatprep.subr.bf16.mxu0 0
      %336 = vmatpush1.bf16.msra.mxu0 0
      %337 = vmatprep.subr.bf16.mxu0 0
      %338 = vmatpush1.bf16.msra.mxu0 0
      %339 = vmatprep.subr.bf16.mxu0 0
      %340 = vmatpush1.bf16.msra.mxu0 0
      %341 = vmatprep.subr.bf16.mxu0 0
      %342 = vmatpush1.bf16.msra.mxu0 0
      %343 = vmatprep.subr.bf16.mxu0 0
      %344 = vmatpush1.bf16.msra.mxu0 0
      %345 = vmatprep.subr.bf16.mxu0 0
      %346 = vmatpush1.bf16.msra.mxu0 0
      %347 = vmatprep.subr.bf16.mxu0 0
      %348 = vmatpush1.bf16.msra.mxu0 0
      %349 = vmatprep.subr.bf16.mxu0 0
      %350 = vmatpush1.bf16.msra.mxu0 0
      %351 = vmatprep.mubr.bf16.mxu0 0
      %352 = vmatmul.mubr.bf16.gmra.mrb[0].mxu0 %v286
      %v353 = vpop.f32.mrb[0].mxu0
      %v354 = vadd.f32 0.0, %v353
      %v355 = vpop.f32.mrb[0].mxu0
      %v356 = vpop.f32.mrb[0].mxu0
      %v357 = vadd.f32 0.0, %v356
      %v358 = vpop.f32.mrb[0].mxu0
      %359 = vmatprep.mubr.bf16.mxu0 0
      %360 = vmatmul.mubr.bf16.gmra.mrb[0].mxu0 %v289
      %v361 = vpop.f32.mrb[0].mxu0
      %v362 = vadd.f32 0.0, %v361
      %v363 = vpop.f32.mrb[0].mxu0
      %v364 = vpop.f32.mrb[0].mxu0
      %v365 = vadd.f32 0.0, %v364
      %v366 = vpop.f32.mrb[0].mxu0
      %367 = vmatprep.mubr.bf16.mxu0 0
      %368 = vmatmul.mubr.bf16.gmra.mrb[0].mxu0 %v292
      %v369 = vpop.f32.mrb[0].mxu0
      %v370 = vadd.f32 0.0, %v369
      %v371 = vpop.f32.mrb[0].mxu0
      %v372 = vpop.f32.mrb[0].mxu0
      %v373 = vadd.f32 0.0, %v372
      %v374 = vpop.f32.mrb[0].mxu0
      %375 = vmatprep.mubr.bf16.mxu0 0
      %376 = vmatmul.mubr.bf16.gmra.mrb[0].mxu0 %v295
      %v377 = vpop.f32.mrb[0].mxu0
      %v378 = vadd.f32 0.0, %v377
      %v379 = vpop.f32.mrb[0].mxu0
      %v380 = vpop.f32.mrb[0].mxu0
      %v381 = vadd.f32 0.0, %v380
      %v382 = vpop.f32.mrb[0].mxu0
      %383 = vmatprep.mubr.bf16.mxu0 0
      %384 = vmatmul.mubr.bf16.gmra.mrb[0].mxu0 %v298
      %v385 = vpop.f32.mrb[0].mxu0
      %v386 = vadd.f32 0.0, %v385
      %v387 = vpop.f32.mrb[0].mxu0
      %v388 = vpop.f32.mrb[0].mxu0
      %v389 = vadd.f32 0.0, %v388
      %v390 = vpop.f32.mrb[0].mxu0
      %391 = vmatprep.mubr.bf16.mxu0 0
      %392 = vmatmul.mubr.bf16.gmra.mrb[0].mxu0 %v301
      %v393 = vpop.f32.mrb[0].mxu0
      %v394 = vadd.f32 0.0, %v393
      %v395 = vpop.f32.mrb[0].mxu0
      %v396 = vpop.f32.mrb[0].mxu0
      %v397 = vadd.f32 0.0, %v396
      %v398 = vpop.f32.mrb[0].mxu0
      %399 = vmatprep.mubr.bf16.mxu0 0
      %400 = vmatmul.mubr.bf16.gmra.mrb[0].mxu0 %v304
      %v401 = vpop.f32.mrb[0].mxu0
      %v402 = vadd.f32 0.0, %v401
      %v403 = vpop.f32.mrb[0].mxu0
      %v404 = vpop.f32.mrb[0].mxu0
      %v405 = vadd.f32 0.0, %v404
      %v406 = vpop.f32.mrb[0].mxu0
      %407 = vmatprep.mubr.bf16.mxu0 0
      %408 = vmatmul.mubr.bf16.gmra.mrb[0].mxu0 %v307
      %v409 = vpop.f32.mrb[0].mxu0
      %v410 = vadd.f32 0.0, %v409
      %v411 = vpop.f32.mrb[0].mxu0
      %v412 = vpop.f32.mrb[0].mxu0
      %v413 = vadd.f32 0.0, %v412
      %v414 = vpop.f32.mrb[0].mxu0
      %415 = vmatprep.mubr.bf16.mxu0 0
      %416 = vmatmul.mubr.bf16.gmra.mrb[0].mxu0 %v310
      %v417 = vpop.f32.mrb[0].mxu0
      %v418 = vadd.f32 0.0, %v417
      %v419 = vpop.f32.mrb[0].mxu0
      %v420 = vpop.f32.mrb[0].mxu0
      %v421 = vadd.f32 0.0, %v420
      %v422 = vpop.f32.mrb[0].mxu0
      %423 = vmatprep.mubr.bf16.mxu0 0
      %424 = vmatmul.mubr.bf16.gmra.mrb[0].mxu0 %v313
      %v425 = vpop.f32.mrb[0].mxu0
      %v426 = vadd.f32 0.0, %v425
      %v427 = vpop.f32.mrb[0].mxu0
      %v428 = vpop.f32.mrb[0].mxu0
      %v429 = vadd.f32 0.0, %v428
      %v430 = vpop.f32.mrb[0].mxu0
      %431 = vdwg.mxu0
      %v452 = vunpack.c.l.b16 %v183
      %v453 = vunpack.c.l.b16 %v184
      %v454 = vunpack.c.l.b16 %v185
      %v455 = vunpack.c.l.b16 %v186
      %v456 = vunpack.c.l.b16 %v187
      %v457 = vunpack.c.l.b16 %v188
      %v458 = vunpack.c.l.b16 %v189
      %v459 = vunpack.c.l.b16 %v190
      %v460 = vunpack.c.l.b16 %v191
      %v461 = vunpack.c.l.b16 %v192
      %v462 = vunpack.c.l.b16 %v193
      %v463 = vunpack.c.l.b16 %v194
      %v464 = vunpack.c.l.b16 %v195
      %v465 = vunpack.c.l.b16 %v196
      %v466 = vunpack.c.l.b16 %v197
      %v467 = vunpack.c.l.b16 %v198
      %v468 = vunpack.c.l.b16 %v199
      %v469 = vunpack.c.l.b16 %v200
      %v470 = vunpack.c.l.b16 %v201
      %v471 = vunpack.c.l.b16 %v202
      %v472 = vpack.c.b16 %v453, %v452
      %v473 = vpack.c.b16 %v455, %v454
      %v474 = vpack.c.b16 %v457, %v456
      %v475 = vpack.c.b16 %v459, %v458
      %v476 = vpack.c.b16 %v461, %v460
      %v477 = vpack.c.b16 %v463, %v462
      %v478 = vpack.c.b16 %v465, %v464
      %v479 = vpack.c.b16 %v467, %v466
      %v480 = vpack.c.b16 %v469, %v468
      %v481 = vpack.c.b16 %v471, %v470
      %v484 = vunpack.c.l.b16 %v203
      %v485 = vunpack.c.l.b16 %v204
      %v486 = vpack.c.b16 %v485, %v484
      %v488 = vsel %vm284, %v472, 0
      %v491 = vsel %vm284, %v473, 0
      %v494 = vsel %vm284, %v474, 0
      %v497 = vsel %vm284, %v475, 0
      %v500 = vsel %vm284, %v476, 0
      %v503 = vsel %vm284, %v477, 0
      %v506 = vsel %vm284, %v478, 0
      %v509 = vsel %vm284, %v479, 0
      %v512 = vsel %vm284, %v480, 0
      %v515 = vsel %vm284, %v481, 0
      %v518 = vsel %vm315, %v486, 0
      %520 = vmatprep.subr.bf16.mxu0 0
      %521 = vmatpush1.bf16.msra.mxu0 %v518
      %522 = vmatprep.subr.bf16.mxu0 0
      %523 = vmatpush1.bf16.msra.mxu0 0
      %524 = vmatprep.subr.bf16.mxu0 0
      %525 = vmatpush1.bf16.msra.mxu0 0
      %526 = vmatprep.subr.bf16.mxu0 0
      %527 = vmatpush1.bf16.msra.mxu0 0
      %528 = vmatprep.subr.bf16.mxu0 0
      %529 = vmatpush1.bf16.msra.mxu0 0
      %530 = vmatprep.subr.bf16.mxu0 0
      %531 = vmatpush1.bf16.msra.mxu0 0
      %532 = vmatprep.subr.bf16.mxu0 0
      %533 = vmatpush1.bf16.msra.mxu0 0
      %534 = vmatprep.subr.bf16.mxu0 0
      %535 = vmatpush1.bf16.msra.mxu0 0
      %536 = vmatprep.subr.bf16.mxu0 0
      %537 = vmatpush1.bf16.msra.mxu0 0
      %538 = vmatprep.subr.bf16.mxu0 0
      %539 = vmatpush1.bf16.msra.mxu0 0
      %540 = vmatprep.subr.bf16.mxu0 0
      %541 = vmatpush1.bf16.msra.mxu0 0
      %542 = vmatprep.subr.bf16.mxu0 0
      %543 = vmatpush1.bf16.msra.mxu0 0
      %544 = vmatprep.subr.bf16.mxu0 0
      %545 = vmatpush1.bf16.msra.mxu0 0
      %546 = vmatprep.subr.bf16.mxu0 0
      %547 = vmatpush1.bf16.msra.mxu0 0
      %548 = vmatprep.subr.bf16.mxu0 0
      %549 = vmatpush1.bf16.msra.mxu0 0
      %550 = vmatprep.subr.bf16.mxu0 0
      %551 = vmatpush1.bf16.msra.mxu0 0
      %552 = vmatprep.mubr.bf16.mxu0 0
      %553 = vmatmul.mubr.bf16.gmra.mrb[0].mxu0 %v488
      %v554 = vpop.f32.mrb[0].mxu0
      %v555 = vadd.f32 %v354, %v554
      %v556 = vpop.f32.mrb[0].mxu0
      %v557 = vpop.f32.mrb[0].mxu0
      %v558 = vadd.f32 %v357, %v557
      %v559 = vpop.f32.mrb[0].mxu0
      %560 = vmatprep.mubr.bf16.mxu0 0
      %561 = vmatmul.mubr.bf16.gmra.mrb[0].mxu0 %v491
      %v562 = vpop.f32.mrb[0].mxu0
      %v563 = vadd.f32 %v362, %v562
      %v564 = vpop.f32.mrb[0].mxu0
      %v565 = vpop.f32.mrb[0].mxu0
      %v566 = vadd.f32 %v365, %v565
      %v567 = vpop.f32.mrb[0].mxu0
      %568 = vmatprep.mubr.bf16.mxu0 0
      %569 = vmatmul.mubr.bf16.gmra.mrb[0].mxu0 %v494
      %v570 = vpop.f32.mrb[0].mxu0
      %v571 = vadd.f32 %v370, %v570
      %v572 = vpop.f32.mrb[0].mxu0
      %v573 = vpop.f32.mrb[0].mxu0
      %v574 = vadd.f32 %v373, %v573
      %v575 = vpop.f32.mrb[0].mxu0
      %576 = vmatprep.mubr.bf16.mxu0 0
      %577 = vmatmul.mubr.bf16.gmra.mrb[0].mxu0 %v497
      %v578 = vpop.f32.mrb[0].mxu0
      %v579 = vadd.f32 %v378, %v578
      %v580 = vpop.f32.mrb[0].mxu0
      %v581 = vpop.f32.mrb[0].mxu0
      %v582 = vadd.f32 %v381, %v581
      %v583 = vpop.f32.mrb[0].mxu0
      %584 = vmatprep.mubr.bf16.mxu0 0
      %585 = vmatmul.mubr.bf16.gmra.mrb[0].mxu0 %v500
      %v586 = vpop.f32.mrb[0].mxu0
      %v587 = vadd.f32 %v386, %v586
      %v588 = vpop.f32.mrb[0].mxu0
      %v589 = vpop.f32.mrb[0].mxu0
      %v590 = vadd.f32 %v389, %v589
      %v591 = vpop.f32.mrb[0].mxu0
      %592 = vmatprep.mubr.bf16.mxu0 0
      %593 = vmatmul.mubr.bf16.gmra.mrb[0].mxu0 %v503
      %v594 = vpop.f32.mrb[0].mxu0
      %v595 = vadd.f32 %v394, %v594
      %v596 = vpop.f32.mrb[0].mxu0
      %v597 = vpop.f32.mrb[0].mxu0
      %v598 = vadd.f32 %v397, %v597
      %v599 = vpop.f32.mrb[0].mxu0
      %600 = vmatprep.mubr.bf16.mxu0 0
      %601 = vmatmul.mubr.bf16.gmra.mrb[0].mxu0 %v506
      %v602 = vpop.f32.mrb[0].mxu0
      %v603 = vadd.f32 %v402, %v602
      %v604 = vpop.f32.mrb[0].mxu0
      %v605 = vpop.f32.mrb[0].mxu0
      %v606 = vadd.f32 %v405, %v605
      %v607 = vpop.f32.mrb[0].mxu0
      %608 = vmatprep.mubr.bf16.mxu0 0
      %609 = vmatmul.mubr.bf16.gmra.mrb[0].mxu0 %v509
      %v610 = vpop.f32.mrb[0].mxu0
      %v611 = vadd.f32 %v410, %v610
      %v612 = vpop.f32.mrb[0].mxu0
      %v613 = vpop.f32.mrb[0].mxu0
      %v614 = vadd.f32 %v413, %v613
      %v615 = vpop.f32.mrb[0].mxu0
      %616 = vmatprep.mubr.bf16.mxu0 0
      %617 = vmatmul.mubr.bf16.gmra.mrb[0].mxu0 %v512
      %v618 = vpop.f32.mrb[0].mxu0
      %v619 = vadd.f32 %v418, %v618
      %v620 = vpop.f32.mrb[0].mxu0
      %v621 = vpop.f32.mrb[0].mxu0
      %v622 = vadd.f32 %v421, %v621
      %v623 = vpop.f32.mrb[0].mxu0
      %624 = vmatprep.mubr.bf16.mxu0 0
      %625 = vmatmul.mubr.bf16.gmra.mrb[0].mxu0 %v515
      %v626 = vpop.f32.mrb[0].mxu0
      %v627 = vadd.f32 %v426, %v626
      %v628 = vpop.f32.mrb[0].mxu0
      %v629 = vpop.f32.mrb[0].mxu0
      %v630 = vadd.f32 %v429, %v629
      %v631 = vpop.f32.mrb[0].mxu0
      %632 = vdwg.mxu0
      %s633 = scalar_lea.vmem %s172, 16
      %v634 = vld [vmem:[%s633] sm:$0xf]
      %v635 = vld [vmem:[%s633 + $0x4] sm:$0xf]
      %v636 = vld [vmem:[%s633 + $0x8] sm:$0xf]
      %v637 = vld [vmem:[%s633 + $0xc] sm:$0xf]
      %v638 = vld [vmem:[%s633 + $0x10] sm:$0xf]
      %v639 = vld [vmem:[%s633 + $0x14] sm:$0xf]
      %v640 = vld [vmem:[%s633 + $0x18] sm:$0xf]
      %v641 = vld [vmem:[%s633 + $0x1c] sm:$0xf]
      %v642 = vld [vmem:[%s633 + $0x20] sm:$0xf]
      %v643 = vld [vmem:[%s633 + $0x24] sm:$0xf]
      %v644 = vld [vmem:[%s633 + $0x28] sm:$0xf]
      %v645 = vld [vmem:[%s633 + $0x2c] sm:$0xf]
      %v646 = vld [vmem:[%s633 + $0x30] sm:$0xf]
      %v647 = vld [vmem:[%s633 + $0x34] sm:$0xf]
      %v648 = vld [vmem:[%s633 + $0x38] sm:$0xf]
      %v649 = vld [vmem:[%s633 + $0x3c] sm:$0xf]
      %v650 = vld [vmem:[%s633 + $0x40] sm:$0xf]
      %v651 = vld [vmem:[%s633 + $0x44] sm:$0xf]
      %v652 = vld [vmem:[%s633 + $0x48] sm:$0xf]
      %v653 = vld [vmem:[%s633 + $0x4c] sm:$0xf]
      %s654 = scalar_lea.vmem %s1, 16
      %v655 = vld [vmem:[%s654] sm:$0xf]
      %v656 = vld [vmem:[%s654 + $0x4] sm:$0x3]
      %v677 = vunpack.c.l.b16 %v634
      %v678 = vunpack.c.l.b16 %v635
      %v679 = vunpack.c.l.b16 %v636
      %v680 = vunpack.c.l.b16 %v637
      %v681 = vunpack.c.l.b16 %v638
      %v682 = vunpack.c.l.b16 %v639
      %v683 = vunpack.c.l.b16 %v640
      %v684 = vunpack.c.l.b16 %v641
      %v685 = vunpack.c.l.b16 %v642
      %v686 = vunpack.c.l.b16 %v643
      %v687 = vunpack.c.l.b16 %v644
      %v688 = vunpack.c.l.b16 %v645
      %v689 = vunpack.c.l.b16 %v646
      %v690 = vunpack.c.l.b16 %v647
      %v691 = vunpack.c.l.b16 %v648
      %v692 = vunpack.c.l.b16 %v649
      %v693 = vunpack.c.l.b16 %v650
      %v694 = vunpack.c.l.b16 %v651
      %v695 = vunpack.c.l.b16 %v652
      %v696 = vunpack.c.l.b16 %v653
      %v697 = vpack.c.b16 %v678, %v677
      %v698 = vpack.c.b16 %v680, %v679
      %v699 = vpack.c.b16 %v682, %v681
      %v700 = vpack.c.b16 %v684, %v683
      %v701 = vpack.c.b16 %v686, %v685
      %v702 = vpack.c.b16 %v688, %v687
      %v703 = vpack.c.b16 %v690, %v689
      %v704 = vpack.c.b16 %v692, %v691
      %v705 = vpack.c.b16 %v694, %v693
      %v706 = vpack.c.b16 %v696, %v695
      %v709 = vunpack.c.l.b16 %v655
      %v710 = vunpack.c.l.b16 %v656
      %v711 = vpack.c.b16 %v710, %v709
      %v713 = vsel %vm284, %v697, 0
      %v716 = vsel %vm284, %v698, 0
      %v719 = vsel %vm284, %v699, 0
      %v722 = vsel %vm284, %v700, 0
      %v725 = vsel %vm284, %v701, 0
      %v728 = vsel %vm284, %v702, 0
      %v731 = vsel %vm284, %v703, 0
      %v734 = vsel %vm284, %v704, 0
      %v737 = vsel %vm284, %v705, 0
      %v740 = vsel %vm284, %v706, 0
      %v743 = vsel %vm315, %v711, 0
      %745 = vmatprep.subr.bf16.mxu0 0
      %746 = vmatpush1.bf16.msra.mxu0 %v743
      %747 = vmatprep.subr.bf16.mxu0 0
      %748 = vmatpush1.bf16.msra.mxu0 0
      %749 = vmatprep.subr.bf16.mxu0 0
      %750 = vmatpush1.bf16.msra.mxu0 0
      %751 = vmatprep.subr.bf16.mxu0 0
      %752 = vmatpush1.bf16.msra.mxu0 0
      %753 = vmatprep.subr.bf16.mxu0 0
      %754 = vmatpush1.bf16.msra.mxu0 0
      %755 = vmatprep.subr.bf16.mxu0 0
      %756 = vmatpush1.bf16.msra.mxu0 0
      %757 = vmatprep.subr.bf16.mxu0 0
      %758 = vmatpush1.bf16.msra.mxu0 0
      %759 = vmatprep.subr.bf16.mxu0 0
      %760 = vmatpush1.bf16.msra.mxu0 0
      %761 = vmatprep.subr.bf16.mxu0 0
      %762 = vmatpush1.bf16.msra.mxu0 0
      %763 = vmatprep.subr.bf16.mxu0 0
      %764 = vmatpush1.bf16.msra.mxu0 0
      %765 = vmatprep.subr.bf16.mxu0 0
      %766 = vmatpush1.bf16.msra.mxu0 0
      %767 = vmatprep.subr.bf16.mxu0 0
      %768 = vmatpush1.bf16.msra.mxu0 0
      %769 = vmatprep.subr.bf16.mxu0 0
      %770 = vmatpush1.bf16.msra.mxu0 0
      %771 = vmatprep.subr.bf16.mxu0 0
      %772 = vmatpush1.bf16.msra.mxu0 0
      %773 = vmatprep.subr.bf16.mxu0 0
      %774 = vmatpush1.bf16.msra.mxu0 0
      %775 = vmatprep.subr.bf16.mxu0 0
      %776 = vmatpush1.bf16.msra.mxu0 0
      %777 = vmatprep.mubr.bf16.mxu0 0
      %778 = vmatmul.mubr.bf16.gmra.mrb[0].mxu0 %v713
      %v779 = vpop.f32.mrb[0].mxu0
      %v780 = vadd.f32 0.0, %v779
      %v781 = vpop.f32.mrb[0].mxu0
      %v782 = vpop.f32.mrb[0].mxu0
      %v783 = vadd.f32 0.0, %v782
      %v784 = vpop.f32.mrb[0].mxu0
      %785 = vmatprep.mubr.bf16.mxu0 0
      %786 = vmatmul.mubr.bf16.gmra.mrb[0].mxu0 %v716
      %v787 = vpop.f32.mrb[0].mxu0
      %v788 = vadd.f32 0.0, %v787
      %v789 = vpop.f32.mrb[0].mxu0
      %v790 = vpop.f32.mrb[0].mxu0
      %v791 = vadd.f32 0.0, %v790
      %v792 = vpop.f32.mrb[0].mxu0
      %793 = vmatprep.mubr.bf16.mxu0 0
      %794 = vmatmul.mubr.bf16.gmra.mrb[0].mxu0 %v719
      %v795 = vpop.f32.mrb[0].mxu0
      %v796 = vadd.f32 0.0, %v795
      %v797 = vpop.f32.mrb[0].mxu0
      %v798 = vpop.f32.mrb[0].mxu0
      %v799 = vadd.f32 0.0, %v798
      %v800 = vpop.f32.mrb[0].mxu0
      %801 = vmatprep.mubr.bf16.mxu0 0
      %802 = vmatmul.mubr.bf16.gmra.mrb[0].mxu0 %v722
      %v803 = vpop.f32.mrb[0].mxu0
      %v804 = vadd.f32 0.0, %v803
      %v805 = vpop.f32.mrb[0].mxu0
      %v806 = vpop.f32.mrb[0].mxu0
      %v807 = vadd.f32 0.0, %v806
      %v808 = vpop.f32.mrb[0].mxu0
      %809 = vmatprep.mubr.bf16.mxu0 0
      %810 = vmatmul.mubr.bf16.gmra.mrb[0].mxu0 %v725
      %v811 = vpop.f32.mrb[0].mxu0
      %v812 = vadd.f32 0.0, %v811
      %v813 = vpop.f32.mrb[0].mxu0
      %v814 = vpop.f32.mrb[0].mxu0
      %v815 = vadd.f32 0.0, %v814
      %v816 = vpop.f32.mrb[0].mxu0
      %817 = vmatprep.mubr.bf16.mxu0 0
      %818 = vmatmul.mubr.bf16.gmra.mrb[0].mxu0 %v728
      %v819 = vpop.f32.mrb[0].mxu0
      %v820 = vadd.f32 0.0, %v819
      %v821 = vpop.f32.mrb[0].mxu0
      %v822 = vpop.f32.mrb[0].mxu0
      %v823 = vadd.f32 0.0, %v822
      %v824 = vpop.f32.mrb[0].mxu0
      %825 = vmatprep.mubr.bf16.mxu0 0
      %826 = vmatmul.mubr.bf16.gmra.mrb[0].mxu0 %v731
      %v827 = vpop.f32.mrb[0].mxu0
      %v828 = vadd.f32 0.0, %v827
      %v829 = vpop.f32.mrb[0].mxu0
      %v830 = vpop.f32.mrb[0].mxu0
      %v831 = vadd.f32 0.0, %v830
      %v832 = vpop.f32.mrb[0].mxu0
      %833 = vmatprep.mubr.bf16.mxu0 0
      %834 = vmatmul.mubr.bf16.gmra.mrb[0].mxu0 %v734
      %v835 = vpop.f32.mrb[0].mxu0
      %v836 = vadd.f32 0.0, %v835
      %v837 = vpop.f32.mrb[0].mxu0
      %v838 = vpop.f32.mrb[0].mxu0
      %v839 = vadd.f32 0.0, %v838
      %v840 = vpop.f32.mrb[0].mxu0
      %841 = vmatprep.mubr.bf16.mxu0 0
      %842 = vmatmul.mubr.bf16.gmra.mrb[0].mxu0 %v737
      %v843 = vpop.f32.mrb[0].mxu0
      %v844 = vadd.f32 0.0, %v843
      %v845 = vpop.f32.mrb[0].mxu0
      %v846 = vpop.f32.mrb[0].mxu0
      %v847 = vadd.f32 0.0, %v846
      %v848 = vpop.f32.mrb[0].mxu0
      %849 = vmatprep.mubr.bf16.mxu0 0
      %850 = vmatmul.mubr.bf16.gmra.mrb[0].mxu0 %v740
      %v851 = vpop.f32.mrb[0].mxu0
      %v852 = vadd.f32 0.0, %v851
      %v853 = vpop.f32.mrb[0].mxu0
      %v854 = vpop.f32.mrb[0].mxu0
      %v855 = vadd.f32 0.0, %v854
      %v856 = vpop.f32.mrb[0].mxu0
      %857 = vdwg.mxu0
      %v858 = vadd.f32 %v555, %v780
      %v859 = vadd.f32 %v558, %v783
      %v860 = vadd.f32 %v563, %v788
      %v861 = vadd.f32 %v566, %v791
      %v862 = vadd.f32 %v571, %v796
      %v863 = vadd.f32 %v574, %v799
      %v864 = vadd.f32 %v579, %v804
      %v865 = vadd.f32 %v582, %v807
      %v866 = vadd.f32 %v587, %v812
      %v867 = vadd.f32 %v590, %v815
      %v868 = vadd.f32 %v595, %v820
      %v869 = vadd.f32 %v598, %v823
      %v870 = vadd.f32 %v603, %v828
      %v871 = vadd.f32 %v606, %v831
      %v872 = vadd.f32 %v611, %v836
      %v873 = vadd.f32 %v614, %v839
      %v874 = vadd.f32 %v619, %v844
      %v875 = vadd.f32 %v622, %v847
      %v876 = vadd.f32 %v627, %v852
      %v877 = vadd.f32 %v630, %v855
      %v878 = vpack.c.bf16 %v859, %v858
      %v879 = vpack.c.bf16 %v861, %v860
      %v880 = vpack.c.bf16 %v863, %v862
      %v881 = vpack.c.bf16 %v865, %v864
      %v882 = vpack.c.bf16 %v867, %v866
      %v883 = vpack.c.bf16 %v869, %v868
      %v884 = vpack.c.bf16 %v871, %v870
      %v885 = vpack.c.bf16 %v873, %v872
      %v886 = vpack.c.bf16 %v875, %v874
      %v887 = vpack.c.bf16 %v877, %v876
      %v898 = vunpack.c.l.b16 %v878
      %v899 = vunpack.c.h.b16 %v878
      %v900 = vunpack.c.l.b16 %v879
      %v901 = vunpack.c.h.b16 %v879
      %v902 = vunpack.c.l.b16 %v880
      %v903 = vunpack.c.h.b16 %v880
      %v904 = vunpack.c.l.b16 %v881
      %v905 = vunpack.c.h.b16 %v881
      %v906 = vunpack.c.l.b16 %v882
      %v907 = vunpack.c.h.b16 %v882
      %v908 = vunpack.c.l.b16 %v883
      %v909 = vunpack.c.h.b16 %v883
      %v910 = vunpack.c.l.b16 %v884
      %v911 = vunpack.c.h.b16 %v884
      %v912 = vunpack.c.l.b16 %v885
      %v913 = vunpack.c.h.b16 %v885
      %v914 = vunpack.c.l.b16 %v886
      %v915 = vunpack.c.h.b16 %v886
      %v916 = vunpack.c.l.b16 %v887
      %v917 = vunpack.c.h.b16 %v887
      %v918 = vpack.c.b16 %v898, %v898
      %v919 = vpack.c.b16 %v899, %v899
      %v920 = vpack.c.b16 %v900, %v900
      %v921 = vpack.c.b16 %v901, %v901
      %v922 = vpack.c.b16 %v902, %v902
      %v923 = vpack.c.b16 %v903, %v903
      %v924 = vpack.c.b16 %v904, %v904
      %v925 = vpack.c.b16 %v905, %v905
      %v926 = vpack.c.b16 %v906, %v906
      %v927 = vpack.c.b16 %v907, %v907
      %v928 = vpack.c.b16 %v908, %v908
      %v929 = vpack.c.b16 %v909, %v909
      %v930 = vpack.c.b16 %v910, %v910
      %v931 = vpack.c.b16 %v911, %v911
      %v932 = vpack.c.b16 %v912, %v912
      %v933 = vpack.c.b16 %v913, %v913
      %v934 = vpack.c.b16 %v914, %v914
      %v935 = vpack.c.b16 %v915, %v915
      %v936 = vpack.c.b16 %v916, %v916
      %v937 = vpack.c.b16 %v917, %v917
      %958 = vst [vmem:[%s177] sm:$0xf] %v918
      %959 = vst [vmem:[%s177 + $0x4] sm:$0xf] %v919
      %960 = vst [vmem:[%s177 + $0x8] sm:$0xf] %v920
      %961 = vst [vmem:[%s177 + $0xc] sm:$0xf] %v921
      %962 = vst [vmem:[%s177 + $0x10] sm:$0xf] %v922
      %963 = vst [vmem:[%s177 + $0x14] sm:$0xf] %v923
      %964 = vst [vmem:[%s177 + $0x18] sm:$0xf] %v924
      %965 = vst [vmem:[%s177 + $0x1c] sm:$0xf] %v925
      %966 = vst [vmem:[%s177 + $0x20] sm:$0xf] %v926
      %967 = vst [vmem:[%s177 + $0x24] sm:$0xf] %v927
      %968 = vst [vmem:[%s177 + $0x28] sm:$0xf] %v928
      %969 = vst [vmem:[%s177 + $0x2c] sm:$0xf] %v929
      %970 = vst [vmem:[%s177 + $0x30] sm:$0xf] %v930
      %971 = vst [vmem:[%s177 + $0x34] sm:$0xf] %v931
      %972 = vst [vmem:[%s177 + $0x38] sm:$0xf] %v932
      %973 = vst [vmem:[%s177 + $0x3c] sm:$0xf] %v933
      %974 = vst [vmem:[%s177 + $0x40] sm:$0xf] %v934
      %975 = vst [vmem:[%s177 + $0x44] sm:$0xf] %v935
      %976 = vst [vmem:[%s177 + $0x48] sm:$0xf] %v936
      %977 = vst [vmem:[%s177 + $0x4c] sm:$0xf] %v937
      %v978 = vlaneseq
      %v979 = vshrl.u32 %v978, 7
      %v980 = vadd.s32 %v979, 8
      %vm981 = vcmp.lt.s32.totalorder %v979, 16
      %vm982 = vcmp.lt.s32.totalorder %v980, 16
      %vm983 = vmand 0, %vm981
      %vm984 = vmand 0, %vm982
      %vm985 = vmand 1, %vm981
      %vm986 = vmand 1, %vm982
      %v987 = vsel %vm983, 1, 0
      %v988 = vsel %vm984, 1, 0
      %v989 = vsel %vm985, 1, 0
      %v990 = vsel %vm986, 1, 0
      %v991 = vcvt.s32.f32 %v987
      %v992 = vcvt.s32.f32 %v988
      %v993 = vcvt.s32.f32 %v989
      %v994 = vcvt.s32.f32 %v990
      %v995 = vmul.f32 %v858, %v991
      %v996 = vmul.f32 %v859, %v992
      %v997 = vmul.f32 %v860, %v993
      %v998 = vmul.f32 %v861, %v994
      %v999 = vmul.f32 %v862, %v993
      %v1000 = vmul.f32 %v863, %v994
      %v1001 = vmul.f32 %v864, %v993
      %v1002 = vmul.f32 %v865, %v994
      %v1003 = vmul.f32 %v866, %v993
      %v1004 = vmul.f32 %v867, %v994
      %v1005 = vmul.f32 %v868, %v993
      %v1006 = vmul.f32 %v869, %v994
      %v1007 = vmul.f32 %v870, %v993
      %v1008 = vmul.f32 %v871, %v994
      %v1009 = vmul.f32 %v872, %v993
      %v1010 = vmul.f32 %v873, %v994
      %v1011 = vmul.f32 %v874, %v993
      %v1012 = vmul.f32 %v875, %v994
      %v1013 = vmul.f32 %v876, %v991
      %v1014 = vmul.f32 %v877, %v992
      %v1015 = vadd.f32 %v995, %v997
      %v1016 = vadd.f32 %v1015, %v999
      %v1017 = vadd.f32 %v1016, %v1001
      %v1018 = vadd.f32 %v1017, %v1003
      %v1019 = vadd.f32 %v1018, %v1005
      %v1020 = vadd.f32 %v1019, %v1007
      %v1021 = vadd.f32 %v1020, %v1009
      %v1022 = vadd.f32 %v1021, %v1011
      %v1023 = vadd.f32 %v1022, %v1013
      %v1024 = vadd.f32 %v996, %v998
      %v1025 = vadd.f32 %v1024, %v1000
      %v1026 = vadd.f32 %v1025, %v1002
      %v1027 = vadd.f32 %v1026, %v1004
      %v1028 = vadd.f32 %v1027, %v1006
      %v1029 = vadd.f32 %v1028, %v1008
      %v1030 = vadd.f32 %v1029, %v1010
      %v1031 = vadd.f32 %v1030, %v1012
      %v1032 = vadd.f32 %v1031, %v1014
      %v1033 = vadd.f32 %v1023, %v1032
      %v1034 = vrot.slane %v1033, 4
      %v1035 = vadd.f32 %v1033, %v1034
      %v1036 = vrot.slane %v1035, 2
      %v1037 = vadd.f32 %v1035, %v1036
      %v1038 = vrot.slane %v1037, 1
      %v1039 = vadd.f32 %v1037, %v1038
      %v1040 = vmul.f32 %v1039, 0.0078125
      %v1041 = vsub.f32 %v858, %v1040
      %v1042 = vsub.f32 %v859, %v1040
      %v1043 = vsub.f32 %v860, %v1040
      %v1044 = vsub.f32 %v861, %v1040
      %v1045 = vsub.f32 %v862, %v1040
      %v1046 = vsub.f32 %v863, %v1040
      %v1047 = vsub.f32 %v864, %v1040
      %v1048 = vsub.f32 %v865, %v1040
      %v1049 = vsub.f32 %v866, %v1040
      %v1050 = vsub.f32 %v867, %v1040
      %v1051 = vsub.f32 %v868, %v1040
      %v1052 = vsub.f32 %v869, %v1040
      %v1053 = vsub.f32 %v870, %v1040
      %v1054 = vsub.f32 %v871, %v1040
      %v1055 = vsub.f32 %v872, %v1040
      %v1056 = vsub.f32 %v873, %v1040
      %v1057 = vsub.f32 %v874, %v1040
      %v1058 = vsub.f32 %v875, %v1040
      %v1059 = vsub.f32 %v876, %v1040
      %v1060 = vsub.f32 %v877, %v1040
      %v1061 = vmul.f32 %v1041, %v991
      %v1062 = vmul.f32 %v1042, %v992
      %v1063 = vmul.f32 %v1043, %v993
      %v1064 = vmul.f32 %v1044, %v994
      %v1065 = vmul.f32 %v1045, %v993
      %v1066 = vmul.f32 %v1046, %v994
      %v1067 = vmul.f32 %v1047, %v993
      %v1068 = vmul.f32 %v1048, %v994
      %v1069 = vmul.f32 %v1049, %v993
      %v1070 = vmul.f32 %v1050, %v994
      %v1071 = vmul.f32 %v1051, %v993
      %v1072 = vmul.f32 %v1052, %v994
      %v1073 = vmul.f32 %v1053, %v993
      %v1074 = vmul.f32 %v1054, %v994
      %v1075 = vmul.f32 %v1055, %v993
      %v1076 = vmul.f32 %v1056, %v994
      %v1077 = vmul.f32 %v1057, %v993
      %v1078 = vmul.f32 %v1058, %v994
      %v1079 = vmul.f32 %v1059, %v991
      %v1080 = vmul.f32 %v1060, %v992
      %v1081 = vmul.f32 %v1061, %v1061
      %v1082 = vmul.f32 %v1062, %v1062
      %v1083 = vmul.f32 %v1063, %v1063
      %v1084 = vmul.f32 %v1064, %v1064
      %v1085 = vmul.f32 %v1065, %v1065
      %v1086 = vmul.f32 %v1066, %v1066
      %v1087 = vmul.f32 %v1067, %v1067
      %v1088 = vmul.f32 %v1068, %v1068
      %v1089 = vmul.f32 %v1069, %v1069
      %v1090 = vmul.f32 %v1070, %v1070
      %v1091 = vmul.f32 %v1071, %v1071
      %v1092 = vmul.f32 %v1072, %v1072
      %v1093 = vmul.f32 %v1073, %v1073
      %v1094 = vmul.f32 %v1074, %v1074
      %v1095 = vmul.f32 %v1075, %v1075
      %v1096 = vmul.f32 %v1076, %v1076
      %v1097 = vmul.f32 %v1077, %v1077
      %v1098 = vmul.f32 %v1078, %v1078
      %v1099 = vmul.f32 %v1079, %v1079
      %v1100 = vmul.f32 %v1080, %v1080
      %v1101 = vadd.f32 %v1081, %v1083
      %v1102 = vadd.f32 %v1101, %v1085
      %v1103 = vadd.f32 %v1102, %v1087
      %v1104 = vadd.f32 %v1103, %v1089
      %v1105 = vadd.f32 %v1104, %v1091
      %v1106 = vadd.f32 %v1105, %v1093
      %v1107 = vadd.f32 %v1106, %v1095
      %v1108 = vadd.f32 %v1107, %v1097
      %v1109 = vadd.f32 %v1108, %v1099
      %v1110 = vadd.f32 %v1082, %v1084
      %v1111 = vadd.f32 %v1110, %v1086
      %v1112 = vadd.f32 %v1111, %v1088
      %v1113 = vadd.f32 %v1112, %v1090
      %v1114 = vadd.f32 %v1113, %v1092
      %v1115 = vadd.f32 %v1114, %v1094
      %v1116 = vadd.f32 %v1115, %v1096
      %v1117 = vadd.f32 %v1116, %v1098
      %v1118 = vadd.f32 %v1117, %v1100
      %v1119 = vadd.f32 %v1109, %v1118
      %v1120 = vrot.slane %v1119, 4
      %v1121 = vadd.f32 %v1119, %v1120
      %v1122 = vrot.slane %v1121, 2
      %v1123 = vadd.f32 %v1121, %v1122
      %v1124 = vrot.slane %v1123, 1
      %v1125 = vadd.f32 %v1123, %v1124
      %1126 = vst [vmem:[%s181] sm:$0x1] %v1040
      %1127 = vst [vmem:[%s181 + $0x1] sm:$0x1] %v1125
      %p1128 = scmp.lt.s32.totalorder %s15, 3
      %s1129 = scalar_select %p1128, %s15, 3
      %s1130 = smul.addr %s1129, 20
      %s1131 = smul.addr %s1130, 4
      %s1132 = scalar_lea.vmem %s2, %s1131
      %p1133 = scmp.lt.s32.totalorder %s15, 3
      %s1134 = scalar_select %p1133, %s15, 3
      %s1135 = smul.addr %s1134, 2
      %s1136 = scalar_lea.vmem %s3, %s1135
      // Predicated region
      $region29: #{double_conv_forward.3} parent=27 // pred_check
        %p1137 = pneg %p80
      $region30: #{double_conv_forward.3} parent=27 // pred_check_branch
        %1139 = sbr.rel (%p1137) target = $region32
      $region31: #{double_conv_forward.3} parent=27 // pred_region
        _
      $region32: #{double_conv_forward.3} parent=27 // pred_fallthru
        _
      // Predicated region
      $region33: #{double_conv_forward.3} parent=27 // pred_check
        %p1140 = pneg %p106
      $region34: #{double_conv_forward.3} parent=27 // pred_check_branch
        %1142 = sbr.rel (%p1140) target = $region36
      $region35: #{double_conv_forward.3} parent=27 // pred_region
        _
      $region36: #{double_conv_forward.3} parent=27 // pred_fallthru
        _
    $region28: #{double_conv_forward.3} parent=5 // pred_fallthru
      _
    %p1143 = scmp.le.s32.totalorder 2, %s10
    // Predicated region
    $region37: #{double_conv_forward.3} parent=5 // pred_check
      %p1144 = pneg %p1143
    $region38: #{double_conv_forward.3} parent=5 // pred_check_branch
      %1146 = sbr.rel (%p1144) target = $region40
    $region39: #{double_conv_forward.3} parent=5 // pred_region
      %s1147 = ssub.s32 %s10, 2
      // Predicated region
      $region41: #{double_conv_forward.3} parent=39 // pred_check
        %p1148 = pneg %p86
      $region42: #{double_conv_forward.3} parent=39 // pred_check_branch
        %1150 = sbr.rel (%p1148) target = $region44
      $region43: #{double_conv_forward.3} parent=39 // pred_region
        %p1151 = scmp.lt.s32.totalorder %s16, 3
        %s1152 = scalar_select %p1151, %s16, 3
        %s1153 = smul.addr %s1152, 20
        %s1154 = smul.addr %s1153, 4
        %s1155 = scalar_lea.vmem %s2, %s1154
      $region44: #{double_conv_forward.3} parent=39 // pred_fallthru
        _
      // Predicated region
      $region45: #{double_conv_forward.3} parent=39 // pred_check
        %p1156 = pneg %p112
      $region46: #{double_conv_forward.3} parent=39 // pred_check_branch
        %1158 = sbr.rel (%p1156) target = $region48
      $region47: #{double_conv_forward.3} parent=39 // pred_region
        %p1159 = scmp.lt.s32.totalorder %s16, 3
        %s1160 = scalar_select %p1159, %s16, 3
        %s1161 = smul.addr %s1160, 2
        %s1162 = scalar_lea.vmem %s3, %s1161
      $region48: #{double_conv_forward.3} parent=39 // pred_fallthru
        _
    $region40: #{double_conv_forward.3} parent=5 // pred_fallthru
      _
  $region6: #{double_conv_forward.3} parent=0 // loop_footer
    %s14 = sadd.s32 1, %s10
  $region7: #{double_conv_forward.3} parent=0 // loop_footer_branch
    %9 = sbr.rel target = $region3
  $region8: #{double_conv_forward.3} parent=0 // loop_exit
    _

// kernel: double_conv_forward.4
$region0: #{double_conv_forward.4}
  #allocation0 [shape = 'u32[]', space=smem, size = 0x4, offset = 0x4, fixed_abs, tag = 'smem constant byte address 0x4 - core index']
  #allocation1 [shape = 'u32[144,128]{1,0:T(1,128)}', space=vmem, size = 0x12000, scoped, tag = 'internal scratch']
  %s0 = inlined_call_operand.vmem [shape: bf16[4,10,16,128], index: 0, kind: input, shape index: {}]
  %s1 = inlined_call_operand.vmem [shape: f32[1,128], index: 1, kind: input, shape index: {}]
  %s2 = inlined_call_operand.vmem [shape: f32[1,128], index: 2, kind: input, shape index: {}]
  %s3 = inlined_call_operand.vmem [shape: bf16[3,384,128], index: 3, kind: input, shape index: {}]
  %s4 = inlined_call_operand.vmem [shape: bf16[4,8,16,128], index: 4, kind: output, shape index: {0}]
  %s5 = inlined_call_operand.vmem [shape: f32[4,2,128], index: 5, kind: output, shape index: {1}]
  %6 = xla_tuple %s4, %s5
  %s7 = sld [smem:[#allocation0]]
  $region57: #{double_conv_forward.4} parent=0
    _
  %s9 = ssub.s32 1, %s7
  %s10 = scalar_select 0, %s9, %s7
  loop: start=0, step=1, limit=6
  $region2: #{double_conv_forward.4} parent=0 // loop_pre_header
    _
  $region3: #{double_conv_forward.4} parent=0 // loop_header
    %s12 = sphi 0, %s16
    %p13 = scmp.ge.s32.totalorder %s12, 6
    %s22 = sphi 0, %s24
    %s25 = sphi 0, %s22
    %s26 = sphi 0, %s25
    %s42 = sphi 0, %s26
    %s46 = sphi 0, %s46
    %s48 = sphi 0, %s46
    %s49 = sphi 0, %s48
    %s63 = sphi 0, %s49
    %s67 = sphi 0, %s67
    %s69 = sphi 0, %s67
    %s70 = sphi 0, %s69
    %s84 = sphi 0, %s70
    %s88 = sphi 0, %s88
    %s90 = sphi 0, %s88
    %s91 = sphi 0, %s90
    %s105 = sphi 0, %s91
    %s111 = sphi 0, %s113
    %s114 = sphi 0, %s111
    %s115 = sphi 0, %s114
    %s131 = sphi 0, %s115
    %s137 = sphi 0, %s139
    %s140 = sphi 0, %s137
    %s141 = sphi 0, %s140
    %s157 = sphi 0, %s141
  $region4: #{double_conv_forward.4} parent=0 // loop_header_branch
    %15 = sbr.rel (%p13) target = $region8
  $region5: #{double_conv_forward.4} parent=0 // loop_body
    %s17 = ssub.s32 %s12, 1
    %s18 = ssub.s32 %s12, 2
    %s19 = sadd.s32 %s12, 1
    %s20 = ssub.s32 %s12, %s19
    %p21 = scmp.eq.s32.totalorder %s20, 0
    %s23 = sadd.s32 %s22, 1
    %s24 = scalar_select %p21, %s22, %s23
    %p27 = pneg %p21
    %p28 = scmp.eq.s32.totalorder %s12, 3
    %p29 = por %p27, %p28
    %p30 = scmp.ne.s32.totalorder %s22, %s25
    %p31 = scmp.eq.s32.totalorder %s12, 0
    %p32 = por %p30, %p31
    %p33 = scmp.ne.s32.totalorder %s22, %s25
    %p34 = scmp.eq.s32.totalorder %s17, 3
    %p35 = por %p33, %p34
    %p36 = scmp.ne.s32.totalorder %s25, %s26
    %p37 = scmp.eq.s32.totalorder %s17, 0
    %p38 = por %p36, %p37
    %p39 = scmp.ne.s32.totalorder %s25, %s26
    %p40 = scmp.eq.s32.totalorder %s18, 3
    %p41 = por %p39, %p40
    %p43 = scmp.ne.s32.totalorder %s26, %s42
    %p44 = scmp.eq.s32.totalorder %s18, 0
    %p45 = por %p43, %p44
    %s47 = sadd.s32 %s46, 1
    %p50 = scmp.eq.s32.totalorder %s12, 3
    %p51 = scmp.ne.s32.totalorder %s46, %s48
    %p52 = scmp.eq.s32.totalorder %s12, 0
    %p53 = por %p51, %p52
    %p54 = scmp.ne.s32.totalorder %s46, %s48
    %p55 = scmp.eq.s32.totalorder %s17, 3
    %p56 = por %p54, %p55
    %p57 = scmp.ne.s32.totalorder %s48, %s49
    %p58 = scmp.eq.s32.totalorder %s17, 0
    %p59 = por %p57, %p58
    %p60 = scmp.ne.s32.totalorder %s48, %s49
    %p61 = scmp.eq.s32.totalorder %s18, 3
    %p62 = por %p60, %p61
    %p64 = scmp.ne.s32.totalorder %s49, %s63
    %p65 = scmp.eq.s32.totalorder %s18, 0
    %p66 = por %p64, %p65
    %s68 = sadd.s32 %s67, 1
    %p71 = scmp.eq.s32.totalorder %s12, 3
    %p72 = scmp.ne.s32.totalorder %s67, %s69
    %p73 = scmp.eq.s32.totalorder %s12, 0
    %p74 = por %p72, %p73
    %p75 = scmp.ne.s32.totalorder %s67, %s69
    %p76 = scmp.eq.s32.totalorder %s17, 3
    %p77 = por %p75, %p76
    %p78 = scmp.ne.s32.totalorder %s69, %s70
    %p79 = scmp.eq.s32.totalorder %s17, 0
    %p80 = por %p78, %p79
    %p81 = scmp.ne.s32.totalorder %s69, %s70
    %p82 = scmp.eq.s32.totalorder %s18, 3
    %p83 = por %p81, %p82
    %p85 = scmp.ne.s32.totalorder %s70, %s84
    %p86 = scmp.eq.s32.totalorder %s18, 0
    %p87 = por %p85, %p86
    %s89 = sadd.s32 %s88, 1
    %p92 = scmp.eq.s32.totalorder %s12, 3
    %p93 = scmp.ne.s32.totalorder %s88, %s90
    %p94 = scmp.eq.s32.totalorder %s12, 0
    %p95 = por %p93, %p94
    %p96 = scmp.ne.s32.totalorder %s88, %s90
    %p97 = scmp.eq.s32.totalorder %s17, 3
    %p98 = por %p96, %p97
    %p99 = scmp.ne.s32.totalorder %s90, %s91
    %p100 = scmp.eq.s32.totalorder %s17, 0
    %p101 = por %p99, %p100
    %p102 = scmp.ne.s32.totalorder %s90, %s91
    %p103 = scmp.eq.s32.totalorder %s18, 3
    %p104 = por %p102, %p103
    %p106 = scmp.ne.s32.totalorder %s91, %s105
    %p107 = scmp.eq.s32.totalorder %s18, 0
    %p108 = por %p106, %p107
    %s109 = ssub.s32 %s12, %s19
    %p110 = scmp.eq.s32.totalorder %s109, 0
    %s112 = sadd.s32 %s111, 1
    %s113 = scalar_select %p110, %s111, %s112
    %p116 = pneg %p110
    %p117 = scmp.eq.s32.totalorder %s12, 3
    %p118 = por %p116, %p117
    %p119 = scmp.ne.s32.totalorder %s111, %s114
    %p120 = scmp.eq.s32.totalorder %s12, 0
    %p121 = por %p119, %p120
    %p122 = scmp.ne.s32.totalorder %s111, %s114
    %p123 = scmp.eq.s32.totalorder %s17, 3
    %p124 = por %p122, %p123
    %p125 = scmp.ne.s32.totalorder %s114, %s115
    %p126 = scmp.eq.s32.totalorder %s17, 0
    %p127 = por %p125, %p126
    %p128 = scmp.ne.s32.totalorder %s114, %s115
    %p129 = scmp.eq.s32.totalorder %s18, 3
    %p130 = por %p128, %p129
    %p132 = scmp.ne.s32.totalorder %s115, %s131
    %p133 = scmp.eq.s32.totalorder %s18, 0
    %p134 = por %p132, %p133
    %s135 = ssub.s32 %s12, %s19
    %p136 = scmp.eq.s32.totalorder %s135, 0
    %s138 = sadd.s32 %s137, 1
    %s139 = scalar_select %p136, %s137, %s138
    %p142 = pneg %p136
    %p143 = scmp.eq.s32.totalorder %s12, 3
    %p144 = por %p142, %p143
    %p145 = scmp.ne.s32.totalorder %s137, %s140
    %p146 = scmp.eq.s32.totalorder %s12, 0
    %p147 = por %p145, %p146
    %p148 = scmp.ne.s32.totalorder %s137, %s140
    %p149 = scmp.eq.s32.totalorder %s17, 3
    %p150 = por %p148, %p149
    %p151 = scmp.ne.s32.totalorder %s140, %s141
    %p152 = scmp.eq.s32.totalorder %s17, 0
    %p153 = por %p151, %p152
    %p154 = scmp.ne.s32.totalorder %s140, %s141
    %p155 = scmp.eq.s32.totalorder %s18, 3
    %p156 = por %p154, %p155
    %p158 = scmp.ne.s32.totalorder %s141, %s157
    %p159 = scmp.eq.s32.totalorder %s18, 0
    %p160 = por %p158, %p159
    %p161 = scmp.le.s32.totalorder 1, %s12
    %p162 = scmp.lt.s32.totalorder %s12, 5
    %p163 = pnand %p161, %p162
    %p164 = pneg %p163
    // Predicated region
    $region9: #{double_conv_forward.4} parent=5 // pred_check
      _
    $region10: #{double_conv_forward.4} parent=5 // pred_check_branch
      %166 = sbr.rel (%p163) target = $region12
    $region11: #{double_conv_forward.4} parent=5 // pred_region
      %s167 = ssub.s32 %s12, 1
      // Predicated region
      $region13: #{double_conv_forward.4} parent=11 // pred_check
        %p168 = pneg %p59
      $region14: #{double_conv_forward.4} parent=11 // pred_check_branch
        %170 = sbr.rel (%p168) target = $region16
      $region15: #{double_conv_forward.4} parent=11 // pred_region
        _
      $region16: #{double_conv_forward.4} parent=11 // pred_fallthru
        _
      // Predicated region
      $region17: #{double_conv_forward.4} parent=11 // pred_check
        %p171 = pneg %p80
      $region18: #{double_conv_forward.4} parent=11 // pred_check_branch
        %173 = sbr.rel (%p171) target = $region20
      $region19: #{double_conv_forward.4} parent=11 // pred_region
        _
      $region20: #{double_conv_forward.4} parent=11 // pred_fallthru
        _
      // Predicated region
      $region21: #{double_conv_forward.4} parent=11 // pred_check
        %p174 = pneg %p101
      $region22: #{double_conv_forward.4} parent=11 // pred_check_branch
        %176 = sbr.rel (%p174) target = $region24
      $region23: #{double_conv_forward.4} parent=11 // pred_region
        _
      $region24: #{double_conv_forward.4} parent=11 // pred_fallthru
        _
    $region12: #{double_conv_forward.4} parent=5 // pred_fallthru
      _
    %p177 = scmp.lt.s32.totalorder %s12, 4
    // Predicated region
    $region25: #{double_conv_forward.4} parent=5 // pred_check
      %p178 = pneg %p177
    $region26: #{double_conv_forward.4} parent=5 // pred_check_branch
      %180 = sbr.rel (%p178) target = $region28
    $region27: #{double_conv_forward.4} parent=5 // pred_region
      // Predicated region
      $region29: #{double_conv_forward.4} parent=27 // pred_check
        %p181 = pneg %p32
      $region30: #{double_conv_forward.4} parent=27 // pred_check_branch
        %183 = sbr.rel (%p181) target = $region32
      $region31: #{double_conv_forward.4} parent=27 // pred_region
        %p184 = scmp.lt.s32.totalorder %s12, 3
        %s185 = scalar_select %p184, %s12, 3
        %s186 = smul.addr %s185, 20
        %s187 = smul.addr %s186, 4
        %s188 = scalar_lea.vmem %s0, %s187
      $region32: #{double_conv_forward.4} parent=27 // pred_fallthru
        _
    $region28: #{double_conv_forward.4} parent=5 // pred_fallthru
      _
    %p189 = scmp.le.s32.totalorder 1, %s12
    %p190 = scmp.lt.s32.totalorder %s12, 5
    %p191 = pnand %p189, %p190
    %p192 = pneg %p191
    // Predicated region
    $region33: #{double_conv_forward.4} parent=5 // pred_check
      _
    $region34: #{double_conv_forward.4} parent=5 // pred_check_branch
      %194 = sbr.rel (%p191) target = $region36
    $region35: #{double_conv_forward.4} parent=5 // pred_region
      %s195 = ssub.s32 %s12, 1
      %p196 = scmp.lt.s32.totalorder %s17, 3
      %s197 = scalar_select %p196, %s17, 3
      %s198 = smul.addr %s197, 20
      %s199 = smul.addr %s198, 4
      %s200 = scalar_lea.vmem %s0, %s199
      %p201 = pneg %p38
      %p202 = pneg %p35
      %p203 = pneg %p59
      %p204 = pneg %p56
      %p205 = pneg %p80
      %p206 = pneg %p77
      %p207 = pneg %p101
      %p208 = pneg %p98
      %p209 = pneg %p127
      %p210 = pneg %p124
      %p211 = scmp.lt.s32.totalorder %s17, 3
      %s212 = scalar_select %p211, %s17, 3
      %s213 = smul.addr %s212, 16
      %s214 = smul.addr %s213, 4
      %s215 = scalar_lea.vmem %s4, %s214
      %p216 = pneg %p153
      %p217 = pneg %p150
      %p218 = scmp.lt.s32.totalorder %s17, 3
      %s219 = scalar_select %p218, %s17, 3
      %s220 = smul.addr %s219, 2
      %s221 = scalar_lea.vmem %s5, %s220
      %p222 = scmp.lt.s32.totalorder %s17, 3
      %s223 = scalar_select %p222, %s17, 3
      %s224 = smul.addr %s223, 20
      %s225 = smul.addr %s224, 4
      %s226 = scalar_lea.vmem %s0, %s225
      %p227 = scmp.lt.s32.totalorder %s17, 3
      %s228 = scalar_select %p227, %s17, 3
      %s229 = smul.addr %s228, 16
      %s230 = smul.addr %s229, 4
      %s231 = scalar_lea.vmem %s4, %s230
      %p232 = scmp.lt.s32.totalorder %s17, 3
      %s233 = scalar_select %p232, %s17, 3
      %s234 = smul.addr %s233, 2
      %s235 = scalar_lea.vmem %s5, %s234
      %p237 = scmp.lt.s32.totalorder %s17, 0
      %s238 = ssub.s32 0, %s17
      %s239 = scalar_select %p237, %s238, %s17
      %s240 = sand.u32 %s239, 1
      %s241 = ssub.s32 0, %s240
      %s242 = scalar_select %p237, %s241, %s240
      %p243 = scmp.ne.s32.totalorder %s242, 0
      %p244 = scmp.lt.s32.totalorder %s242, 0
      %p245 = pnand %p244, %p243
      %p246 = pneg %p245
      %s247 = sadd.s32 %s242, 2
      %s248 = scalar_select %p246, %s247, %s242
      %s249 = smul.u32 %s248, 8
      %s250 = ssub.s32 %s249, 1
      %v251 = vld [vmem:[%s226] sm:$0xf]
      %v252 = vld [vmem:[%s226 + $0x4] sm:$0xf]
      %v253 = vld [vmem:[%s226 + $0x8] sm:$0xf]
      %v254 = vld [vmem:[%s226 + $0xc] sm:$0xf]
      %v255 = vld [vmem:[%s226 + $0x10] sm:$0xf]
      %v256 = vld [vmem:[%s226 + $0x14] sm:$0xf]
      %v257 = vld [vmem:[%s226 + $0x18] sm:$0xf]
      %v258 = vld [vmem:[%s226 + $0x1c] sm:$0xf]
      %v259 = vld [vmem:[%s226 + $0x20] sm:$0xf]
      %v260 = vld [vmem:[%s226 + $0x24] sm:$0xf]
      %v261 = vld [vmem:[%s226 + $0x28] sm:$0xf]
      %v262 = vld [vmem:[%s226 + $0x2c] sm:$0xf]
      %v263 = vld [vmem:[%s226 + $0x30] sm:$0xf]
      %v264 = vld [vmem:[%s226 + $0x34] sm:$0xf]
      %v265 = vld [vmem:[%s226 + $0x38] sm:$0xf]
      %v266 = vld [vmem:[%s226 + $0x3c] sm:$0xf]
      %v267 = vld [vmem:[%s226 + $0x40] sm:$0xf]
      %v268 = vld [vmem:[%s226 + $0x44] sm:$0xf]
      %v269 = vld [vmem:[%s226 + $0x48] sm:$0xf]
      %v270 = vld [vmem:[%s226 + $0x4c] sm:$0xf]
      %v271 = vunpack.c.l.bf16 %v251
      %v272 = vunpack.c.l.bf16 %v252
      %v273 = vunpack.c.l.bf16 %v253
      %v274 = vunpack.c.l.bf16 %v254
      %v275 = vunpack.c.l.bf16 %v255
      %v276 = vunpack.c.l.bf16 %v256
      %v277 = vunpack.c.l.bf16 %v257
      %v278 = vunpack.c.l.bf16 %v258
      %v279 = vunpack.c.l.bf16 %v259
      %v280 = vunpack.c.l.bf16 %v260
      %v281 = vunpack.c.l.bf16 %v261
      %v282 = vunpack.c.l.bf16 %v262
      %v283 = vunpack.c.l.bf16 %v263
      %v284 = vunpack.c.l.bf16 %v264
      %v285 = vunpack.c.l.bf16 %v265
      %v286 = vunpack.c.l.bf16 %v266
      %v287 = vunpack.c.l.bf16 %v267
      %v288 = vunpack.c.l.bf16 %v268
      %v289 = vunpack.c.l.bf16 %v269
      %v290 = vunpack.c.l.bf16 %v270
      %v291 = vld [vmem:[%s1] sm:$0x1]
      %v292 = vld [vmem:[%s2] sm:$0x1]
      %v293 = vstv %s250
      %v294 = vadd.s32 %v293, 1
      %v295 = vadd.s32 %v293, 2
      %v296 = vadd.s32 %v293, 3
      %v297 = vadd.s32 %v293, 4
      %v298 = vadd.s32 %v293, 5
      %v299 = vadd.s32 %v293, 6
      %v300 = vadd.s32 %v293, 7
      %v301 = vadd.s32 %v293, 8
      %v302 = vadd.s32 %v293, 9
      %v303 = vlaneseq
      %v304 = vshrl.u32 %v303, 7
      %v305 = vadd.s32 %v304, 8
      %vm306 = vcmp.ge.s32.totalorder %v293, 0
      %vm307 = vcmp.ge.s32.totalorder %v294, 0
      %vm308 = vcmp.ge.s32.totalorder %v295, 0
      %vm309 = vcmp.ge.s32.totalorder %v296, 0
      %vm310 = vcmp.ge.s32.totalorder %v297, 0
      %vm311 = vcmp.ge.s32.totalorder %v298, 0
      %vm312 = vcmp.ge.s32.totalorder %v299, 0
      %vm313 = vcmp.ge.s32.totalorder %v300, 0
      %vm314 = vcmp.ge.s32.totalorder %v301, 0
      %vm315 = vcmp.ge.s32.totalorder %v302, 0
      %vm316 = vcmp.le.s32.totalorder %v293, 15
      %vm317 = vcmp.le.s32.totalorder %v294, 15
      %vm318 = vcmp.le.s32.totalorder %v295, 15
      %vm319 = vcmp.le.s32.totalorder %v296, 15
      %vm320 = vcmp.le.s32.totalorder %v297, 15
      %vm321 = vcmp.le.s32.totalorder %v298, 15
      %vm322 = vcmp.le.s32.totalorder %v299, 15
      %vm323 = vcmp.le.s32.totalorder %v300, 15
      %vm324 = vcmp.le.s32.totalorder %v301, 15
      %vm325 = vcmp.le.s32.totalorder %v302, 15
      %vm326 = vmand %vm306, %vm316
      %vm327 = vmand %vm307, %vm317
      %vm328 = vmand %vm308, %vm318
      %vm329 = vmand %vm309, %vm319
      %vm330 = vmand %vm310, %vm320
      %vm331 = vmand %vm311, %vm321
      %vm332 = vmand %vm312, %vm322
      %vm333 = vmand %vm313, %vm323
      %vm334 = vmand %vm314, %vm324
      %vm335 = vmand %vm315, %vm325
      %vm336 = vcmp.lt.s32.totalorder %v304, 16
      %vm337 = vcmp.lt.s32.totalorder %v305, 16
      %vm338 = vmand %vm326, %vm336
      %vm339 = vmand %vm326, %vm337
      %vm340 = vmand %vm327, %vm336
      %vm341 = vmand %vm327, %vm337
      %vm342 = vmand %vm328, %vm336
      %vm343 = vmand %vm328, %vm337
      %vm344 = vmand %vm329, %vm336
      %vm345 = vmand %vm329, %vm337
      %vm346 = vmand %vm330, %vm336
      %vm347 = vmand %vm330, %vm337
      %vm348 = vmand %vm331, %vm336
      %vm349 = vmand %vm331, %vm337
      %vm350 = vmand %vm332, %vm336
      %vm351 = vmand %vm332, %vm337
      %vm352 = vmand %vm333, %vm336
      %vm353 = vmand %vm333, %vm337
      %vm354 = vmand %vm334, %vm336
      %vm355 = vmand %vm334, %vm337
      %vm356 = vmand %vm335, %vm336
      %vm357 = vmand %vm335, %vm337
      %v359 = vlaneseq
      %v360 = vshrl.u32 %v359, 7
      %v361 = vsub.s32 0, %v360
      %v362 = vrot.slane %v291, %v361
      %v364 = vmul.f32 %v271, %v362
      %v365 = vmul.f32 %v272, %v362
      %v366 = vmul.f32 %v273, %v362
      %v367 = vmul.f32 %v274, %v362
      %v368 = vmul.f32 %v275, %v362
      %v369 = vmul.f32 %v276, %v362
      %v370 = vmul.f32 %v277, %v362
      %v371 = vmul.f32 %v278, %v362
      %v372 = vmul.f32 %v279, %v362
      %v373 = vmul.f32 %v280, %v362
      %v374 = vmul.f32 %v281, %v362
      %v375 = vmul.f32 %v282, %v362
      %v376 = vmul.f32 %v283, %v362
      %v377 = vmul.f32 %v284, %v362
      %v378 = vmul.f32 %v285, %v362
      %v379 = vmul.f32 %v286, %v362
      %v380 = vmul.f32 %v287, %v362
      %v381 = vmul.f32 %v288, %v362
      %v382 = vmul.f32 %v289, %v362
      %v383 = vmul.f32 %v290, %v362
      %v385 = vlaneseq
      %v386 = vshrl.u32 %v385, 7
      %v387 = vsub.s32 0, %v386
      %v388 = vrot.slane %v292, %v387
      %v390 = vadd.f32 %v364, %v388
      %v391 = vadd.f32 %v365, %v388
      %v392 = vadd.f32 %v366, %v388
      %v393 = vadd.f32 %v367, %v388
      %v394 = vadd.f32 %v368, %v388
      %v395 = vadd.f32 %v369, %v388
      %v396 = vadd.f32 %v370, %v388
      %v397 = vadd.f32 %v371, %v388
      %v398 = vadd.f32 %v372, %v388
      %v399 = vadd.f32 %v373, %v388
      %v400 = vadd.f32 %v374, %v388
      %v401 = vadd.f32 %v375, %v388
      %v402 = vadd.f32 %v376, %v388
      %v403 = vadd.f32 %v377, %v388
      %v404 = vadd.f32 %v378, %v388
      %v405 = vadd.f32 %v379, %v388
      %v406 = vadd.f32 %v380, %v388
      %v407 = vadd.f32 %v381, %v388
      %v408 = vadd.f32 %v382, %v388
      %v409 = vadd.f32 %v383, %v388
      %v410 = vmax.f32 %v390, 0.0
      %v411 = vmax.f32 %v391, 0.0
      %v412 = vmax.f32 %v392, 0.0
      %v413 = vmax.f32 %v393, 0.0
      %v414 = vmax.f32 %v394, 0.0
      %v415 = vmax.f32 %v395, 0.0
      %v416 = vmax.f32 %v396, 0.0
      %v417 = vmax.f32 %v397, 0.0
      %v418 = vmax.f32 %v398, 0.0
      %v419 = vmax.f32 %v399, 0.0
      %v420 = vmax.f32 %v400, 0.0
      %v421 = vmax.f32 %v401, 0.0
      %v422 = vmax.f32 %v402, 0.0
      %v423 = vmax.f32 %v403, 0.0
      %v424 = vmax.f32 %v404, 0.0
      %v425 = vmax.f32 %v405, 0.0
      %v426 = vmax.f32 %v406, 0.0
      %v427 = vmax.f32 %v407, 0.0
      %v428 = vmax.f32 %v408, 0.0
      %v429 = vmax.f32 %v409, 0.0
      %v430 = vsel %vm338, 1, 0
      %v431 = vsel %vm339, 1, 0
      %v432 = vsel %vm340, 1, 0
      %v433 = vsel %vm341, 1, 0
      %v434 = vsel %vm342, 1, 0
      %v435 = vsel %vm343, 1, 0
      %v436 = vsel %vm344, 1, 0
      %v437 = vsel %vm345, 1, 0
      %v438 = vsel %vm346, 1, 0
      %v439 = vsel %vm347, 1, 0
      %v440 = vsel %vm348, 1, 0
      %v441 = vsel %vm349, 1, 0
      %v442 = vsel %vm350, 1, 0
      %v443 = vsel %vm351, 1, 0
      %v444 = vsel %vm352, 1, 0
      %v445 = vsel %vm353, 1, 0
      %v446 = vsel %vm354, 1, 0
      %v447 = vsel %vm355, 1, 0
      %v448 = vsel %vm356, 1, 0
      %v449 = vsel %vm357, 1, 0
      %vm450 = vcmp.eq.s32.totalorder %v430, 1
      %vm451 = vcmp.eq.s32.totalorder %v431, 1
      %vm452 = vcmp.eq.s32.totalorder %v432, 1
      %vm453 = vcmp.eq.s32.totalorder %v433, 1
      %vm454 = vcmp.eq.s32.totalorder %v434, 1
      %vm455 = vcmp.eq.s32.totalorder %v435, 1
      %vm456 = vcmp.eq.s32.totalorder %v436, 1
      %vm457 = vcmp.eq.s32.totalorder %v437, 1
      %vm458 = vcmp.eq.s32.totalorder %v438, 1
      %vm459 = vcmp.eq.s32.totalorder %v439, 1
      %vm460 = vcmp.eq.s32.totalorder %v440, 1
      %vm461 = vcmp.eq.s32.totalorder %v441, 1
      %vm462 = vcmp.eq.s32.totalorder %v442, 1
      %vm463 = vcmp.eq.s32.totalorder %v443, 1
      %vm464 = vcmp.eq.s32.totalorder %v444, 1
      %vm465 = vcmp.eq.s32.totalorder %v445, 1
      %vm466 = vcmp.eq.s32.totalorder %v446, 1
      %vm467 = vcmp.eq.s32.totalorder %v447, 1
      %vm468 = vcmp.eq.s32.totalorder %v448, 1
      %vm469 = vcmp.eq.s32.totalorder %v449, 1
      %v470 = vsel %vm450, %v410, 0.0
      %v471 = vsel %vm451, %v411, 0.0
      %v472 = vsel %vm452, %v412, 0.0
      %v473 = vsel %vm453, %v413, 0.0
      %v474 = vsel %vm454, %v414, 0.0
      %v475 = vsel %vm455, %v415, 0.0
      %v476 = vsel %vm456, %v416, 0.0
      %v477 = vsel %vm457, %v417, 0.0
      %v478 = vsel %vm458, %v418, 0.0
      %v479 = vsel %vm459, %v419, 0.0
      %v480 = vsel %vm460, %v420, 0.0
      %v481 = vsel %vm461, %v421, 0.0
      %v482 = vsel %vm462, %v422, 0.0
      %v483 = vsel %vm463, %v423, 0.0
      %v484 = vsel %vm464, %v424, 0.0
      %v485 = vsel %vm465, %v425, 0.0
      %v486 = vsel %vm466, %v426, 0.0
      %v487 = vsel %vm467, %v427, 0.0
      %v488 = vsel %vm468, %v428, 0.0
      %v489 = vsel %vm469, %v429, 0.0
      %v490 = vpack.c.bf16 %v471, %v470
      %v491 = vpack.c.bf16 %v473, %v472
      %v492 = vpack.c.bf16 %v475, %v474
      %v493 = vpack.c.bf16 %v477, %v476
      %v494 = vpack.c.bf16 %v479, %v478
      %v495 = vpack.c.bf16 %v481, %v480
      %v496 = vpack.c.bf16 %v483, %v482
      %v497 = vpack.c.bf16 %v485, %v484
      %v498 = vpack.c.bf16 %v487, %v486
      %v499 = vpack.c.bf16 %v489, %v488
      %v501 = vshrl.u32 %v490, 16
      %v503 = vrot.slane %v501, 7
      %v504 = vshll.u32 %v490, 16
      %v506 = vor.u32 %v503, %v504
      %v508 = vshrl.u32 %v491, 16
      %v510 = vrot.slane %v508, 7
      %v511 = vshll.u32 %v491, 16
      %v513 = vor.u32 %v510, %v511
      %v515 = vshrl.u32 %v492, 16
      %v517 = vrot.slane %v515, 7
      %v518 = vshll.u32 %v492, 16
      %v520 = vor.u32 %v517, %v518
      %v522 = vshrl.u32 %v493, 16
      %v524 = vrot.slane %v522, 7
      %v525 = vshll.u32 %v493, 16
      %v527 = vor.u32 %v524, %v525
      %v529 = vshrl.u32 %v494, 16
      %v531 = vrot.slane %v529, 7
      %v532 = vshll.u32 %v494, 16
      %v534 = vor.u32 %v531, %v532
      %v536 = vshrl.u32 %v495, 16
      %v538 = vrot.slane %v536, 7
      %v539 = vshll.u32 %v495, 16
      %v541 = vor.u32 %v538, %v539
      %v543 = vshrl.u32 %v496, 16
      %v545 = vrot.slane %v543, 7
      %v546 = vshll.u32 %v496, 16
      %v548 = vor.u32 %v545, %v546
      %v550 = vshrl.u32 %v497, 16
      %v552 = vrot.slane %v550, 7
      %v553 = vshll.u32 %v497, 16
      %v555 = vor.u32 %v552, %v553
      %v557 = vshrl.u32 %v498, 16
      %v559 = vrot.slane %v557, 7
      %v560 = vshll.u32 %v498, 16
      %v562 = vor.u32 %v559, %v560
      %v564 = vshrl.u32 %v499, 16
      %v566 = vrot.slane %v564, 7
      %v567 = vshll.u32 %v499, 16
      %v569 = vor.u32 %v566, %v567
      %vm590 = vcmask 1040384
      %vm591 = vsmask.f32 256
      %vm592 = vmand %vm590, %vm591
      %v593 = vsel %vm592, 0, %v506
      %v594 = vsel %vm592, 0, %v513
      %v595 = vsel %vm592, 0, %v520
      %v596 = vsel %vm592, 0, %v527
      %v597 = vsel %vm592, 0, %v534
      %v598 = vsel %vm592, 0, %v541
      %v599 = vsel %vm592, 0, %v548
      %v600 = vsel %vm592, 0, %v555
      %v601 = vsel %vm592, 0, %v562
      %v602 = vsel %vm592, 0, %v569
      %v603 = vsel %vm592, %v503, 0
      %v604 = vsel %vm592, %v510, 0
      %v605 = vsel %vm592, %v517, 0
      %v606 = vsel %vm592, %v524, 0
      %v607 = vsel %vm592, %v531, 0
      %v608 = vsel %vm592, %v538, 0
      %v609 = vsel %vm592, %v545, 0
      %v610 = vsel %vm592, %v552, 0
      %v611 = vsel %vm592, %v559, 0
      %v612 = vsel %vm592, %v566, 0
      %vm613 = vsmask.f32 7424
      %v615 = vshrl.u32 %v593, 16
      %v617 = vshll.u32 %v593, 16
      %v619 = vrot.slane %v617, 1
      %v620 = vor.u32 %v615, %v619
      %v622 = vshll.u32 %v603, 16
      %v624 = vrot.slane %v622, 1
      %v625 = vsel %vm613, %v620, %v624
      %v627 = vshrl.u32 %v594, 16
      %v629 = vshll.u32 %v594, 16
      %v631 = vrot.slane %v629, 1
      %v632 = vor.u32 %v627, %v631
      %v634 = vshll.u32 %v604, 16
      %v636 = vrot.slane %v634, 1
      %v637 = vsel %vm613, %v632, %v636
      %v639 = vshrl.u32 %v595, 16
      %v641 = vshll.u32 %v595, 16
      %v643 = vrot.slane %v641, 1
      %v644 = vor.u32 %v639, %v643
      %v646 = vshll.u32 %v605, 16
      %v648 = vrot.slane %v646, 1
      %v649 = vsel %vm613, %v644, %v648
      %v651 = vshrl.u32 %v596, 16
      %v653 = vshll.u32 %v596, 16
      %v655 = vrot.slane %v653, 1
      %v656 = vor.u32 %v651, %v655
      %v658 = vshll.u32 %v606, 16
      %v660 = vrot.slane %v658, 1
      %v661 = vsel %vm613, %v656, %v660
      %v663 = vshrl.u32 %v597, 16
      %v665 = vshll.u32 %v597, 16
      %v667 = vrot.slane %v665, 1
      %v668 = vor.u32 %v663, %v667
      %v670 = vshll.u32 %v607, 16
      %v672 = vrot.slane %v670, 1
      %v673 = vsel %vm613, %v668, %v672
      %v675 = vshrl.u32 %v598, 16
      %v677 = vshll.u32 %v598, 16
      %v679 = vrot.slane %v677, 1
      %v680 = vor.u32 %v675, %v679
      %v682 = vshll.u32 %v608, 16
      %v684 = vrot.slane %v682, 1
      %v685 = vsel %vm613, %v680, %v684
      %v687 = vshrl.u32 %v599, 16
      %v689 = vshll.u32 %v599, 16
      %v691 = vrot.slane %v689, 1
      %v692 = vor.u32 %v687, %v691
      %v694 = vshll.u32 %v609, 16
      %v696 = vrot.slane %v694, 1
      %v697 = vsel %vm613, %v692, %v696
      %v699 = vshrl.u32 %v600, 16
      %v701 = vshll.u32 %v600, 16
      %v703 = vrot.slane %v701, 1
      %v704 = vor.u32 %v699, %v703
      %v706 = vshll.u32 %v610, 16
      %v708 = vrot.slane %v706, 1
      %v709 = vsel %vm613, %v704, %v708
      %v711 = vshrl.u32 %v601, 16
      %v713 = vshll.u32 %v601, 16
      %v715 = vrot.slane %v713, 1
      %v716 = vor.u32 %v711, %v715
      %v718 = vshll.u32 %v611, 16
      %v720 = vrot.slane %v718, 1
      %v721 = vsel %vm613, %v716, %v720
      %v723 = vshrl.u32 %v602, 16
      %v725 = vshll.u32 %v602, 16
      %v727 = vrot.slane %v725, 1
      %v728 = vor.u32 %v723, %v727
      %v730 = vshll.u32 %v612, 16
      %v732 = vrot.slane %v730, 1
      %v733 = vsel %vm613, %v728, %v732
      %vm764 = vcmask 1046528
      %v765 = vrot.slane %v593, 1
      %v766 = vrot.slane %v603, 1
      %v767 = vsel %vm764, %v765, %v766
      %v768 = vrot.slane %v594, 1
      %v769 = vrot.slane %v604, 1
      %v770 = vsel %vm764, %v768, %v769
      %v771 = vrot.slane %v595, 1
      %v772 = vrot.slane %v605, 1
      %v773 = vsel %vm764, %v771, %v772
      %v774 = vrot.slane %v596, 1
      %v775 = vrot.slane %v606, 1
      %v776 = vsel %vm764, %v774, %v775
      %v777 = vrot.slane %v597, 1
      %v778 = vrot.slane %v607, 1
      %v779 = vsel %vm764, %v777, %v778
      %v780 = vrot.slane %v598, 1
      %v781 = vrot.slane %v608, 1
      %v782 = vsel %vm764, %v780, %v781
      %v783 = vrot.slane %v599, 1
      %v784 = vrot.slane %v609, 1
      %v785 = vsel %vm764, %v783, %v784
      %v786 = vrot.slane %v600, 1
      %v787 = vrot.slane %v610, 1
      %v788 = vsel %vm764, %v786, %v787
      %v789 = vrot.slane %v601, 1
      %v790 = vrot.slane %v611, 1
      %v791 = vsel %vm764, %v789, %v790
      %v792 = vrot.slane %v602, 1
      %v793 = vrot.slane %v612, 1
      %v794 = vsel %vm764, %v792, %v793
      %v805 = vld [vmem:[%s3] sm:$0xf]
      %v806 = vld [vmem:[%s3 + $0x4] sm:$0xf]
      %v807 = vld [vmem:[%s3 + $0x8] sm:$0xf]
      %v808 = vld [vmem:[%s3 + $0xc] sm:$0xf]
      %v809 = vld [vmem:[%s3 + $0x10] sm:$0xf]
      %v810 = vld [vmem:[%s3 + $0x14] sm:$0xf]
      %v811 = vld [vmem:[%s3 + $0x18] sm:$0xf]
      %v812 = vld [vmem:[%s3 + $0x1c] sm:$0xf]
      %v813 = vld [vmem:[%s3 + $0x20] sm:$0xf]
      %v814 = vld [vmem:[%s3 + $0x24] sm:$0xf]
      %v815 = vld [vmem:[%s3 + $0x28] sm:$0xf]
      %v816 = vld [vmem:[%s3 + $0x2c] sm:$0xf]
      %v817 = vld [vmem:[%s3 + $0x30] sm:$0xf]
      %v818 = vld [vmem:[%s3 + $0x34] sm:$0xf]
      %v819 = vld [vmem:[%s3 + $0x38] sm:$0xf]
      %v820 = vld [vmem:[%s3 + $0x3c] sm:$0xf]
      %v821 = vld [vmem:[%s3 + $0x40] sm:$0xf]
      %v822 = vld [vmem:[%s3 + $0x44] sm:$0xf]
      %v823 = vld [vmem:[%s3 + $0x48] sm:$0xf]
      %v824 = vld [vmem:[%s3 + $0x4c] sm:$0xf]
      %v825 = vld [vmem:[%s3 + $0x50] sm:$0xf]
      %v826 = vld [vmem:[%s3 + $0x54] sm:$0xf]
      %v827 = vld [vmem:[%s3 + $0x58] sm:$0xf]
      %v828 = vld [vmem:[%s3 + $0x5c] sm:$0xf]
      %v829 = vld [vmem:[%s3 + $0x60] sm:$0xf]
      %v830 = vld [vmem:[%s3 + $0x64] sm:$0xf]
      %v831 = vld [vmem:[%s3 + $0x68] sm:$0xf]
      %v832 = vld [vmem:[%s3 + $0x6c] sm:$0xf]
      %v833 = vld [vmem:[%s3 + $0x70] sm:$0xf]
      %v834 = vld [vmem:[%s3 + $0x74] sm:$0xf]
      %v835 = vld [vmem:[%s3 + $0x78] sm:$0xf]
      %v836 = vld [vmem:[%s3 + $0x7c] sm:$0xf]
      %v837 = vld [vmem:[%s3 + $0x80] sm:$0xf]
      %v838 = vld [vmem:[%s3 + $0x84] sm:$0xf]
      %v839 = vld [vmem:[%s3 + $0x88] sm:$0xf]
      %v840 = vld [vmem:[%s3 + $0x8c] sm:$0xf]
      %v841 = vld [vmem:[%s3 + $0x90] sm:$0xf]
      %v842 = vld [vmem:[%s3 + $0x94] sm:$0xf]
      %v843 = vld [vmem:[%s3 + $0x98] sm:$0xf]
      %v844 = vld [vmem:[%s3 + $0x9c] sm:$0xf]
      %v845 = vld [vmem:[%s3 + $0xa0] sm:$0xf]
      %v846 = vld [vmem:[%s3 + $0xa4] sm:$0xf]
      %v847 = vld [vmem:[%s3 + $0xa8] sm:$0xf]
      %v848 = vld [vmem:[%s3 + $0xac] sm:$0xf]
      %v849 = vld [vmem:[%s3 + $0xb0] sm:$0xf]
      %v850 = vld [vmem:[%s3 + $0xb4] sm:$0xf]
      %v851 = vld [vmem:[%s3 + $0xb8] sm:$0xf]
      %v852 = vld [vmem:[%s3 + $0xbc] sm:$0xf]
      %s853 = scalar_lea.vmem %s3, 192
      %v854 = vld [vmem:[%s853] sm:$0xf]
      %v855 = vld [vmem:[%s853 + $0x4] sm:$0xf]
      %v856 = vld [vmem:[%s853 + $0x8] sm:$0xf]
      %v857 = vld [vmem:[%s853 + $0xc] sm:$0xf]
      %v858 = vld [vmem:[%s853 + $0x10] sm:$0xf]
      %v859 = vld [vmem:[%s853 + $0x14] sm:$0xf]
      %v860 = vld [vmem:[%s853 + $0x18] sm:$0xf]
      %v861 = vld [vmem:[%s853 + $0x1c] sm:$0xf]
      %v862 = vld [vmem:[%s853 + $0x20] sm:$0xf]
      %v863 = vld [vmem:[%s853 + $0x24] sm:$0xf]
      %v864 = vld [vmem:[%s853 + $0x28] sm:$0xf]
      %v865 = vld [vmem:[%s853 + $0x2c] sm:$0xf]
      %v866 = vld [vmem:[%s853 + $0x30] sm:$0xf]
      %v867 = vld [vmem:[%s853 + $0x34] sm:$0xf]
      %v868 = vld [vmem:[%s853 + $0x38] sm:$0xf]
      %v869 = vld [vmem:[%s853 + $0x3c] sm:$0xf]
      %v870 = vld [vmem:[%s853 + $0x40] sm:$0xf]
      %v871 = vld [vmem:[%s853 + $0x44] sm:$0xf]
      %v872 = vld [vmem:[%s853 + $0x48] sm:$0xf]
      %v873 = vld [vmem:[%s853 + $0x4c] sm:$0xf]
      %v874 = vld [vmem:[%s853 + $0x50] sm:$0xf]
      %v875 = vld [vmem:[%s853 + $0x54] sm:$0xf]
      %v876 = vld [vmem:[%s853 + $0x58] sm:$0xf]
      %v877 = vld [vmem:[%s853 + $0x5c] sm:$0xf]
      %v878 = vld [vmem:[%s853 + $0x60] sm:$0xf]
      %v879 = vld [vmem:[%s853 + $0x64] sm:$0xf]
      %v880 = vld [vmem:[%s853 + $0x68] sm:$0xf]
      %v881 = vld [vmem:[%s853 + $0x6c] sm:$0xf]
      %v882 = vld [vmem:[%s853 + $0x70] sm:$0xf]
      %v883 = vld [vmem:[%s853 + $0x74] sm:$0xf]
      %v884 = vld [vmem:[%s853 + $0x78] sm:$0xf]
      %v885 = vld [vmem:[%s853 + $0x7c] sm:$0xf]
      %v886 = vld [vmem:[%s853 + $0x80] sm:$0xf]
      %v887 = vld [vmem:[%s853 + $0x84] sm:$0xf]
      %v888 = vld [vmem:[%s853 + $0x88] sm:$0xf]
      %v889 = vld [vmem:[%s853 + $0x8c] sm:$0xf]
      %v890 = vld [vmem:[%s853 + $0x90] sm:$0xf]
      %v891 = vld [vmem:[%s853 + $0x94] sm:$0xf]
      %v892 = vld [vmem:[%s853 + $0x98] sm:$0xf]
      %v893 = vld [vmem:[%s853 + $0x9c] sm:$0xf]
      %v894 = vld [vmem:[%s853 + $0xa0] sm:$0xf]
      %v895 = vld [vmem:[%s853 + $0xa4] sm:$0xf]
      %v896 = vld [vmem:[%s853 + $0xa8] sm:$0xf]
      %v897 = vld [vmem:[%s853 + $0xac] sm:$0xf]
      %v898 = vld [vmem:[%s853 + $0xb0] sm:$0xf]
      %v899 = vld [vmem:[%s853 + $0xb4] sm:$0xf]
      %v900 = vld [vmem:[%s853 + $0xb8] sm:$0xf]
      %v901 = vld [vmem:[%s853 + $0xbc] sm:$0xf]
      %v950 = vunpack.c.l.b16 %v854
      %v951 = vunpack.c.l.b16 %v855
      %v952 = vunpack.c.l.b16 %v856
      %v953 = vunpack.c.l.b16 %v857
      %v954 = vunpack.c.l.b16 %v858
      %v955 = vunpack.c.l.b16 %v859
      %v956 = vunpack.c.l.b16 %v860
      %v957 = vunpack.c.l.b16 %v861
      %v958 = vunpack.c.l.b16 %v862
      %v959 = vunpack.c.l.b16 %v863
      %v960 = vunpack.c.l.b16 %v864
      %v961 = vunpack.c.l.b16 %v865
      %v962 = vunpack.c.l.b16 %v866
      %v963 = vunpack.c.l.b16 %v867
      %v964 = vunpack.c.l.b16 %v868
      %v965 = vunpack.c.l.b16 %v869
      %v966 = vunpack.c.l.b16 %v870
      %v967 = vunpack.c.l.b16 %v871
      %v968 = vunpack.c.l.b16 %v872
      %v969 = vunpack.c.l.b16 %v873
      %v970 = vunpack.c.l.b16 %v874
      %v971 = vunpack.c.l.b16 %v875
      %v972 = vunpack.c.l.b16 %v876
      %v973 = vunpack.c.l.b16 %v877
      %v974 = vunpack.c.l.b16 %v878
      %v975 = vunpack.c.l.b16 %v879
      %v976 = vunpack.c.l.b16 %v880
      %v977 = vunpack.c.l.b16 %v881
      %v978 = vunpack.c.l.b16 %v882
      %v979 = vunpack.c.l.b16 %v883
      %v980 = vunpack.c.l.b16 %v884
      %v981 = vunpack.c.l.b16 %v885
      %v982 = vunpack.c.l.b16 %v886
      %v983 = vunpack.c.l.b16 %v887
      %v984 = vunpack.c.l.b16 %v888
      %v985 = vunpack.c.l.b16 %v889
      %v986 = vunpack.c.l.b16 %v890
      %v987 = vunpack.c.l.b16 %v891
      %v988 = vunpack.c.l.b16 %v892
      %v989 = vunpack.c.l.b16 %v893
      %v990 = vunpack.c.l.b16 %v894
      %v991 = vunpack.c.l.b16 %v895
      %v992 = vunpack.c.l.b16 %v896
      %v993 = vunpack.c.l.b16 %v897
      %v994 = vunpack.c.l.b16 %v898
      %v995 = vunpack.c.l.b16 %v899
      %v996 = vunpack.c.l.b16 %v900
      %v997 = vunpack.c.l.b16 %v901
      %v998 = vpack.c.b16 %v951, %v950
      %v999 = vpack.c.b16 %v953, %v952
      %v1000 = vpack.c.b16 %v955, %v954
      %v1001 = vpack.c.b16 %v957, %v956
      %v1002 = vpack.c.b16 %v959, %v958
      %v1003 = vpack.c.b16 %v961, %v960
      %v1004 = vpack.c.b16 %v963, %v962
      %v1005 = vpack.c.b16 %v965, %v964
      %v1006 = vpack.c.b16 %v967, %v966
      %v1007 = vpack.c.b16 %v969, %v968
      %v1008 = vpack.c.b16 %v971, %v970
      %v1009 = vpack.c.b16 %v973, %v972
      %v1010 = vpack.c.b16 %v975, %v974
      %v1011 = vpack.c.b16 %v977, %v976
      %v1012 = vpack.c.b16 %v979, %v978
      %v1013 = vpack.c.b16 %v981, %v980
      %v1014 = vpack.c.b16 %v983, %v982
      %v1015 = vpack.c.b16 %v985, %v984
      %v1016 = vpack.c.b16 %v987, %v986
      %v1017 = vpack.c.b16 %v989, %v988
      %v1018 = vpack.c.b16 %v991, %v990
      %v1019 = vpack.c.b16 %v993, %v992
      %v1020 = vpack.c.b16 %v995, %v994
      %v1021 = vpack.c.b16 %v997, %v996
      %1046 = vmatprep.subr.bf16.mxu0 0
      %1047 = vmatpush1.bf16.msra.mxu0 %v998
      %1048 = vmatprep.subr.bf16.mxu0 0
      %1049 = vmatpush1.bf16.msra.mxu0 %v999
      %1050 = vmatprep.subr.bf16.mxu0 0
      %1051 = vmatpush1.bf16.msra.mxu0 %v1000
      %1052 = vmatprep.subr.bf16.mxu0 0
      %1053 = vmatpush1.bf16.msra.mxu0 %v1001
      %1054 = vmatprep.subr.bf16.mxu0 0
      %1055 = vmatpush1.bf16.msra.mxu0 %v1002
      %1056 = vmatprep.subr.bf16.mxu0 0
      %1057 = vmatpush1.bf16.msra.mxu0 %v1003
      %1058 = vmatprep.subr.bf16.mxu0 0
      %1059 = vmatpush1.bf16.msra.mxu0 %v1004
      %1060 = vmatprep.subr.bf16.mxu0 0
      %1061 = vmatpush1.bf16.msra.mxu0 %v1005
      %1062 = vmatprep.subr.bf16.mxu0 0
      %1063 = vmatpush1.bf16.msra.mxu0 %v1006
      %1064 = vmatprep.subr.bf16.mxu0 0
      %1065 = vmatpush1.bf16.msra.mxu0 %v1007
      %1066 = vmatprep.subr.bf16.mxu0 0
      %1067 = vmatpush1.bf16.msra.mxu0 %v1008
      %1068 = vmatprep.subr.bf16.mxu0 0
      %1069 = vmatpush1.bf16.msra.mxu0 %v1009
      %1070 = vmatprep.subr.bf16.mxu0 0
      %1071 = vmatpush1.bf16.msra.mxu0 %v1010
      %1072 = vmatprep.subr.bf16.mxu0 0
      %1073 = vmatpush1.bf16.msra.mxu0 %v1011
      %1074 = vmatprep.subr.bf16.mxu0 0
      %1075 = vmatpush1.bf16.msra.mxu0 %v1012
      %1076 = vmatprep.subr.bf16.mxu0 0
      %1077 = vmatpush1.bf16.msra.mxu0 %v1013
      %1078 = vmatprep.mubr.bf16.mxu0 %v637
      %1079 = vmatmul.mubr.bf16.gmra.mrb[0].mxu0 %v594
      %v1080 = vpop.f32.mrb[0].mxu0
      %v1081 = vadd.f32 0.0, %v1080
      %v1082 = vpop.f32.mrb[0].mxu0
      %v1083 = vpop.f32.mrb[0].mxu0
      %v1084 = vadd.f32 0.0, %v1083
      %v1085 = vpop.f32.mrb[0].mxu0
      %1086 = vmatprep.mubr.bf16.mxu0 %v649
      %1087 = vmatmul.mubr.bf16.gmra.mrb[0].mxu0 %v595
      %v1088 = vpop.f32.mrb[0].mxu0
      %v1089 = vadd.f32 0.0, %v1088
      %v1090 = vpop.f32.mrb[0].mxu0
      %v1091 = vpop.f32.mrb[0].mxu0
      %v1092 = vadd.f32 0.0, %v1091
      %v1093 = vpop.f32.mrb[0].mxu0
      %1094 = vmatprep.mubr.bf16.mxu0 %v661
      %1095 = vmatmul.mubr.bf16.gmra.mrb[0].mxu0 %v596
      %v1096 = vpop.f32.mrb[0].mxu0
      %v1097 = vadd.f32 0.0, %v1096
      %v1098 = vpop.f32.mrb[0].mxu0
      %v1099 = vpop.f32.mrb[0].mxu0
      %v1100 = vadd.f32 0.0, %v1099
      %v1101 = vpop.f32.mrb[0].mxu0
      %1102 = vmatprep.mubr.bf16.mxu0 %v673
      %1103 = vmatmul.mubr.bf16.gmra.mrb[0].mxu0 %v597
      %v1104 = vpop.f32.mrb[0].mxu0
      %v1105 = vadd.f32 0.0, %v1104
      %v1106 = vpop.f32.mrb[0].mxu0
      %v1107 = vpop.f32.mrb[0].mxu0
      %v1108 = vadd.f32 0.0, %v1107
      %v1109 = vpop.f32.mrb[0].mxu0
      %1110 = vmatprep.mubr.bf16.mxu0 %v685
      %1111 = vmatmul.mubr.bf16.gmra.mrb[0].mxu0 %v598
      %v1112 = vpop.f32.mrb[0].mxu0
      %v1113 = vadd.f32 0.0, %v1112
      %v1114 = vpop.f32.mrb[0].mxu0
      %v1115 = vpop.f32.mrb[0].mxu0
      %v1116 = vadd.f32 0.0, %v1115
      %v1117 = vpop.f32.mrb[0].mxu0
      %1118 = vmatprep.mubr.bf16.mxu0 %v697
      %1119 = vmatmul.mubr.bf16.gmra.mrb[0].mxu0 %v599
      %v1120 = vpop.f32.mrb[0].mxu0
      %v1121 = vadd.f32 0.0, %v1120
      %v1122 = vpop.f32.mrb[0].mxu0
      %v1123 = vpop.f32.mrb[0].mxu0
      %v1124 = vadd.f32 0.0, %v1123
      %v1125 = vpop.f32.mrb[0].mxu0
      %1126 = vmatprep.mubr.bf16.mxu0 %v709
      %1127 = vmatmul.mubr.bf16.gmra.mrb[0].mxu0 %v600
      %v1128 = vpop.f32.mrb[0].mxu0
      %v1129 = vadd.f32 0.0, %v1128
      %v1130 = vpop.f32.mrb[0].mxu0
      %v1131 = vpop.f32.mrb[0].mxu0
      %v1132 = vadd.f32 0.0, %v1131
      %v1133 = vpop.f32.mrb[0].mxu0
      %1134 = vmatprep.mubr.bf16.mxu0 %v721
      %1135 = vmatmul.mubr.bf16.gmra.mrb[0].mxu0 %v601
      %v1136 = vpop.f32.mrb[0].mxu0
      %v1137 = vadd.f32 0.0, %v1136
      %v1138 = vpop.f32.mrb[0].mxu0
      %v1139 = vpop.f32.mrb[0].mxu0
      %v1140 = vadd.f32 0.0, %v1139
      %v1141 = vpop.f32.mrb[0].mxu0
      %1142 = vdwg.mxu0
      %1143 = vmatprep.subr.bf16.mxu0 0
      %1144 = vmatpush1.bf16.msra.mxu0 %v1014
      %1145 = vmatprep.subr.bf16.mxu0 0
      %1146 = vmatpush1.bf16.msra.mxu0 %v1015
      %1147 = vmatprep.subr.bf16.mxu0 0
      %1148 = vmatpush1.bf16.msra.mxu0 %v1016
      %1149 = vmatprep.subr.bf16.mxu0 0
      %1150 = vmatpush1.bf16.msra.mxu0 %v1017
      %1151 = vmatprep.subr.bf16.mxu0 0
      %1152 = vmatpush1.bf16.msra.mxu0 %v1018
      %1153 = vmatprep.subr.bf16.mxu0 0
      %1154 = vmatpush1.bf16.msra.mxu0 %v1019
      %1155 = vmatprep.subr.bf16.mxu0 0
      %1156 = vmatpush1.bf16.msra.mxu0 %v1020
      %1157 = vmatprep.subr.bf16.mxu0 0
      %1158 = vmatpush1.bf16.msra.mxu0 %v1021
      %1159 = vmatprep.subr.bf16.mxu0 0
      %1160 = vmatpush1.bf16.msra.mxu0 0
      %1161 = vmatprep.subr.bf16.mxu0 0
      %1162 = vmatpush1.bf16.msra.mxu0 0
      %1163 = vmatprep.subr.bf16.mxu0 0
      %1164 = vmatpush1.bf16.msra.mxu0 0
      %1165 = vmatprep.subr.bf16.mxu0 0
      %1166 = vmatpush1.bf16.msra.mxu0 0
      %1167 = vmatprep.subr.bf16.mxu0 0
      %1168 = vmatpush1.bf16.msra.mxu0 0
      %1169 = vmatprep.subr.bf16.mxu0 0
      %1170 = vmatpush1.bf16.msra.mxu0 0
      %1171 = vmatprep.subr.bf16.mxu0 0
      %1172 = vmatpush1.bf16.msra.mxu0 0
      %1173 = vmatprep.subr.bf16.mxu0 0
      %1174 = vmatpush1.bf16.msra.mxu0 0
      %1175 = vmatprep.mubr.bf16.mxu0 0
      %1176 = vmatmul.mubr.bf16.gmra.mrb[0].mxu0 %v770
      %v1177 = vpop.f32.mrb[0].mxu0
      %v1178 = vadd.f32 %v1081, %v1177
      %v1179 = vpop.f32.mrb[0].mxu0
      %v1180 = vpop.f32.mrb[0].mxu0
      %v1181 = vadd.f32 %v1084, %v1180
      %v1182 = vpop.f32.mrb[0].mxu0
      %1183 = vmatprep.mubr.bf16.mxu0 0
      %1184 = vmatmul.mubr.bf16.gmra.mrb[0].mxu0 %v773
      %v1185 = vpop.f32.mrb[0].mxu0
      %v1186 = vadd.f32 %v1089, %v1185
      %v1187 = vpop.f32.mrb[0].mxu0
      %v1188 = vpop.f32.mrb[0].mxu0
      %v1189 = vadd.f32 %v1092, %v1188
      %v1190 = vpop.f32.mrb[0].mxu0
      %1191 = vmatprep.mubr.bf16.mxu0 0
      %1192 = vmatmul.mubr.bf16.gmra.mrb[0].mxu0 %v776
      %v1193 = vpop.f32.mrb[0].mxu0
      %v1194 = vadd.f32 %v1097, %v1193
      %v1195 = vpop.f32.mrb[0].mxu0
      %v1196 = vpop.f32.mrb[0].mxu0
      %v1197 = vadd.f32 %v1100, %v1196
      %v1198 = vpop.f32.mrb[0].mxu0
      %1199 = vmatprep.mubr.bf16.mxu0 0
      %1200 = vmatmul.mubr.bf16.gmra.mrb[0].mxu0 %v779
      %v1201 = vpop.f32.mrb[0].mxu0
      %v1202 = vadd.f32 %v1105, %v1201
      %v1203 = vpop.f32.mrb[0].mxu0
      %v1204 = vpop.f32.mrb[0].mxu0
      %v1205 = vadd.f32 %v1108, %v1204
      %v1206 = vpop.f32.mrb[0].mxu0
      %1207 = vmatprep.mubr.bf16.mxu0 0
      %1208 = vmatmul.mubr.bf16.gmra.mrb[0].mxu0 %v782
      %v1209 = vpop.f32.mrb[0].mxu0
      %v1210 = vadd.f32 %v1113, %v1209
      %v1211 = vpop.f32.mrb[0].mxu0
      %v1212 = vpop.f32.mrb[0].mxu0
      %v1213 = vadd.f32 %v1116, %v1212
      %v1214 = vpop.f32.mrb[0].mxu0
      %1215 = vmatprep.mubr.bf16.mxu0 0
      %1216 = vmatmul.mubr.bf16.gmra.mrb[0].mxu0 %v785
      %v1217 = vpop.f32.mrb[0].mxu0
      %v1218 = vadd.f32 %v1121, %v1217
      %v1219 = vpop.f32.mrb[0].mxu0
      %v1220 = vpop.f32.mrb[0].mxu0
      %v1221 = vadd.f32 %v1124, %v1220
      %v1222 = vpop.f32.mrb[0].mxu0
      %1223 = vmatprep.mubr.bf16.mxu0 0
      %1224 = vmatmul.mubr.bf16.gmra.mrb[0].mxu0 %v788
      %v1225 = vpop.f32.mrb[0].mxu0
      %v1226 = vadd.f32 %v1129, %v1225
      %v1227 = vpop.f32.mrb[0].mxu0
      %v1228 = vpop.f32.mrb[0].mxu0
      %v1229 = vadd.f32 %v1132, %v1228
      %v1230 = vpop.f32.mrb[0].mxu0
      %1231 = vmatprep.mubr.bf16.mxu0 0
      %1232 = vmatmul.mubr.bf16.gmra.mrb[0].mxu0 %v791
      %v1233 = vpop.f32.mrb[0].mxu0
      %v1234 = vadd.f32 %v1137, %v1233
      %v1235 = vpop.f32.mrb[0].mxu0
      %v1236 = vpop.f32.mrb[0].mxu0
      %v1237 = vadd.f32 %v1140, %v1236
      %v1238 = vpop.f32.mrb[0].mxu0
      %1239 = vdwg.mxu0
      %v1288 = vunpack.c.l.b16 %v805
      %v1289 = vunpack.c.l.b16 %v806
      %v1290 = vunpack.c.l.b16 %v807
      %v1291 = vunpack.c.l.b16 %v808
      %v1292 = vunpack.c.l.b16 %v809
      %v1293 = vunpack.c.l.b16 %v810
      %v1294 = vunpack.c.l.b16 %v811
      %v1295 = vunpack.c.l.b16 %v812
      %v1296 = vunpack.c.l.b16 %v813
      %v1297 = vunpack.c.l.b16 %v814
      %v1298 = vunpack.c.l.b16 %v815
      %v1299 = vunpack.c.l.b16 %v816
      %v1300 = vunpack.c.l.b16 %v817
      %v1301 = vunpack.c.l.b16 %v818
      %v1302 = vunpack.c.l.b16 %v819
      %v1303 = vunpack.c.l.b16 %v820
      %v1304 = vunpack.c.l.b16 %v821
      %v1305 = vunpack.c.l.b16 %v822
      %v1306 = vunpack.c.l.b16 %v823
      %v1307 = vunpack.c.l.b16 %v824
      %v1308 = vunpack.c.l.b16 %v825
      %v1309 = vunpack.c.l.b16 %v826
      %v1310 = vunpack.c.l.b16 %v827
      %v1311 = vunpack.c.l.b16 %v828
      %v1312 = vunpack.c.l.b16 %v829
      %v1313 = vunpack.c.l.b16 %v830
      %v1314 = vunpack.c.l.b16 %v831
      %v1315 = vunpack.c.l.b16 %v832
      %v1316 = vunpack.c.l.b16 %v833
      %v1317 = vunpack.c.l.b16 %v834
      %v1318 = vunpack.c.l.b16 %v835
      %v1319 = vunpack.c.l.b16 %v836
      %v1320 = vunpack.c.l.b16 %v837
      %v1321 = vunpack.c.l.b16 %v838
      %v1322 = vunpack.c.l.b16 %v839
      %v1323 = vunpack.c.l.b16 %v840
      %v1324 = vunpack.c.l.b16 %v841
      %v1325 = vunpack.c.l.b16 %v842
      %v1326 = vunpack.c.l.b16 %v843
      %v1327 = vunpack.c.l.b16 %v844
      %v1328 = vunpack.c.l.b16 %v845
      %v1329 = vunpack.c.l.b16 %v846
      %v1330 = vunpack.c.l.b16 %v847
      %v1331 = vunpack.c.l.b16 %v848
      %v1332 = vunpack.c.l.b16 %v849
      %v1333 = vunpack.c.l.b16 %v850
      %v1334 = vunpack.c.l.b16 %v851
      %v1335 = vunpack.c.l.b16 %v852
      %v1336 = vpack.c.b16 %v1289, %v1288
      %v1337 = vpack.c.b16 %v1291, %v1290
      %v1338 = vpack.c.b16 %v1293, %v1292
      %v1339 = vpack.c.b16 %v1295, %v1294
      %v1340 = vpack.c.b16 %v1297, %v1296
      %v1341 = vpack.c.b16 %v1299, %v1298
      %v1342 = vpack.c.b16 %v1301, %v1300
      %v1343 = vpack.c.b16 %v1303, %v1302
      %v1344 = vpack.c.b16 %v1305, %v1304
      %v1345 = vpack.c.b16 %v1307, %v1306
      %v1346 = vpack.c.b16 %v1309, %v1308
      %v1347 = vpack.c.b16 %v1311, %v1310
      %v1348 = vpack.c.b16 %v1313, %v1312
      %v1349 = vpack.c.b16 %v1315, %v1314
      %v1350 = vpack.c.b16 %v1317, %v1316
      %v1351 = vpack.c.b16 %v1319, %v1318
      %v1352 = vpack.c.b16 %v1321, %v1320
      %v1353 = vpack.c.b16 %v1323, %v1322
      %v1354 = vpack.c.b16 %v1325, %v1324
      %v1355 = vpack.c.b16 %v1327, %v1326
      %v1356 = vpack.c.b16 %v1329, %v1328
      %v1357 = vpack.c.b16 %v1331, %v1330
      %v1358 = vpack.c.b16 %v1333, %v1332
      %v1359 = vpack.c.b16 %v1335, %v1334
      %1384 = vmatprep.subr.bf16.mxu0 0
      %1385 = vmatpush1.bf16.msra.mxu0 %v1336
      %1386 = vmatprep.subr.bf16.mxu0 0
      %1387 = vmatpush1.bf16.msra.mxu0 %v1337
      %1388 = vmatprep.subr.bf16.mxu0 0
      %1389 = vmatpush1.bf16.msra.mxu0 %v1338
      %1390 = vmatprep.subr.bf16.mxu0 0
      %1391 = vmatpush1.bf16.msra.mxu0 %v1339
      %1392 = vmatprep.subr.bf16.mxu0 0
      %1393 = vmatpush1.bf16.msra.mxu0 %v1340
      %1394 = vmatprep.subr.bf16.mxu0 0
      %1395 = vmatpush1.bf16.msra.mxu0 %v1341
      %1396 = vmatprep.subr.bf16.mxu0 0
      %1397 = vmatpush1.bf16.msra.mxu0 %v1342
      %1398 = vmatprep.subr.bf16.mxu0 0
      %1399 = vmatpush1.bf16.msra.mxu0 %v1343
      %1400 = vmatprep.subr.bf16.mxu0 0
      %1401 = vmatpush1.bf16.msra.mxu0 %v1344
      %1402 = vmatprep.subr.bf16.mxu0 0
      %1403 = vmatpush1.bf16.msra.mxu0 %v1345
      %1404 = vmatprep.subr.bf16.mxu0 0
      %1405 = vmatpush1.bf16.msra.mxu0 %v1346
      %1406 = vmatprep.subr.bf16.mxu0 0
      %1407 = vmatpush1.bf16.msra.mxu0 %v1347
      %1408 = vmatprep.subr.bf16.mxu0 0
      %1409 = vmatpush1.bf16.msra.mxu0 %v1348
      %1410 = vmatprep.subr.bf16.mxu0 0
      %1411 = vmatpush1.bf16.msra.mxu0 %v1349
      %1412 = vmatprep.subr.bf16.mxu0 0
      %1413 = vmatpush1.bf16.msra.mxu0 %v1350
      %1414 = vmatprep.subr.bf16.mxu0 0
      %1415 = vmatpush1.bf16.msra.mxu0 %v1351
      %1416 = vmatprep.mubr.bf16.mxu0 %v625
      %1417 = vmatmul.mubr.bf16.gmra.mrb[0].mxu0 %v593
      %v1418 = vpop.f32.mrb[0].mxu0
      %v1419 = vadd.f32 %v1178, %v1418
      %v1420 = vpop.f32.mrb[0].mxu0
      %v1421 = vpop.f32.mrb[0].mxu0
      %v1422 = vadd.f32 %v1181, %v1421
      %v1423 = vpop.f32.mrb[0].mxu0
      %1424 = vmatprep.mubr.bf16.mxu0 %v637
      %1425 = vmatmul.mubr.bf16.gmra.mrb[0].mxu0 %v594
      %v1426 = vpop.f32.mrb[0].mxu0
      %v1427 = vadd.f32 %v1186, %v1426
      %v1428 = vpop.f32.mrb[0].mxu0
      %v1429 = vpop.f32.mrb[0].mxu0
      %v1430 = vadd.f32 %v1189, %v1429
      %v1431 = vpop.f32.mrb[0].mxu0
      %1432 = vmatprep.mubr.bf16.mxu0 %v649
      %1433 = vmatmul.mubr.bf16.gmra.mrb[0].mxu0 %v595
      %v1434 = vpop.f32.mrb[0].mxu0
      %v1435 = vadd.f32 %v1194, %v1434
      %v1436 = vpop.f32.mrb[0].mxu0
      %v1437 = vpop.f32.mrb[0].mxu0
      %v1438 = vadd.f32 %v1197, %v1437
      %v1439 = vpop.f32.mrb[0].mxu0
      %1440 = vmatprep.mubr.bf16.mxu0 %v661
      %1441 = vmatmul.mubr.bf16.gmra.mrb[0].mxu0 %v596
      %v1442 = vpop.f32.mrb[0].mxu0
      %v1443 = vadd.f32 %v1202, %v1442
      %v1444 = vpop.f32.mrb[0].mxu0
      %v1445 = vpop.f32.mrb[0].mxu0
      %v1446 = vadd.f32 %v1205, %v1445
      %v1447 = vpop.f32.mrb[0].mxu0
      %1448 = vmatprep.mubr.bf16.mxu0 %v673
      %1449 = vmatmul.mubr.bf16.gmra.mrb[0].mxu0 %v597
      %v1450 = vpop.f32.mrb[0].mxu0
      %v1451 = vadd.f32 %v1210, %v1450
      %v1452 = vpop.f32.mrb[0].mxu0
      %v1453 = vpop.f32.mrb[0].mxu0
      %v1454 = vadd.f32 %v1213, %v1453
      %v1455 = vpop.f32.mrb[0].mxu0
      %1456 = vmatprep.mubr.bf16.mxu0 %v685
      %1457 = vmatmul.mubr.bf16.gmra.mrb[0].mxu0 %v598
      %v1458 = vpop.f32.mrb[0].mxu0
      %v1459 = vadd.f32 %v1218, %v1458
      %v1460 = vpop.f32.mrb[0].mxu0
      %v1461 = vpop.f32.mrb[0].mxu0
      %v1462 = vadd.f32 %v1221, %v1461
      %v1463 = vpop.f32.mrb[0].mxu0
      %1464 = vmatprep.mubr.bf16.mxu0 %v697
      %1465 = vmatmul.mubr.bf16.gmra.mrb[0].mxu0 %v599
      %v1466 = vpop.f32.mrb[0].mxu0
      %v1467 = vadd.f32 %v1226, %v1466
      %v1468 = vpop.f32.mrb[0].mxu0
      %v1469 = vpop.f32.mrb[0].mxu0
      %v1470 = vadd.f32 %v1229, %v1469
      %v1471 = vpop.f32.mrb[0].mxu0
      %1472 = vmatprep.mubr.bf16.mxu0 %v709
      %1473 = vmatmul.mubr.bf16.gmra.mrb[0].mxu0 %v600
      %v1474 = vpop.f32.mrb[0].mxu0
      %v1475 = vadd.f32 %v1234, %v1474
      %v1476 = vpop.f32.mrb[0].mxu0
      %v1477 = vpop.f32.mrb[0].mxu0
      %v1478 = vadd.f32 %v1237, %v1477
      %v1479 = vpop.f32.mrb[0].mxu0
      %1480 = vdwg.mxu0
      %1481 = vmatprep.subr.bf16.mxu0 0
      %1482 = vmatpush1.bf16.msra.mxu0 %v1352
      %1483 = vmatprep.subr.bf16.mxu0 0
      %1484 = vmatpush1.bf16.msra.mxu0 %v1353
      %1485 = vmatprep.subr.bf16.mxu0 0
      %1486 = vmatpush1.bf16.msra.mxu0 %v1354
      %1487 = vmatprep.subr.bf16.mxu0 0
      %1488 = vmatpush1.bf16.msra.mxu0 %v1355
      %1489 = vmatprep.subr.bf16.mxu0 0
      %1490 = vmatpush1.bf16.msra.mxu0 %v1356
      %1491 = vmatprep.subr.bf16.mxu0 0
      %1492 = vmatpush1.bf16.msra.mxu0 %v1357
      %1493 = vmatprep.subr.bf16.mxu0 0
      %1494 = vmatpush1.bf16.msra.mxu0 %v1358
      %1495 = vmatprep.subr.bf16.mxu0 0
      %1496 = vmatpush1.bf16.msra.mxu0 %v1359
      %1497 = vmatprep.subr.bf16.mxu0 0
      %1498 = vmatpush1.bf16.msra.mxu0 0
      %1499 = vmatprep.subr.bf16.mxu0 0
      %1500 = vmatpush1.bf16.msra.mxu0 0
      %1501 = vmatprep.subr.bf16.mxu0 0
      %1502 = vmatpush1.bf16.msra.mxu0 0
      %1503 = vmatprep.subr.bf16.mxu0 0
      %1504 = vmatpush1.bf16.msra.mxu0 0
      %1505 = vmatprep.subr.bf16.mxu0 0
      %1506 = vmatpush1.bf16.msra.mxu0 0
      %1507 = vmatprep.subr.bf16.mxu0 0
      %1508 = vmatpush1.bf16.msra.mxu0 0
      %1509 = vmatprep.subr.bf16.mxu0 0
      %1510 = vmatpush1.bf16.msra.mxu0 0
      %1511 = vmatprep.subr.bf16.mxu0 0
      %1512 = vmatpush1.bf16.msra.mxu0 0
      %1513 = vmatprep.mubr.bf16.mxu0 0
      %1514 = vmatmul.mubr.bf16.gmra.mrb[0].mxu0 %v767
      %v1515 = vpop.f32.mrb[0].mxu0
      %v1516 = vadd.f32 %v1419, %v1515
      %v1517 = vpop.f32.mrb[0].mxu0
      %v1518 = vpop.f32.mrb[0].mxu0
      %v1519 = vadd.f32 %v1422, %v1518
      %v1520 = vpop.f32.mrb[0].mxu0
      %1521 = vmatprep.mubr.bf16.mxu0 0
      %1522 = vmatmul.mubr.bf16.gmra.mrb[0].mxu0 %v770
      %v1523 = vpop.f32.mrb[0].mxu0
      %v1524 = vadd.f32 %v1427, %v1523
      %v1525 = vpop.f32.mrb[0].mxu0
      %v1526 = vpop.f32.mrb[0].mxu0
      %v1527 = vadd.f32 %v1430, %v1526
      %v1528 = vpop.f32.mrb[0].mxu0
      %1529 = vmatprep.mubr.bf16.mxu0 0
      %1530 = vmatmul.mubr.bf16.gmra.mrb[0].mxu0 %v773
      %v1531 = vpop.f32.mrb[0].mxu0
      %v1532 = vadd.f32 %v1435, %v1531
      %v1533 = vpop.f32.mrb[0].mxu0
      %v1534 = vpop.f32.mrb[0].mxu0
      %v1535 = vadd.f32 %v1438, %v1534
      %v1536 = vpop.f32.mrb[0].mxu0
      %1537 = vmatprep.mubr.bf16.mxu0 0
      %1538 = vmatmul.mubr.bf16.gmra.mrb[0].mxu0 %v776
      %v1539 = vpop.f32.mrb[0].mxu0
      %v1540 = vadd.f32 %v1443, %v1539
      %v1541 = vpop.f32.mrb[0].mxu0
      %v1542 = vpop.f32.mrb[0].mxu0
      %v1543 = vadd.f32 %v1446, %v1542
      %v1544 = vpop.f32.mrb[0].mxu0
      %1545 = vmatprep.mubr.bf16.mxu0 0
      %1546 = vmatmul.mubr.bf16.gmra.mrb[0].mxu0 %v779
      %v1547 = vpop.f32.mrb[0].mxu0
      %v1548 = vadd.f32 %v1451, %v1547
      %v1549 = vpop.f32.mrb[0].mxu0
      %v1550 = vpop.f32.mrb[0].mxu0
      %v1551 = vadd.f32 %v1454, %v1550
      %v1552 = vpop.f32.mrb[0].mxu0
      %1553 = vmatprep.mubr.bf16.mxu0 0
      %1554 = vmatmul.mubr.bf16.gmra.mrb[0].mxu0 %v782
      %v1555 = vpop.f32.mrb[0].mxu0
      %v1556 = vadd.f32 %v1459, %v1555
      %v1557 = vpop.f32.mrb[0].mxu0
      %v1558 = vpop.f32.mrb[0].mxu0
      %v1559 = vadd.f32 %v1462, %v1558
      %v1560 = vpop.f32.mrb[0].mxu0
      %1561 = vmatprep.mubr.bf16.mxu0 0
      %1562 = vmatmul.mubr.bf16.gmra.mrb[0].mxu0 %v785
      %v1563 = vpop.f32.mrb[0].mxu0
      %v1564 = vadd.f32 %v1467, %v1563
      %v1565 = vpop.f32.mrb[0].mxu0
      %v1566 = vpop.f32.mrb[0].mxu0
      %v1567 = vadd.f32 %v1470, %v1566
      %v1568 = vpop.f32.mrb[0].mxu0
      %1569 = vmatprep.mubr.bf16.mxu0 0
      %1570 = vmatmul.mubr.bf16.gmra.mrb[0].mxu0 %v788
      %v1571 = vpop.f32.mrb[0].mxu0
      %v1572 = vadd.f32 %v1475, %v1571
      %v1573 = vpop.f32.mrb[0].mxu0
      %v1574 = vpop.f32.mrb[0].mxu0
      %v1575 = vadd.f32 %v1478, %v1574
      %v1576 = vpop.f32.mrb[0].mxu0
      %1577 = vdwg.mxu0
      %s1578 = scalar_lea.vmem %s3, 384
      %v1579 = vld [vmem:[%s1578] sm:$0xf]
      %v1580 = vld [vmem:[%s1578 + $0x4] sm:$0xf]
      %v1581 = vld [vmem:[%s1578 + $0x8] sm:$0xf]
      %v1582 = vld [vmem:[%s1578 + $0xc] sm:$0xf]
      %v1583 = vld [vmem:[%s1578 + $0x10] sm:$0xf]
      %v1584 = vld [vmem:[%s1578 + $0x14] sm:$0xf]
      %v1585 = vld [vmem:[%s1578 + $0x18] sm:$0xf]
      %v1586 = vld [vmem:[%s1578 + $0x1c] sm:$0xf]
      %v1587 = vld [vmem:[%s1578 + $0x20] sm:$0xf]
      %v1588 = vld [vmem:[%s1578 + $0x24] sm:$0xf]
      %v1589 = vld [vmem:[%s1578 + $0x28] sm:$0xf]
      %v1590 = vld [vmem:[%s1578 + $0x2c] sm:$0xf]
      %v1591 = vld [vmem:[%s1578 + $0x30] sm:$0xf]
      %v1592 = vld [vmem:[%s1578 + $0x34] sm:$0xf]
      %v1593 = vld [vmem:[%s1578 + $0x38] sm:$0xf]
      %v1594 = vld [vmem:[%s1578 + $0x3c] sm:$0xf]
      %v1595 = vld [vmem:[%s1578 + $0x40] sm:$0xf]
      %v1596 = vld [vmem:[%s1578 + $0x44] sm:$0xf]
      %v1597 = vld [vmem:[%s1578 + $0x48] sm:$0xf]
      %v1598 = vld [vmem:[%s1578 + $0x4c] sm:$0xf]
      %v1599 = vld [vmem:[%s1578 + $0x50] sm:$0xf]
      %v1600 = vld [vmem:[%s1578 + $0x54] sm:$0xf]
      %v1601 = vld [vmem:[%s1578 + $0x58] sm:$0xf]
      %v1602 = vld [vmem:[%s1578 + $0x5c] sm:$0xf]
      %v1603 = vld [vmem:[%s1578 + $0x60] sm:$0xf]
      %v1604 = vld [vmem:[%s1578 + $0x64] sm:$0xf]
      %v1605 = vld [vmem:[%s1578 + $0x68] sm:$0xf]
      %v1606 = vld [vmem:[%s1578 + $0x6c] sm:$0xf]
      %v1607 = vld [vmem:[%s1578 + $0x70] sm:$0xf]
      %v1608 = vld [vmem:[%s1578 + $0x74] sm:$0xf]
      %v1609 = vld [vmem:[%s1578 + $0x78] sm:$0xf]
      %v1610 = vld [vmem:[%s1578 + $0x7c] sm:$0xf]
      %v1611 = vld [vmem:[%s1578 + $0x80] sm:$0xf]
      %v1612 = vld [vmem:[%s1578 + $0x84] sm:$0xf]
      %v1613 = vld [vmem:[%s1578 + $0x88] sm:$0xf]
      %v1614 = vld [vmem:[%s1578 + $0x8c] sm:$0xf]
      %v1615 = vld [vmem:[%s1578 + $0x90] sm:$0xf]
      %v1616 = vld [vmem:[%s1578 + $0x94] sm:$0xf]
      %v1617 = vld [vmem:[%s1578 + $0x98] sm:$0xf]
      %v1618 = vld [vmem:[%s1578 + $0x9c] sm:$0xf]
      %v1619 = vld [vmem:[%s1578 + $0xa0] sm:$0xf]
      %v1620 = vld [vmem:[%s1578 + $0xa4] sm:$0xf]
      %v1621 = vld [vmem:[%s1578 + $0xa8] sm:$0xf]
      %v1622 = vld [vmem:[%s1578 + $0xac] sm:$0xf]
      %v1623 = vld [vmem:[%s1578 + $0xb0] sm:$0xf]
      %v1624 = vld [vmem:[%s1578 + $0xb4] sm:$0xf]
      %v1625 = vld [vmem:[%s1578 + $0xb8] sm:$0xf]
      %v1626 = vld [vmem:[%s1578 + $0xbc] sm:$0xf]
      %v1675 = vunpack.c.l.b16 %v1579
      %v1676 = vunpack.c.l.b16 %v1580
      %v1677 = vunpack.c.l.b16 %v1581
      %v1678 = vunpack.c.l.b16 %v1582
      %v1679 = vunpack.c.l.b16 %v1583
      %v1680 = vunpack.c.l.b16 %v1584
      %v1681 = vunpack.c.l.b16 %v1585
      %v1682 = vunpack.c.l.b16 %v1586
      %v1683 = vunpack.c.l.b16 %v1587
      %v1684 = vunpack.c.l.b16 %v1588
      %v1685 = vunpack.c.l.b16 %v1589
      %v1686 = vunpack.c.l.b16 %v1590
      %v1687 = vunpack.c.l.b16 %v1591
      %v1688 = vunpack.c.l.b16 %v1592
      %v1689 = vunpack.c.l.b16 %v1593
      %v1690 = vunpack.c.l.b16 %v1594
      %v1691 = vunpack.c.l.b16 %v1595
      %v1692 = vunpack.c.l.b16 %v1596
      %v1693 = vunpack.c.l.b16 %v1597
      %v1694 = vunpack.c.l.b16 %v1598
      %v1695 = vunpack.c.l.b16 %v1599
      %v1696 = vunpack.c.l.b16 %v1600
      %v1697 = vunpack.c.l.b16 %v1601
      %v1698 = vunpack.c.l.b16 %v1602
      %v1699 = vunpack.c.l.b16 %v1603
      %v1700 = vunpack.c.l.b16 %v1604
      %v1701 = vunpack.c.l.b16 %v1605
      %v1702 = vunpack.c.l.b16 %v1606
      %v1703 = vunpack.c.l.b16 %v1607
      %v1704 = vunpack.c.l.b16 %v1608
      %v1705 = vunpack.c.l.b16 %v1609
      %v1706 = vunpack.c.l.b16 %v1610
      %v1707 = vunpack.c.l.b16 %v1611
      %v1708 = vunpack.c.l.b16 %v1612
      %v1709 = vunpack.c.l.b16 %v1613
      %v1710 = vunpack.c.l.b16 %v1614
      %v1711 = vunpack.c.l.b16 %v1615
      %v1712 = vunpack.c.l.b16 %v1616
      %v1713 = vunpack.c.l.b16 %v1617
      %v1714 = vunpack.c.l.b16 %v1618
      %v1715 = vunpack.c.l.b16 %v1619
      %v1716 = vunpack.c.l.b16 %v1620
      %v1717 = vunpack.c.l.b16 %v1621
      %v1718 = vunpack.c.l.b16 %v1622
      %v1719 = vunpack.c.l.b16 %v1623
      %v1720 = vunpack.c.l.b16 %v1624
      %v1721 = vunpack.c.l.b16 %v1625
      %v1722 = vunpack.c.l.b16 %v1626
      %v1723 = vpack.c.b16 %v1676, %v1675
      %v1724 = vpack.c.b16 %v1678, %v1677
      %v1725 = vpack.c.b16 %v1680, %v1679
      %v1726 = vpack.c.b16 %v1682, %v1681
      %v1727 = vpack.c.b16 %v1684, %v1683
      %v1728 = vpack.c.b16 %v1686, %v1685
      %v1729 = vpack.c.b16 %v1688, %v1687
      %v1730 = vpack.c.b16 %v1690, %v1689
      %v1731 = vpack.c.b16 %v1692, %v1691
      %v1732 = vpack.c.b16 %v1694, %v1693
      %v1733 = vpack.c.b16 %v1696, %v1695
      %v1734 = vpack.c.b16 %v1698, %v1697
      %v1735 = vpack.c.b16 %v1700, %v1699
      %v1736 = vpack.c.b16 %v1702, %v1701
      %v1737 = vpack.c.b16 %v1704, %v1703
      %v1738 = vpack.c.b16 %v1706, %v1705
      %v1739 = vpack.c.b16 %v1708, %v1707
      %v1740 = vpack.c.b16 %v1710, %v1709
      %v1741 = vpack.c.b16 %v1712, %v1711
      %v1742 = vpack.c.b16 %v1714, %v1713
      %v1743 = vpack.c.b16 %v1716, %v1715
      %v1744 = vpack.c.b16 %v1718, %v1717
      %v1745 = vpack.c.b16 %v1720, %v1719
      %v1746 = vpack.c.b16 %v1722, %v1721
      %1771 = vmatprep.subr.bf16.mxu0 0
      %1772 = vmatpush1.bf16.msra.mxu0 %v1723
      %1773 = vmatprep.subr.bf16.mxu0 0
      %1774 = vmatpush1.bf16.msra.mxu0 %v1724
      %1775 = vmatprep.subr.bf16.mxu0 0
      %1776 = vmatpush1.bf16.msra.mxu0 %v1725
      %1777 = vmatprep.subr.bf16.mxu0 0
      %1778 = vmatpush1.bf16.msra.mxu0 %v1726
      %1779 = vmatprep.subr.bf16.mxu0 0
      %1780 = vmatpush1.bf16.msra.mxu0 %v1727
      %1781 = vmatprep.subr.bf16.mxu0 0
      %1782 = vmatpush1.bf16.msra.mxu0 %v1728
      %1783 = vmatprep.subr.bf16.mxu0 0
      %1784 = vmatpush1.bf16.msra.mxu0 %v1729
      %1785 = vmatprep.subr.bf16.mxu0 0
      %1786 = vmatpush1.bf16.msra.mxu0 %v1730
      %1787 = vmatprep.subr.bf16.mxu0 0
      %1788 = vmatpush1.bf16.msra.mxu0 %v1731
      %1789 = vmatprep.subr.bf16.mxu0 0
      %1790 = vmatpush1.bf16.msra.mxu0 %v1732
      %1791 = vmatprep.subr.bf16.mxu0 0
      %1792 = vmatpush1.bf16.msra.mxu0 %v1733
      %1793 = vmatprep.subr.bf16.mxu0 0
      %1794 = vmatpush1.bf16.msra.mxu0 %v1734
      %1795 = vmatprep.subr.bf16.mxu0 0
      %1796 = vmatpush1.bf16.msra.mxu0 %v1735
      %1797 = vmatprep.subr.bf16.mxu0 0
      %1798 = vmatpush1.bf16.msra.mxu0 %v1736
      %1799 = vmatprep.subr.bf16.mxu0 0
      %1800 = vmatpush1.bf16.msra.mxu0 %v1737
      %1801 = vmatprep.subr.bf16.mxu0 0
      %1802 = vmatpush1.bf16.msra.mxu0 %v1738
      %1803 = vmatprep.mubr.bf16.mxu0 %v649
      %1804 = vmatmul.mubr.bf16.gmra.mrb[0].mxu0 %v595
      %v1805 = vpop.f32.mrb[0].mxu0
      %v1806 = vadd.f32 0.0, %v1805
      %v1807 = vpop.f32.mrb[0].mxu0
      %v1808 = vpop.f32.mrb[0].mxu0
      %v1809 = vadd.f32 0.0, %v1808
      %v1810 = vpop.f32.mrb[0].mxu0
      %1811 = vmatprep.mubr.bf16.mxu0 %v661
      %1812 = vmatmul.mubr.bf16.gmra.mrb[0].mxu0 %v596
      %v1813 = vpop.f32.mrb[0].mxu0
      %v1814 = vadd.f32 0.0, %v1813
      %v1815 = vpop.f32.mrb[0].mxu0
      %v1816 = vpop.f32.mrb[0].mxu0
      %v1817 = vadd.f32 0.0, %v1816
      %v1818 = vpop.f32.mrb[0].mxu0
      %1819 = vmatprep.mubr.bf16.mxu0 %v673
      %1820 = vmatmul.mubr.bf16.gmra.mrb[0].mxu0 %v597
      %v1821 = vpop.f32.mrb[0].mxu0
      %v1822 = vadd.f32 0.0, %v1821
      %v1823 = vpop.f32.mrb[0].mxu0
      %v1824 = vpop.f32.mrb[0].mxu0
      %v1825 = vadd.f32 0.0, %v1824
      %v1826 = vpop.f32.mrb[0].mxu0
      %1827 = vmatprep.mubr.bf16.mxu0 %v685
      %1828 = vmatmul.mubr.bf16.gmra.mrb[0].mxu0 %v598
      %v1829 = vpop.f32.mrb[0].mxu0
      %v1830 = vadd.f32 0.0, %v1829
      %v1831 = vpop.f32.mrb[0].mxu0
      %v1832 = vpop.f32.mrb[0].mxu0
      %v1833 = vadd.f32 0.0, %v1832
      %v1834 = vpop.f32.mrb[0].mxu0
      %1835 = vmatprep.mubr.bf16.mxu0 %v697
      %1836 = vmatmul.mubr.bf16.gmra.mrb[0].mxu0 %v599
      %v1837 = vpop.f32.mrb[0].mxu0
      %v1838 = vadd.f32 0.0, %v1837
      %v1839 = vpop.f32.mrb[0].mxu0
      %v1840 = vpop.f32.mrb[0].mxu0
      %v1841 = vadd.f32 0.0, %v1840
      %v1842 = vpop.f32.mrb[0].mxu0
      %1843 = vmatprep.mubr.bf16.mxu0 %v709
      %1844 = vmatmul.mubr.bf16.gmra.mrb[0].mxu0 %v600
      %v1845 = vpop.f32.mrb[0].mxu0
      %v1846 = vadd.f32 0.0, %v1845
      %v1847 = vpop.f32.mrb[0].mxu0
      %v1848 = vpop.f32.mrb[0].mxu0
      %v1849 = vadd.f32 0.0, %v1848
      %v1850 = vpop.f32.mrb[0].mxu0
      %1851 = vmatprep.mubr.bf16.mxu0 %v721
      %1852 = vmatmul.mubr.bf16.gmra.mrb[0].mxu0 %v601
      %v1853 = vpop.f32.mrb[0].mxu0
      %v1854 = vadd.f32 0.0, %v1853
      %v1855 = vpop.f32.mrb[0].mxu0
      %v1856 = vpop.f32.mrb[0].mxu0
      %v1857 = vadd.f32 0.0, %v1856
      %v1858 = vpop.f32.mrb[0].mxu0
      %1859 = vmatprep.mubr.bf16.mxu0 %v733
      %1860 = vmatmul.mubr.bf16.gmra.mrb[0].mxu0 %v602
      %v1861 = vpop.f32.mrb[0].mxu0
      %v1862 = vadd.f32 0.0, %v1861
      %v1863 = vpop.f32.mrb[0].mxu0
      %v1864 = vpop.f32.mrb[0].mxu0
      %v1865 = vadd.f32 0.0, %v1864
      %v1866 = vpop.f32.mrb[0].mxu0
      %1867 = vdwg.mxu0
      %1868 = vmatprep.subr.bf16.mxu0 0
      %1869 = vmatpush1.bf16.msra.mxu0 %v1739
      %1870 = vmatprep.subr.bf16.mxu0 0
      %1871 = vmatpush1.bf16.msra.mxu0 %v1740
      %1872 = vmatprep.subr.bf16.mxu0 0
      %1873 = vmatpush1.bf16.msra.mxu0 %v1741
      %1874 = vmatprep.subr.bf16.mxu0 0
      %1875 = vmatpush1.bf16.msra.mxu0 %v1742
      %1876 = vmatprep.subr.bf16.mxu0 0
      %1877 = vmatpush1.bf16.msra.mxu0 %v1743
      %1878 = vmatprep.subr.bf16.mxu0 0
      %1879 = vmatpush1.bf16.msra.mxu0 %v1744
      %1880 = vmatprep.subr.bf16.mxu0 0
      %1881 = vmatpush1.bf16.msra.mxu0 %v1745
      %1882 = vmatprep.subr.bf16.mxu0 0
      %1883 = vmatpush1.bf16.msra.mxu0 %v1746
      %1884 = vmatprep.subr.bf16.mxu0 0
      %1885 = vmatpush1.bf16.msra.mxu0 0
      %1886 = vmatprep.subr.bf16.mxu0 0
      %1887 = vmatpush1.bf16.msra.mxu0 0
      %1888 = vmatprep.subr.bf16.mxu0 0
      %1889 = vmatpush1.bf16.msra.mxu0 0
      %1890 = vmatprep.subr.bf16.mxu0 0
      %1891 = vmatpush1.bf16.msra.mxu0 0
      %1892 = vmatprep.subr.bf16.mxu0 0
      %1893 = vmatpush1.bf16.msra.mxu0 0
      %1894 = vmatprep.subr.bf16.mxu0 0
      %1895 = vmatpush1.bf16.msra.mxu0 0
      %1896 = vmatprep.subr.bf16.mxu0 0
      %1897 = vmatpush1.bf16.msra.mxu0 0
      %1898 = vmatprep.subr.bf16.mxu0 0
      %1899 = vmatpush1.bf16.msra.mxu0 0
      %1900 = vmatprep.mubr.bf16.mxu0 0
      %1901 = vmatmul.mubr.bf16.gmra.mrb[0].mxu0 %v773
      %v1902 = vpop.f32.mrb[0].mxu0
      %v1903 = vadd.f32 %v1806, %v1902
      %v1904 = vpop.f32.mrb[0].mxu0
      %v1905 = vpop.f32.mrb[0].mxu0
      %v1906 = vadd.f32 %v1809, %v1905
      %v1907 = vpop.f32.mrb[0].mxu0
      %1908 = vmatprep.mubr.bf16.mxu0 0
      %1909 = vmatmul.mubr.bf16.gmra.mrb[0].mxu0 %v776
      %v1910 = vpop.f32.mrb[0].mxu0
      %v1911 = vadd.f32 %v1814, %v1910
      %v1912 = vpop.f32.mrb[0].mxu0
      %v1913 = vpop.f32.mrb[0].mxu0
      %v1914 = vadd.f32 %v1817, %v1913
      %v1915 = vpop.f32.mrb[0].mxu0
      %1916 = vmatprep.mubr.bf16.mxu0 0
      %1917 = vmatmul.mubr.bf16.gmra.mrb[0].mxu0 %v779
      %v1918 = vpop.f32.mrb[0].mxu0
      %v1919 = vadd.f32 %v1822, %v1918
      %v1920 = vpop.f32.mrb[0].mxu0
      %v1921 = vpop.f32.mrb[0].mxu0
      %v1922 = vadd.f32 %v1825, %v1921
      %v1923 = vpop.f32.mrb[0].mxu0
      %1924 = vmatprep.mubr.bf16.mxu0 0
      %1925 = vmatmul.mubr.bf16.gmra.mrb[0].mxu0 %v782
      %v1926 = vpop.f32.mrb[0].mxu0
      %v1927 = vadd.f32 %v1830, %v1926
      %v1928 = vpop.f32.mrb[0].mxu0
      %v1929 = vpop.f32.mrb[0].mxu0
      %v1930 = vadd.f32 %v1833, %v1929
      %v1931 = vpop.f32.mrb[0].mxu0
      %1932 = vmatprep.mubr.bf16.mxu0 0
      %1933 = vmatmul.mubr.bf16.gmra.mrb[0].mxu0 %v785
      %v1934 = vpop.f32.mrb[0].mxu0
      %v1935 = vadd.f32 %v1838, %v1934
      %v1936 = vpop.f32.mrb[0].mxu0
      %v1937 = vpop.f32.mrb[0].mxu0
      %v1938 = vadd.f32 %v1841, %v1937
      %v1939 = vpop.f32.mrb[0].mxu0
      %1940 = vmatprep.mubr.bf16.mxu0 0
      %1941 = vmatmul.mubr.bf16.gmra.mrb[0].mxu0 %v788
      %v1942 = vpop.f32.mrb[0].mxu0
      %v1943 = vadd.f32 %v1846, %v1942
      %v1944 = vpop.f32.mrb[0].mxu0
      %v1945 = vpop.f32.mrb[0].mxu0
      %v1946 = vadd.f32 %v1849, %v1945
      %v1947 = vpop.f32.mrb[0].mxu0
      %1948 = vmatprep.mubr.bf16.mxu0 0
      %1949 = vmatmul.mubr.bf16.gmra.mrb[0].mxu0 %v791
      %v1950 = vpop.f32.mrb[0].mxu0
      %v1951 = vadd.f32 %v1854, %v1950
      %v1952 = vpop.f32.mrb[0].mxu0
      %v1953 = vpop.f32.mrb[0].mxu0
      %v1954 = vadd.f32 %v1857, %v1953
      %v1955 = vpop.f32.mrb[0].mxu0
      %1956 = vmatprep.mubr.bf16.mxu0 0
      %1957 = vmatmul.mubr.bf16.gmra.mrb[0].mxu0 %v794
      %v1958 = vpop.f32.mrb[0].mxu0
      %v1959 = vadd.f32 %v1862, %v1958
      %v1960 = vpop.f32.mrb[0].mxu0
      %v1961 = vpop.f32.mrb[0].mxu0
      %v1962 = vadd.f32 %v1865, %v1961
      %v1963 = vpop.f32.mrb[0].mxu0
      %1964 = vdwg.mxu0
      %v1965 = vadd.f32 %v1516, %v1903
      %v1966 = vadd.f32 %v1519, %v1906
      %v1967 = vadd.f32 %v1524, %v1911
      %v1968 = vadd.f32 %v1527, %v1914
      %v1969 = vadd.f32 %v1532, %v1919
      %v1970 = vadd.f32 %v1535, %v1922
      %v1971 = vadd.f32 %v1540, %v1927
      %v1972 = vadd.f32 %v1543, %v1930
      %v1973 = vadd.f32 %v1548, %v1935
      %v1974 = vadd.f32 %v1551, %v1938
      %v1975 = vadd.f32 %v1556, %v1943
      %v1976 = vadd.f32 %v1559, %v1946
      %v1977 = vadd.f32 %v1564, %v1951
      %v1978 = vadd.f32 %v1567, %v1954
      %v1979 = vadd.f32 %v1572, %v1959
      %v1980 = vadd.f32 %v1575, %v1962
      %v1981 = vpack.c.bf16 %v1966, %v1965
      %v1982 = vpack.c.bf16 %v1968, %v1967
      %v1983 = vpack.c.bf16 %v1970, %v1969
      %v1984 = vpack.c.bf16 %v1972, %v1971
      %v1985 = vpack.c.bf16 %v1974, %v1973
      %v1986 = vpack.c.bf16 %v1976, %v1975
      %v1987 = vpack.c.bf16 %v1978, %v1977
      %v1988 = vpack.c.bf16 %v1980, %v1979
      %v1997 = vunpack.c.l.b16 %v1981
      %v1998 = vunpack.c.h.b16 %v1981
      %v1999 = vunpack.c.l.b16 %v1982
      %v2000 = vunpack.c.h.b16 %v1982
      %v2001 = vunpack.c.l.b16 %v1983
      %v2002 = vunpack.c.h.b16 %v1983
      %v2003 = vunpack.c.l.b16 %v1984
      %v2004 = vunpack.c.h.b16 %v1984
      %v2005 = vunpack.c.l.b16 %v1985
      %v2006 = vunpack.c.h.b16 %v1985
      %v2007 = vunpack.c.l.b16 %v1986
      %v2008 = vunpack.c.h.b16 %v1986
      %v2009 = vunpack.c.l.b16 %v1987
      %v2010 = vunpack.c.h.b16 %v1987
      %v2011 = vunpack.c.l.b16 %v1988
      %v2012 = vunpack.c.h.b16 %v1988
      %v2013 = vpack.c.b16 %v1997, %v1997
      %v2014 = vpack.c.b16 %v1998, %v1998
      %v2015 = vpack.c.b16 %v1999, %v1999
      %v2016 = vpack.c.b16 %v2000, %v2000
      %v2017 = vpack.c.b16 %v2001, %v2001
      %v2018 = vpack.c.b16 %v2002, %v2002
      %v2019 = vpack.c.b16 %v2003, %v2003
      %v2020 = vpack.c.b16 %v2004, %v2004
      %v2021 = vpack.c.b16 %v2005, %v2005
      %v2022 = vpack.c.b16 %v2006, %v2006
      %v2023 = vpack.c.b16 %v2007, %v2007
      %v2024 = vpack.c.b16 %v2008, %v2008
      %v2025 = vpack.c.b16 %v2009, %v2009
      %v2026 = vpack.c.b16 %v2010, %v2010
      %v2027 = vpack.c.b16 %v2011, %v2011
      %v2028 = vpack.c.b16 %v2012, %v2012
      %2045 = vst [vmem:[%s231] sm:$0xf] %v2013
      %2046 = vst [vmem:[%s231 + $0x4] sm:$0xf] %v2014
      %2047 = vst [vmem:[%s231 + $0x8] sm:$0xf] %v2015
      %2048 = vst [vmem:[%s231 + $0xc] sm:$0xf] %v2016
      %2049 = vst [vmem:[%s231 + $0x10] sm:$0xf] %v2017
      %2050 = vst [vmem:[%s231 + $0x14] sm:$0xf] %v2018
      %2051 = vst [vmem:[%s231 + $0x18] sm:$0xf] %v2019
      %2052 = vst [vmem:[%s231 + $0x1c] sm:$0xf] %v2020
      %2053 = vst [vmem:[%s231 + $0x20] sm:$0xf] %v2021
      %2054 = vst [vmem:[%s231 + $0x24] sm:$0xf] %v2022
      %2055 = vst [vmem:[%s231 + $0x28] sm:$0xf] %v2023
      %2056 = vst [vmem:[%s231 + $0x2c] sm:$0xf] %v2024
      %2057 = vst [vmem:[%s231 + $0x30] sm:$0xf] %v2025
      %2058 = vst [vmem:[%s231 + $0x34] sm:$0xf] %v2026
      %2059 = vst [vmem:[%s231 + $0x38] sm:$0xf] %v2027
      %2060 = vst [vmem:[%s231 + $0x3c] sm:$0xf] %v2028
      %vm2061 = vmand 1, %vm336
      %vm2062 = vmand 1, %vm337
      %v2063 = vsel %vm2061, 1, 0
      %v2064 = vsel %vm2062, 1, 0
      %v2065 = vcvt.s32.f32 %v2063
      %v2066 = vcvt.s32.f32 %v2064
      %v2067 = vmul.f32 %v1965, %v2065
      %v2068 = vmul.f32 %v1966, %v2066
      %v2069 = vmul.f32 %v1967, %v2065
      %v2070 = vmul.f32 %v1968, %v2066
      %v2071 = vmul.f32 %v1969, %v2065
      %v2072 = vmul.f32 %v1970, %v2066
      %v2073 = vmul.f32 %v1971, %v2065
      %v2074 = vmul.f32 %v1972, %v2066
      %v2075 = vmul.f32 %v1973, %v2065
      %v2076 = vmul.f32 %v1974, %v2066
      %v2077 = vmul.f32 %v1975, %v2065
      %v2078 = vmul.f32 %v1976, %v2066
      %v2079 = vmul.f32 %v1977, %v2065
      %v2080 = vmul.f32 %v1978, %v2066
      %v2081 = vmul.f32 %v1979, %v2065
      %v2082 = vmul.f32 %v1980, %v2066
      %v2083 = vadd.f32 %v2067, %v2069
      %v2084 = vadd.f32 %v2083, %v2071
      %v2085 = vadd.f32 %v2084, %v2073
      %v2086 = vadd.f32 %v2085, %v2075
      %v2087 = vadd.f32 %v2086, %v2077
      %v2088 = vadd.f32 %v2087, %v2079
      %v2089 = vadd.f32 %v2088, %v2081
      %v2090 = vadd.f32 %v2068, %v2070
      %v2091 = vadd.f32 %v2090, %v2072
      %v2092 = vadd.f32 %v2091, %v2074
      %v2093 = vadd.f32 %v2092, %v2076
      %v2094 = vadd.f32 %v2093, %v2078
      %v2095 = vadd.f32 %v2094, %v2080
      %v2096 = vadd.f32 %v2095, %v2082
      %v2097 = vadd.f32 %v2089, %v2096
      %v2098 = vrot.slane %v2097, 4
      %v2099 = vadd.f32 %v2097, %v2098
      %v2100 = vrot.slane %v2099, 2
      %v2101 = vadd.f32 %v2099, %v2100
      %v2102 = vrot.slane %v2101, 1
      %v2103 = vadd.f32 %v2101, %v2102
      %v2104 = vmul.f32 %v2103, 0.0078125
      %v2105 = vsub.f32 %v1965, %v2104
      %v2106 = vsub.f32 %v1966, %v2104
      %v2107 = vsub.f32 %v1967, %v2104
      %v2108 = vsub.f32 %v1968, %v2104
      %v2109 = vsub.f32 %v1969, %v2104
      %v2110 = vsub.f32 %v1970, %v2104
      %v2111 = vsub.f32 %v1971, %v2104
      %v2112 = vsub.f32 %v1972, %v2104
      %v2113 = vsub.f32 %v1973, %v2104
      %v2114 = vsub.f32 %v1974, %v2104
      %v2115 = vsub.f32 %v1975, %v2104
      %v2116 = vsub.f32 %v1976, %v2104
      %v2117 = vsub.f32 %v1977, %v2104
      %v2118 = vsub.f32 %v1978, %v2104
      %v2119 = vsub.f32 %v1979, %v2104
      %v2120 = vsub.f32 %v1980, %v2104
      %v2121 = vmul.f32 %v2105, %v2065
      %v2122 = vmul.f32 %v2106, %v2066
      %v2123 = vmul.f32 %v2107, %v2065
      %v2124 = vmul.f32 %v2108, %v2066
      %v2125 = vmul.f32 %v2109, %v2065
      %v2126 = vmul.f32 %v2110, %v2066
      %v2127 = vmul.f32 %v2111, %v2065
      %v2128 = vmul.f32 %v2112, %v2066
      %v2129 = vmul.f32 %v2113, %v2065
      %v2130 = vmul.f32 %v2114, %v2066
      %v2131 = vmul.f32 %v2115, %v2065
      %v2132 = vmul.f32 %v2116, %v2066
      %v2133 = vmul.f32 %v2117, %v2065
      %v2134 = vmul.f32 %v2118, %v2066
      %v2135 = vmul.f32 %v2119, %v2065
      %v2136 = vmul.f32 %v2120, %v2066
      %v2137 = vmul.f32 %v2121, %v2121
      %v2138 = vmul.f32 %v2122, %v2122
      %v2139 = vmul.f32 %v2123, %v2123
      %v2140 = vmul.f32 %v2124, %v2124
      %v2141 = vmul.f32 %v2125, %v2125
      %v2142 = vmul.f32 %v2126, %v2126
      %v2143 = vmul.f32 %v2127, %v2127
      %v2144 = vmul.f32 %v2128, %v2128
      %v2145 = vmul.f32 %v2129, %v2129
      %v2146 = vmul.f32 %v2130, %v2130
      %v2147 = vmul.f32 %v2131, %v2131
      %v2148 = vmul.f32 %v2132, %v2132
      %v2149 = vmul.f32 %v2133, %v2133
      %v2150 = vmul.f32 %v2134, %v2134
      %v2151 = vmul.f32 %v2135, %v2135
      %v2152 = vmul.f32 %v2136, %v2136
      %v2153 = vadd.f32 %v2137, %v2139
      %v2154 = vadd.f32 %v2153, %v2141
      %v2155 = vadd.f32 %v2154, %v2143
      %v2156 = vadd.f32 %v2155, %v2145
      %v2157 = vadd.f32 %v2156, %v2147
      %v2158 = vadd.f32 %v2157, %v2149
      %v2159 = vadd.f32 %v2158, %v2151
      %v2160 = vadd.f32 %v2138, %v2140
      %v2161 = vadd.f32 %v2160, %v2142
      %v2162 = vadd.f32 %v2161, %v2144
      %v2163 = vadd.f32 %v2162, %v2146
      %v2164 = vadd.f32 %v2163, %v2148
      %v2165 = vadd.f32 %v2164, %v2150
      %v2166 = vadd.f32 %v2165, %v2152
      %v2167 = vadd.f32 %v2159, %v2166
      %v2168 = vrot.slane %v2167, 4
      %v2169 = vadd.f32 %v2167, %v2168
      %v2170 = vrot.slane %v2169, 2
      %v2171 = vadd.f32 %v2169, %v2170
      %v2172 = vrot.slane %v2171, 1
      %v2173 = vadd.f32 %v2171, %v2172
      %2174 = vst [vmem:[%s235] sm:$0x1] %v2104
      %2175 = vst [vmem:[%s235 + $0x1] sm:$0x1] %v2173
      %p2176 = scmp.lt.s32.totalorder %s17, 3
      %s2177 = scalar_select %p2176, %s17, 3
      %s2178 = smul.addr %s2177, 16
      %s2179 = smul.addr %s2178, 4
      %s2180 = scalar_lea.vmem %s4, %s2179
      %p2181 = scmp.lt.s32.totalorder %s17, 3
      %s2182 = scalar_select %p2181, %s17, 3
      %s2183 = smul.addr %s2182, 2
      %s2184 = scalar_lea.vmem %s5, %s2183
      // Predicated region
      $region37: #{double_conv_forward.4} parent=35 // pred_check
        %p2185 = pneg %p124
      $region38: #{double_conv_forward.4} parent=35 // pred_check_branch
        %2187 = sbr.rel (%p2185) target = $region40
      $region39: #{double_conv_forward.4} parent=35 // pred_region
        _
      $region40: #{double_conv_forward.4} parent=35 // pred_fallthru
        _
      // Predicated region
      $region41: #{double_conv_forward.4} parent=35 // pred_check
        %p2188 = pneg %p150
      $region42: #{double_conv_forward.4} parent=35 // pred_check_branch
        %2190 = sbr.rel (%p2188) target = $region44
      $region43: #{double_conv_forward.4} parent=35 // pred_region
        _
      $region44: #{double_conv_forward.4} parent=35 // pred_fallthru
        _
    $region36: #{double_conv_forward.4} parent=5 // pred_fallthru
      _
    %p2191 = scmp.le.s32.totalorder 2, %s12
    // Predicated region
    $region45: #{double_conv_forward.4} parent=5 // pred_check
      %p2192 = pneg %p2191
    $region46: #{double_conv_forward.4} parent=5 // pred_check_branch
      %2194 = sbr.rel (%p2192) target = $region48
    $region47: #{double_conv_forward.4} parent=5 // pred_region
      %s2195 = ssub.s32 %s12, 2
      // Predicated region
      $region49: #{double_conv_forward.4} parent=47 // pred_check
        %p2196 = pneg %p130
      $region50: #{double_conv_forward.4} parent=47 // pred_check_branch
        %2198 = sbr.rel (%p2196) target = $region52
      $region51: #{double_conv_forward.4} parent=47 // pred_region
        %p2199 = scmp.lt.s32.totalorder %s18, 3
        %s2200 = scalar_select %p2199, %s18, 3
        %s2201 = smul.addr %s2200, 16
        %s2202 = smul.addr %s2201, 4
        %s2203 = scalar_lea.vmem %s4, %s2202
      $region52: #{double_conv_forward.4} parent=47 // pred_fallthru
        _
      // Predicated region
      $region53: #{double_conv_forward.4} parent=47 // pred_check
        %p2204 = pneg %p156
      $region54: #{double_conv_forward.4} parent=47 // pred_check_branch
        %2206 = sbr.rel (%p2204) target = $region56
      $region55: #{double_conv_forward.4} parent=47 // pred_region
        %p2207 = scmp.lt.s32.totalorder %s18, 3
        %s2208 = scalar_select %p2207, %s18, 3
        %s2209 = smul.addr %s2208, 2
        %s2210 = scalar_lea.vmem %s5, %s2209
      $region56: #{double_conv_forward.4} parent=47 // pred_fallthru
        _
    $region48: #{double_conv_forward.4} parent=5 // pred_fallthru
      _
  $region6: #{double_conv_forward.4} parent=0 // loop_footer
    %s16 = sadd.s32 1, %s12
  $region7: #{double_conv_forward.4} parent=0 // loop_footer_branch
    %11 = sbr.rel target = $region3
  $region8: #{double_conv_forward.4} parent=0 // loop_exit
    _

</llo_original>
